<compile_context>
chip_gen: v7x
topology: tpu7x:2x2x1
jax: 0.10.0
libtpu: 0.0.40
codegen_flags: <defaults>
</compile_context>

<pallas_src>
import jax
import jax.numpy as jnp
from jax.experimental import pallas as pl
from jax.experimental.pallas import tpu as pltpu

IN_FEATURES = 320
HIDDEN = 1280
OUT_FEATURES = 1280

TN = 640  # output-column tile (lane-dense, large contiguous DMA rows)


def _num_tensorcores() -> int:
    """Best-effort TensorCores-per-chip (2 on v7x, 1 on v5e/v6e). Never raises."""
    try:
        info = pltpu.get_tpu_info()
        for attr in ("num_cores", "core_count", "tensorcore_count", "num_tensorcores"):
            v = getattr(info, attr, None)
            if isinstance(v, int) and v > 0:
                return v
    except Exception:
        pass
    try:
        d = jax.devices()[0]
        for attr in ("num_cores", "core_count"):
            v = getattr(d, attr, None)
            if isinstance(v, int) and v > 0:
                return v
    except Exception:
        pass
    return 1


# Outer "parallel" axis: 2 on dual-TC chips (v7x), 1 on single-TC chips (v5e/v6e).
N_SPLIT = 2 if _num_tensorcores() >= 2 else 1
INNER = OUT_FEATURES // (TN * N_SPLIT)  # inner column tiles per outer index


def time_embedding_kernel(x_ref, w1_ref, b1_ref, w2_ref, b2_ref, o_ref, h_ref):
    # x_ref : (Bp, 320)    f32   resident
    # w1_ref: (320, 1280)  bf16  resident
    # b1_ref: (1, 1280)    f32   resident
    # w2_ref: (1280, TN)   bf16  streamed per grid step
    # b2_ref: (1, TN)      f32   streamed per grid step
    # o_ref : (Bp, TN)     f32   streamed out
    # h_ref : (Bp, 1280)   bf16  VMEM scratch (persists across grid steps)

    # Compute h = SiLU(x @ W1 + b1) once per core (first inner step of each
    # outer index).  Gating on the *inner* id keeps this correct when the outer
    # axis is partitioned across TensorCores.
    @pl.when(pl.program_id(1) == 0)
    def _():
        h = jnp.dot(x_ref[...].astype(jnp.bfloat16), w1_ref[...],
                    preferred_element_type=jnp.float32)
        h = h + b1_ref[...]                                 # bias add in f32
        h_ref[...] = (h * jax.nn.sigmoid(h)).astype(jnp.bfloat16)  # SiLU, store bf16

    # Stream one column tile of the second linear (h already bf16).
    out = jnp.dot(h_ref[...], w2_ref[...], preferred_element_type=jnp.float32)
    o_ref[...] = (out + b2_ref[...]).astype(o_ref.dtype)


def prepare_time_embedding_params(w1, b1, w2, b2):
    """One-time parameter prep: bf16 weight casts hoisted OUT of the hot path."""
    return (
        w1.astype(jnp.bfloat16),
        b1.reshape(1, HIDDEN).astype(jnp.float32),
        w2.astype(jnp.bfloat16),
        b2.reshape(1, OUT_FEATURES).astype(jnp.float32),
    )


@jax.jit
def time_embedding(x, w1_bf, b1_2d, w2_bf, b2_2d):
    """x: (B, 320) f32; params already prepared (bf16 weights, 2-D f32 biases)."""
    B = x.shape[0]
    Bp = max(8, ((B + 7) // 8) * 8)          # pad batch to a sublane multiple
    x_p = x if Bp == B else jnp.pad(x, ((0, Bp - B), (0, 0)))

    flops = 2 * Bp * (IN_FEATURES * HIDDEN + HIDDEN * OUT_FEATURES)
    bytes_accessed = (
        (IN_FEATURES * HIDDEN + HIDDEN * OUT_FEATURES) * 2   # bf16 weights
        + (HIDDEN + OUT_FEATURES) * 4                        # f32 biases
        + Bp * IN_FEATURES * 4 + Bp * OUT_FEATURES * 4       # x in, out
    )

    out = pl.pallas_call(
        time_embedding_kernel,
        out_shape=jax.ShapeDtypeStruct((Bp, OUT_FEATURES), jnp.float32),
        grid_spec=pltpu.PrefetchScalarGridSpec(
            num_scalar_prefetch=0,
            grid=(N_SPLIT, INNER),
            in_specs=[
                pl.BlockSpec((Bp, IN_FEATURES), lambda i, j: (0, 0)),
                pl.BlockSpec((IN_FEATURES, HIDDEN), lambda i, j: (0, 0)),
                pl.BlockSpec((1, HIDDEN), lambda i, j: (0, 0)),
                pl.BlockSpec((HIDDEN, TN), lambda i, j: (0, i * INNER + j)),
                pl.BlockSpec((1, TN), lambda i, j: (0, i * INNER + j)),
            ],
            out_specs=pl.BlockSpec((Bp, TN), lambda i, j: (0, i * INNER + j)),
            scratch_shapes=[pltpu.VMEM((Bp, HIDDEN), jnp.bfloat16)],
        ),
        compiler_params=pltpu.CompilerParams(
            dimension_semantics=("parallel", "arbitrary"),
            vmem_limit_bytes=32 << 20,
        ),
        cost_estimate=pl.CostEstimate(
            flops=flops,
            transcendentals=Bp * HIDDEN,
            bytes_accessed=bytes_accessed,
        ),
    )(x_p, w1_bf, b1_2d, w2_bf, b2_2d)
    return out[:B]


def reference_bf16(x, w1, b1, w2, b2):
    """Mirrors the kernel's bf16-weight / f32-accumulate arithmetic."""
    h = jnp.dot(x.astype(jnp.bfloat16), w1.astype(jnp.bfloat16),
                preferred_element_type=jnp.float32) + b1
    h = h * jax.nn.sigmoid(h)
    return jnp.dot(h.astype(jnp.bfloat16), w2.astype(jnp.bfloat16),
                   preferred_element_type=jnp.float32) + b2


def reference_f32(x, w1, b1, w2, b2):
    h = x @ w1 + b1
    h = h * jax.nn.sigmoid(h)
    return h @ w2 + b2


if __name__ == "__main__":
    key = jax.random.PRNGKey(0)
    k_x, k_w1, k_b1, k_w2, k_b2 = jax.random.split(key, 5)

    B = 2  # batch of time embeddings
    x = jax.random.normal(k_x, (B, IN_FEATURES), dtype=jnp.float32)

    # Deterministic parameter init (mimics PyTorch Linear's uniform(+-1/sqrt(fan_in))).
    lim1 = 1.0 / (IN_FEATURES ** 0.5)
    lim2 = 1.0 / (HIDDEN ** 0.5)
    w1 = jax.random.uniform(k_w1, (IN_FEATURES, HIDDEN), jnp.float32, -lim1, lim1)
    b1 = jax.random.uniform(k_b1, (HIDDEN,), jnp.float32, -lim1, lim1)
    w2 = jax.random.uniform(k_w2, (HIDDEN, OUT_FEATURES), jnp.float32, -lim2, lim2)
    b2 = jax.random.uniform(k_b2, (OUT_FEATURES,), jnp.float32, -lim2, lim2)

    # One-time prep (weight casts out of the hot path).
    params = jax.tree.map(jax.block_until_ready,
                          prepare_time_embedding_params(w1, b1, w2, b2))

    out = jax.block_until_ready(time_embedding(x, *params))
    assert out.shape == (B, OUT_FEATURES)

    # Tight check vs a reference that uses the same bf16 weight/activation casts.
    ref_bf = reference_bf16(x, w1, b1, w2, b2)
    assert jnp.allclose(out, ref_bf, atol=2e-3, rtol=2e-3), "mismatch vs bf16 reference"

    # Loose semantic check vs the pure-f32 reference (bf16 weight rounding noise).
    ref_f32 = reference_f32(x, w1, b1, w2, b2)
    assert jnp.allclose(out, ref_f32, atol=3e-2, rtol=3e-2), "mismatch vs f32 reference"

    print("KERNEL_OK")
</pallas_src>

<mosaic_0001>
module attributes {stable_mosaic.version = 11 : i64} {
  func.func @time_embedding_kernel(%arg0: i32, %arg1: i32, %arg2: memref<8x320xf32, #tpu.memory_space<vmem>>, %arg3: memref<320x1280xbf16, #tpu.memory_space<vmem>>, %arg4: memref<1x1280xf32, #tpu.memory_space<vmem>>, %arg5: memref<1280x640xbf16, #tpu.memory_space<vmem>>, %arg6: memref<1x640xf32, #tpu.memory_space<vmem>>, %arg7: memref<8x640xf32, #tpu.memory_space<vmem>>, %arg8: memref<8x1280xbf16, #tpu.memory_space<vmem>>) attributes {dimension_semantics = [#tpu.dimension_semantics<parallel>, #tpu.dimension_semantics<arbitrary>], iteration_bounds = array<i64: 1, 2>, scalar_prefetch = 0 : i64, scratch_operands = 1 : i64, tpu.core_type = #tpu.core_type<tc>, window_params = [{pipeline_mode = #tpu.pipeline_mode<synchronous>, transform_indices = @transform_0, window_bounds = array<i64: 8, 320>}, {pipeline_mode = #tpu.pipeline_mode<synchronous>, transform_indices = @transform_1, window_bounds = array<i64: 320, 1280>}, {pipeline_mode = #tpu.pipeline_mode<synchronous>, transform_indices = @transform_2, window_bounds = array<i64: 1, 1280>}, {transform_indices = @transform_3, window_bounds = array<i64: 1280, 640>}, {transform_indices = @transform_4, window_bounds = array<i64: 1, 640>}, {transform_indices = @transform_5, window_bounds = array<i64: 8, 640>}]} {
    %c0_i32 = arith.constant 0 : i32
    %0 = arith.cmpi eq, %arg1, %c0_i32 : i32
    %1 = arith.extui %0 : i1 to i32
    %c0_i32_0 = arith.constant 0 : i32
    %2 = arith.cmpi ne, %1, %c0_i32_0 : i32
    scf.if %2 {
      %c0_8 = arith.constant 0 : index
      %c0_9 = arith.constant 0 : index
      %10 = vector.load %arg2[%c0_8, %c0_9] : memref<8x320xf32, #tpu.memory_space<vmem>>, vector<8x320xf32>
      %11 = arith.truncf %10 : vector<8x320xf32> to vector<8x320xbf16>
      %c0_10 = arith.constant 0 : index
      %c0_11 = arith.constant 0 : index
      %12 = vector.load %arg3[%c0_10, %c0_11] : memref<320x1280xbf16, #tpu.memory_space<vmem>>, vector<320x1280xbf16>
      %cst_12 = arith.constant dense<0.000000e+00> : vector<8x1280xf32>
      %13 = tpu.matmul %11, %12, %cst_12 {dimension_numbers = #tpu.dot_dimension_numbers<[1], [0], [0], [1], [0, 0, 1, 1], [], []>} : vector<8x320xbf16>, vector<320x1280xbf16>, vector<8x1280xf32> -> vector<8x1280xf32>
      %c0_13 = arith.constant 0 : index
      %c0_14 = arith.constant 0 : index
      %14 = vector.load %arg4[%c0_13, %c0_14] : memref<1x1280xf32, #tpu.memory_space<vmem>>, vector<1x1280xf32>
      %15 = vector.broadcast %14 : vector<1x1280xf32> to vector<8x1280xf32>
      %16 = arith.addf %13, %15 : vector<8x1280xf32>
      %17 = arith.negf %16 : vector<8x1280xf32>
      %18 = math.exp %17 : vector<8x1280xf32>
      %cst_15 = arith.constant 1.000000e+00 : f32
      %19 = vector.broadcast %cst_15 : f32 to vector<8x1280xf32>
      %20 = arith.addf %19, %18 : vector<8x1280xf32>
      %21 = arith.divf %19, %20 : vector<8x1280xf32>
      %22 = arith.mulf %16, %21 : vector<8x1280xf32>
      %23 = arith.truncf %22 : vector<8x1280xf32> to vector<8x1280xbf16>
      %c0_16 = arith.constant 0 : index
      %c0_17 = arith.constant 0 : index
      %24 = vector.load %arg8[%c0_16, %c0_17] : memref<8x1280xbf16, #tpu.memory_space<vmem>>, vector<8x1280xbf16>
      tpu.vector_store %arg8[%c0_16, %c0_17], %23 {strides = array<i32>} : memref<8x1280xbf16, #tpu.memory_space<vmem>>, vector<8x1280xbf16>,
    } else {
    }
    %c0 = arith.constant 0 : index
    %c0_1 = arith.constant 0 : index
    %3 = vector.load %arg8[%c0, %c0_1] : memref<8x1280xbf16, #tpu.memory_space<vmem>>, vector<8x1280xbf16>
    %c0_2 = arith.constant 0 : index
    %c0_3 = arith.constant 0 : index
    %4 = vector.load %arg5[%c0_2, %c0_3] : memref<1280x640xbf16, #tpu.memory_space<vmem>>, vector<1280x640xbf16>
    %cst = arith.constant dense<0.000000e+00> : vector<8x640xf32>
    %5 = tpu.matmul %3, %4, %cst {dimension_numbers = #tpu.dot_dimension_numbers<[1], [0], [0], [1], [0, 0, 1, 1], [], []>} : vector<8x1280xbf16>, vector<1280x640xbf16>, vector<8x640xf32> -> vector<8x640xf32>
    %c0_4 = arith.constant 0 : index
    %c0_5 = arith.constant 0 : index
    %6 = vector.load %arg6[%c0_4, %c0_5] : memref<1x640xf32, #tpu.memory_space<vmem>>, vector<1x640xf32>
    %7 = vector.broadcast %6 : vector<1x640xf32> to vector<8x640xf32>
    %8 = arith.addf %5, %7 : vector<8x640xf32>
    %c0_6 = arith.constant 0 : index
    %c0_7 = arith.constant 0 : index
    %9 = vector.load %arg7[%c0_6, %c0_7] : memref<8x640xf32, #tpu.memory_space<vmem>>, vector<8x640xf32>
    tpu.vector_store %arg7[%c0_6, %c0_7], %8 {strides = array<i32>} : memref<8x640xf32, #tpu.memory_space<vmem>>, vector<8x640xf32>,
    return
  }
  func.func @transform_0(%arg0: i32, %arg1: i32) -> (i32, i32) {
    %c0_i32 = arith.constant 0 : i32
    %c0_i32_0 = arith.constant 0 : i32
    %c0_i32_1 = arith.constant 0 : i32
    return %c0_i32, %c0_i32_0 : i32, i32
  }
  func.func @transform_1(%arg0: i32, %arg1: i32) -> (i32, i32) {
    %c0_i32 = arith.constant 0 : i32
    %c0_i32_0 = arith.constant 0 : i32
    %c0_i32_1 = arith.constant 0 : i32
    return %c0_i32, %c0_i32_0 : i32, i32
  }
  func.func @transform_2(%arg0: i32, %arg1: i32) -> (i32, i32) {
    %c0_i32 = arith.constant 0 : i32
    %c0_i32_0 = arith.constant 0 : i32
    %c0_i32_1 = arith.constant 0 : i32
    return %c0_i32, %c0_i32_0 : i32, i32
  }
  func.func @transform_3(%arg0: i32, %arg1: i32) -> (i32, i32) {
    %c2_i32 = arith.constant 2 : i32
    %0 = arith.muli %arg0, %c2_i32 : i32
    %1 = arith.addi %0, %arg1 : i32
    %c0_i32 = arith.constant 0 : i32
    %c0_i32_0 = arith.constant 0 : i32
    return %c0_i32, %1 : i32, i32
  }
  func.func @transform_4(%arg0: i32, %arg1: i32) -> (i32, i32) {
    %c2_i32 = arith.constant 2 : i32
    %0 = arith.muli %arg0, %c2_i32 : i32
    %1 = arith.addi %0, %arg1 : i32
    %c0_i32 = arith.constant 0 : i32
    %c0_i32_0 = arith.constant 0 : i32
    return %c0_i32, %1 : i32, i32
  }
  func.func @transform_5(%arg0: i32, %arg1: i32) -> (i32, i32) {
    %c2_i32 = arith.constant 2 : i32
    %0 = arith.muli %arg0, %c2_i32 : i32
    %1 = arith.addi %0, %arg1 : i32
    %c0_i32 = arith.constant 0 : i32
    %c0_i32_0 = arith.constant 0 : i32
    return %c0_i32, %1 : i32, i32
  }
}

</mosaic_0001>

<llo_original>
// kernel: time_embedding.1
$region0: #{time_embedding.1}
  #allocation0 [shape = 'u32[]', space=smem, size = 0x4, offset = 0x4, fixed_abs, tag = 'smem constant byte address 0x4 - core index']
  #allocation1 [shape = 'u32[144,128]{1,0:T(1,128)}', space=vmem, size = 0x12000, scoped, tag = 'internal scratch']
  #allocation2 [shape = 'bf16[8,1280]{1,0:T(8,128)(2,1)}', space=vmem, size = 0x5000, scoped, tag = 'scratch operand']
  %s0 = inlined_call_operand.vmem [shape: f32[8,320], index: 0, kind: input, shape index: {}]
  %s1 = inlined_call_operand.hbm [shape: bf16[320,1280], index: 1, kind: input, shape index: {}]
  %s2 = inlined_call_operand.hbm [shape: f32[1,1280], index: 2, kind: input, shape index: {}]
  %s3 = inlined_call_operand.hbm [shape: bf16[1280,1280], index: 3, kind: input, shape index: {}]
  %s4 = inlined_call_operand.hbm [shape: f32[1,1280], index: 4, kind: input, shape index: {}]
  %s5 = inlined_call_operand.vmem [shape: f32[8,1280], index: 5, kind: output, shape index: {}]
  %s6 = sld [smem:[#allocation0]]
  $region73: #{time_embedding.1} parent=0
    _
  %s8 = ssub.s32 1, %s6
  %s9 = scalar_select 0, %s8, %s6
  $region1: #{time_embedding.1} parent=0
    #allocation3 [shape = 'u8[819200]{0}', space=vmem, size = 0xc8000, scoped, tag = 'input window, operand 1, single buffered']
    #allocation4 [shape = 's32[2]{0}', space=sflag, size = 0x8, scoped, tag = 'scoped memory for time_embedding.1']
    #allocation5 [shape = 'u8[5120]{0}', space=vmem, size = 0x1400, scoped, tag = 'input window, operand 2, single buffered']
    #allocation6 [shape = 's32[1]{0}', space=sflag, size = 0x4, scoped, tag = 'scoped memory for time_embedding.1']
    #allocation7 [shape = 'u8[3276800]{0}', space=vmem, size = 0x320000, scoped, tag = 'input window, operand 3']
    #allocation8 [shape = 'u8[5120]{0}', space=vmem, size = 0x1400, scoped, tag = 'input window, operand 4']
    %10 = vsyncpa [#allocation4], 0
    %11 = vsyncpa [#allocation6], 0
    loop: start=0, step=1, limit=4
    $region2: #{time_embedding.1} parent=1 // loop_pre_header
      _
    $region3: #{time_embedding.1} parent=1 // loop_header
      %s13 = sphi 0, %s17
      %p14 = scmp.ge.s32.totalorder %s13, 4
      %s20 = sphi 0, %s32
      %s21 = sphi 0, %s28
      %s22 = sphi 0, %s20
      %s23 = sphi 0, %s21
      %s24 = sphi 0, %s22
      %s25 = sphi 0, %s23
      %s33 = sphi 0, %s33
      %s35 = sphi 0, %s33
      %s36 = sphi 0, %s35
      %s50 = sphi 0, %s36
      %s54 = sphi 0, %s54
      %s56 = sphi 0, %s54
      %s57 = sphi 0, %s56
      %s71 = sphi 0, %s57
      %s75 = sphi 0, %s75
      %s77 = sphi 0, %s75
      %s78 = sphi 0, %s77
      %s92 = sphi 0, %s78
      %s102 = sphi 0, %s104
      %s105 = sphi 0, %s102
      %s106 = sphi 0, %s105
      %s122 = sphi 0, %s106
      %s132 = sphi 0, %s134
      %s135 = sphi 0, %s132
      %s136 = sphi 0, %s135
      %s152 = sphi 0, %s136
      %s162 = sphi 0, %s164
      %s165 = sphi 0, %s162
      %s166 = sphi 0, %s165
      %s182 = sphi 0, %s166
    $region4: #{time_embedding.1} parent=1 // loop_header_branch
      %16 = sbr.rel (%p14) target = $region8
    $region5: #{time_embedding.1} parent=1 // loop_body
      %s18 = ssub.s32 %s13, 1
      %s19 = ssub.s32 %s13, 2
      %s26 = sadd.s32 1, %s21
      %p27 = scmp.ge.s32.totalorder %s26, 2
      %s28 = scalar_select %p27, 0, %s26
      %s29 = sadd.s32 1, %s20
      %s30 = scalar_select %p27, %s29, %s20
      %p31 = scmp.ge.s32.totalorder %s30, 1
      %s32 = scalar_select %p31, 0, %s30
      %s34 = sadd.s32 %s33, 1
      %p37 = scmp.eq.s32.totalorder %s13, 1
      %p38 = scmp.ne.s32.totalorder %s33, %s35
      %p39 = scmp.eq.s32.totalorder %s13, 0
      %p40 = por %p38, %p39
      %p41 = scmp.ne.s32.totalorder %s33, %s35
      %p42 = scmp.eq.s32.totalorder %s18, 1
      %p43 = por %p41, %p42
      %p44 = scmp.ne.s32.totalorder %s35, %s36
      %p45 = scmp.eq.s32.totalorder %s18, 0
      %p46 = por %p44, %p45
      %p47 = scmp.ne.s32.totalorder %s35, %s36
      %p48 = scmp.eq.s32.totalorder %s19, 1
      %p49 = por %p47, %p48
      %p51 = scmp.ne.s32.totalorder %s36, %s50
      %p52 = scmp.eq.s32.totalorder %s19, 0
      %p53 = por %p51, %p52
      %s55 = sadd.s32 %s54, 1
      %p58 = scmp.eq.s32.totalorder %s13, 1
      %p59 = scmp.ne.s32.totalorder %s54, %s56
      %p60 = scmp.eq.s32.totalorder %s13, 0
      %p61 = por %p59, %p60
      %p62 = scmp.ne.s32.totalorder %s54, %s56
      %p63 = scmp.eq.s32.totalorder %s18, 1
      %p64 = por %p62, %p63
      %p65 = scmp.ne.s32.totalorder %s56, %s57
      %p66 = scmp.eq.s32.totalorder %s18, 0
      %p67 = por %p65, %p66
      %p68 = scmp.ne.s32.totalorder %s56, %s57
      %p69 = scmp.eq.s32.totalorder %s19, 1
      %p70 = por %p68, %p69
      %p72 = scmp.ne.s32.totalorder %s57, %s71
      %p73 = scmp.eq.s32.totalorder %s19, 0
      %p74 = por %p72, %p73
      %s76 = sadd.s32 %s75, 1
      %p79 = scmp.eq.s32.totalorder %s13, 1
      %p80 = scmp.ne.s32.totalorder %s75, %s77
      %p81 = scmp.eq.s32.totalorder %s13, 0
      %p82 = por %p80, %p81
      %p83 = scmp.ne.s32.totalorder %s75, %s77
      %p84 = scmp.eq.s32.totalorder %s18, 1
      %p85 = por %p83, %p84
      %p86 = scmp.ne.s32.totalorder %s77, %s78
      %p87 = scmp.eq.s32.totalorder %s18, 0
      %p88 = por %p86, %p87
      %p89 = scmp.ne.s32.totalorder %s77, %s78
      %p90 = scmp.eq.s32.totalorder %s19, 1
      %p91 = por %p89, %p90
      %p93 = scmp.ne.s32.totalorder %s78, %s92
      %p94 = scmp.eq.s32.totalorder %s19, 0
      %p95 = por %p93, %p94
      %s96 = smul.u32 %s20, 2
      %s97 = sadd.s32 %s96, %s21
      %s98 = smul.u32 %s32, 2
      %s99 = sadd.s32 %s98, %s28
      %s100 = ssub.s32 %s97, %s99
      %p101 = scmp.eq.s32.totalorder %s100, 0
      %s103 = sadd.s32 %s102, 1
      %s104 = scalar_select %p101, %s102, %s103
      %p107 = pneg %p101
      %p108 = scmp.eq.s32.totalorder %s13, 1
      %p109 = por %p107, %p108
      %p110 = scmp.ne.s32.totalorder %s102, %s105
      %p111 = scmp.eq.s32.totalorder %s13, 0
      %p112 = por %p110, %p111
      %p113 = scmp.ne.s32.totalorder %s102, %s105
      %p114 = scmp.eq.s32.totalorder %s18, 1
      %p115 = por %p113, %p114
      %p116 = scmp.ne.s32.totalorder %s105, %s106
      %p117 = scmp.eq.s32.totalorder %s18, 0
      %p118 = por %p116, %p117
      %p119 = scmp.ne.s32.totalorder %s105, %s106
      %p120 = scmp.eq.s32.totalorder %s19, 1
      %p121 = por %p119, %p120
      %p123 = scmp.ne.s32.totalorder %s106, %s122
      %p124 = scmp.eq.s32.totalorder %s19, 0
      %p125 = por %p123, %p124
      %s126 = smul.u32 %s20, 2
      %s127 = sadd.s32 %s126, %s21
      %s128 = smul.u32 %s32, 2
      %s129 = sadd.s32 %s128, %s28
      %s130 = ssub.s32 %s127, %s129
      %p131 = scmp.eq.s32.totalorder %s130, 0
      %s133 = sadd.s32 %s132, 1
      %s134 = scalar_select %p131, %s132, %s133
      %p137 = pneg %p131
      %p138 = scmp.eq.s32.totalorder %s13, 1
      %p139 = por %p137, %p138
      %p140 = scmp.ne.s32.totalorder %s132, %s135
      %p141 = scmp.eq.s32.totalorder %s13, 0
      %p142 = por %p140, %p141
      %p143 = scmp.ne.s32.totalorder %s132, %s135
      %p144 = scmp.eq.s32.totalorder %s18, 1
      %p145 = por %p143, %p144
      %p146 = scmp.ne.s32.totalorder %s135, %s136
      %p147 = scmp.eq.s32.totalorder %s18, 0
      %p148 = por %p146, %p147
      %p149 = scmp.ne.s32.totalorder %s135, %s136
      %p150 = scmp.eq.s32.totalorder %s19, 1
      %p151 = por %p149, %p150
      %p153 = scmp.ne.s32.totalorder %s136, %s152
      %p154 = scmp.eq.s32.totalorder %s19, 0
      %p155 = por %p153, %p154
      %s156 = smul.u32 %s20, 2
      %s157 = sadd.s32 %s156, %s21
      %s158 = smul.u32 %s32, 2
      %s159 = sadd.s32 %s158, %s28
      %s160 = ssub.s32 %s157, %s159
      %p161 = scmp.eq.s32.totalorder %s160, 0
      %s163 = sadd.s32 %s162, 1
      %s164 = scalar_select %p161, %s162, %s163
      %p167 = pneg %p161
      %p168 = scmp.eq.s32.totalorder %s13, 1
      %p169 = por %p167, %p168
      %p170 = scmp.ne.s32.totalorder %s162, %s165
      %p171 = scmp.eq.s32.totalorder %s13, 0
      %p172 = por %p170, %p171
      %p173 = scmp.ne.s32.totalorder %s162, %s165
      %p174 = scmp.eq.s32.totalorder %s18, 1
      %p175 = por %p173, %p174
      %p176 = scmp.ne.s32.totalorder %s165, %s166
      %p177 = scmp.eq.s32.totalorder %s18, 0
      %p178 = por %p176, %p177
      %p179 = scmp.ne.s32.totalorder %s165, %s166
      %p180 = scmp.eq.s32.totalorder %s19, 1
      %p181 = por %p179, %p180
      %p183 = scmp.ne.s32.totalorder %s166, %s182
      %p184 = scmp.eq.s32.totalorder %s19, 0
      %p185 = por %p183, %p184
      %p186 = scmp.le.s32.totalorder 1, %s13
      %p187 = scmp.lt.s32.totalorder %s13, 3
      %p188 = pnand %p186, %p187
      %p189 = pneg %p188
      // Predicated region
      $region9: #{time_embedding.1} parent=5 // pred_check
        _
      $region10: #{time_embedding.1} parent=5 // pred_check_branch
        %191 = sbr.rel (%p188) target = $region12
      $region11: #{time_embedding.1} parent=5 // pred_region
        %s192 = ssub.s32 %s13, 1
        // Predicated region
        $region13: #{time_embedding.1} parent=11 // pred_check
          %p193 = pneg %p46
        $region14: #{time_embedding.1} parent=11 // pred_check_branch
          %195 = sbr.rel (%p193) target = $region16
        $region15: #{time_embedding.1} parent=11 // pred_region
          _
        $region16: #{time_embedding.1} parent=11 // pred_fallthru
          _
        // Predicated region
        $region17: #{time_embedding.1} parent=11 // pred_check
          %p196 = pneg %p67
        $region18: #{time_embedding.1} parent=11 // pred_check_branch
          %198 = sbr.rel (%p196) target = $region20
        $region19: #{time_embedding.1} parent=11 // pred_region
          %s200 = ssub.s32 25600, 25600
          %201 = vsyncadd [#allocation4], %s200
          %s202 = sshll.u32 [#allocation3], 4
          %s203 = int_to_ptr.vmem [resolvable:$true] %s202
          %208 = dma.hbm_to_vmem [thread:$0]  %s1, 25600, %s203, [#allocation4], 640, 640, 40
        $region20: #{time_embedding.1} parent=11 // pred_fallthru
          _
        // Predicated region
        $region21: #{time_embedding.1} parent=11 // pred_check
          %p209 = pneg %p88
        $region22: #{time_embedding.1} parent=11 // pred_check_branch
          %211 = sbr.rel (%p209) target = $region24
        $region23: #{time_embedding.1} parent=11 // pred_region
          %s213 = ssub.s32 160, 160
          %214 = vsyncadd [#allocation6], %s213
          %s216 = sshll.u32 [#allocation5], 4
          %s217 = int_to_ptr.vmem [resolvable:$true] %s216
          %219 = dma.hbm_to_vmem [thread:$0]  %s2, 160, %s217, [#allocation6]
        $region24: #{time_embedding.1} parent=11 // pred_fallthru
          _
      $region12: #{time_embedding.1} parent=5 // pred_fallthru
        _
      %p220 = scmp.lt.s32.totalorder %s13, 2
      // Predicated region
      $region25: #{time_embedding.1} parent=5 // pred_check
        %p221 = pneg %p220
      $region26: #{time_embedding.1} parent=5 // pred_check_branch
        %223 = sbr.rel (%p221) target = $region28
      $region27: #{time_embedding.1} parent=5 // pred_region
        // Predicated region
        $region29: #{time_embedding.1} parent=27 // pred_check
          %p224 = pneg %p112
        $region30: #{time_embedding.1} parent=27 // pred_check_branch
          %226 = sbr.rel (%p224) target = $region32
        $region31: #{time_embedding.1} parent=27 // pred_region
          %s227 = sand.u32 %s13, 1
          %s228 = scalar_lea.sflag [#allocation4], %s227
          %s229 = sand.u32 %s102, 1
          %s230 = smul.addr %s229, 3200
          %s231 = scalar_lea.vmem [#allocation7], %s230
          %s232 = smul.u32 %s20, 2
          %s233 = sadd.s32 %s232, %s21
          %s234 = smul.u32 5, %s233
          %s236 = ssub.s32 51200, 51200
          %237 = vsyncadd %s228, %s236
          %s238 = smul.addr %s234, 64
          %s239 = scalar_lea.hbm %s3, %s238
          %s240 = sshll.u32 %s231, 4
          %s241 = int_to_ptr.vmem [resolvable:$true] %s240
          %246 = dma.hbm_to_vmem [thread:$0]  %s239, 51200, %s241, %s228, 640, 320, 20
        $region32: #{time_embedding.1} parent=27 // pred_fallthru
          _
        // Predicated region
        $region33: #{time_embedding.1} parent=27 // pred_check
          %p247 = pneg %p142
        $region34: #{time_embedding.1} parent=27 // pred_check_branch
          %249 = sbr.rel (%p247) target = $region36
        $region35: #{time_embedding.1} parent=27 // pred_region
          %s250 = sand.u32 %s13, 1
          %s251 = scalar_lea.sflag [#allocation4], %s250
          %s252 = sand.u32 %s132, 1
          %s253 = smul.addr %s252, 5
          %s254 = scalar_lea.vmem [#allocation8], %s253
          %s255 = smul.u32 %s20, 2
          %s256 = sadd.s32 %s255, %s21
          %s257 = smul.u32 5, %s256
          %s259 = ssub.s32 80, 80
          %260 = vsyncadd %s251, %s259
          %s261 = smul.addr %s257, 16
          %s262 = scalar_lea.hbm %s4, %s261
          %s264 = sshll.u32 %s254, 4
          %s265 = int_to_ptr.vmem [resolvable:$true] %s264
          %267 = dma.hbm_to_vmem [thread:$0]  %s262, 80, %s265, %s251
        $region36: #{time_embedding.1} parent=27 // pred_fallthru
          _
      $region28: #{time_embedding.1} parent=5 // pred_fallthru
        _
      %p268 = scmp.le.s32.totalorder 1, %s13
      %p269 = scmp.lt.s32.totalorder %s13, 3
      %p270 = pnand %p268, %p269
      %p271 = pneg %p270
      // Predicated region
      $region37: #{time_embedding.1} parent=5 // pred_check
        _
      $region38: #{time_embedding.1} parent=5 // pred_check_branch
        %273 = sbr.rel (%p270) target = $region40
      $region39: #{time_embedding.1} parent=5 // pred_region
        %s274 = ssub.s32 %s13, 1
        // Predicated region
        $region41: #{time_embedding.1} parent=39 // pred_check
          %p275 = pneg %p67
        $region42: #{time_embedding.1} parent=39 // pred_check_branch
          %277 = sbr.rel (%p275) target = $region44
        $region43: #{time_embedding.1} parent=39 // pred_region
          %278 = dma.done [#allocation4], 25600
        $region44: #{time_embedding.1} parent=39 // pred_fallthru
          _
        // Predicated region
        $region45: #{time_embedding.1} parent=39 // pred_check
          %p279 = pneg %p88
        $region46: #{time_embedding.1} parent=39 // pred_check_branch
          %281 = sbr.rel (%p279) target = $region48
        $region47: #{time_embedding.1} parent=39 // pred_region
          %282 = dma.done [#allocation6], 160
        $region48: #{time_embedding.1} parent=39 // pred_fallthru
          _
        %s283 = sand.u32 %s18, 1
        %s284 = scalar_lea.sflag [#allocation4], %s283
        %s285 = sand.u32 %s105, 1
        %s286 = smul.addr %s285, 3200
        %s287 = scalar_lea.vmem [#allocation7], %s286
        // Predicated region
        $region49: #{time_embedding.1} parent=39 // pred_check
          %p288 = pneg %p118
        $region50: #{time_embedding.1} parent=39 // pred_check_branch
          %290 = sbr.rel (%p288) target = $region52
        $region51: #{time_embedding.1} parent=39 // pred_region
          %291 = dma.done %s284, 51200
        $region52: #{time_embedding.1} parent=39 // pred_fallthru
          _
        %s292 = sand.u32 %s18, 1
        %s293 = scalar_lea.sflag [#allocation4], %s292
        %s294 = sand.u32 %s135, 1
        %s295 = smul.addr %s294, 5
        %s296 = scalar_lea.vmem [#allocation8], %s295
        // Predicated region
        $region53: #{time_embedding.1} parent=39 // pred_check
          %p297 = pneg %p148
        $region54: #{time_embedding.1} parent=39 // pred_check_branch
          %299 = sbr.rel (%p297) target = $region56
        $region55: #{time_embedding.1} parent=39 // pred_region
          %300 = dma.done %s293, 80
        $region56: #{time_embedding.1} parent=39 // pred_fallthru
          _
        %p301 = pneg %p46
        %p302 = pneg %p43
        %p303 = pneg %p67
        %p304 = pneg %p64
        %p305 = pneg %p88
        %p306 = pneg %p85
        %s307 = sand.u32 %s18, 1
        %s308 = scalar_lea.sflag [#allocation4], %s307
        %s309 = sand.u32 %s105, 1
        %s310 = smul.addr %s309, 3200
        %s311 = scalar_lea.vmem [#allocation7], %s310
        %p312 = pneg %p118
        %p313 = pneg %p115
        %s314 = sand.u32 %s18, 1
        %s315 = scalar_lea.sflag [#allocation4], %s314
        %s316 = sand.u32 %s135, 1
        %s317 = smul.addr %s316, 5
        %s318 = scalar_lea.vmem [#allocation8], %s317
        %p319 = pneg %p148
        %p320 = pneg %p145
        %p321 = pneg %p178
        %p322 = pneg %p175
        %s323 = smul.u32 %s22, 2
        %s324 = sadd.s32 %s323, %s23
        %s325 = smul.u32 5, %s324
        %p326 = scmp.lt.s32.totalorder %s325, 9
        %s327 = scalar_select %p326, %s325, 9
        %s328 = smul.addr %s327, 8
        %s329 = scalar_lea.vmem %s5, %s328
        %s330 = smul.u32 %s22, 2
        %s331 = sadd.s32 %s330, %s23
        %s332 = smul.u32 5, %s331
        %s333 = smul.u32 %s22, 2
        %s334 = sadd.s32 %s333, %s23
        %s335 = smul.u32 5, %s334
        %s336 = smul.u32 %s22, 2
        %s337 = sadd.s32 %s336, %s23
        %s338 = smul.u32 5, %s337
        %p339 = scmp.lt.s32.totalorder %s338, 9
        %s340 = scalar_select %p339, %s338, 9
        %s341 = smul.addr %s340, 8
        %s342 = scalar_lea.vmem %s5, %s341
        %s343 = smul.u32 %s22, 2
        %s344 = sadd.s32 %s343, %s23
        %s345 = smul.u32 5, %s344
        %p347 = scmp.eq.s32.totalorder %s23, 0
        // Predicated region
        $region57: #{time_embedding.1} parent=39 // pred_check
          %p348 = pneg %p347
        $region58: #{time_embedding.1} parent=39 // pred_check_branch
          %350 = sbr.rel (%p348) target = $region60
        $region59: #{time_embedding.1} parent=39 // pred_region
          %v351 = vld [vmem:[%s0] sm:$0xff]
          %v352 = vld [vmem:[%s0 + $0x8] sm:$0xff]
          %v353 = vld [vmem:[%s0 + $0x10] sm:$0xff]
          %v354 = vpack.c.bf16 %v351, %v351
          %v355 = vpack.c.bf16 %v352, %v352
          %v356 = vpack.c.bf16 %v353, %v353
          %v357 = vld [vmem:[#allocation3] sm:$0xff]
          %v358 = vld [vmem:[#allocation3 + $0x8] sm:$0xff]
          %v359 = vld [vmem:[#allocation3 + $0x10] sm:$0xff]
          %v360 = vld [vmem:[#allocation3 + $0x18] sm:$0xff]
          %v361 = vld [vmem:[#allocation3 + $0x20] sm:$0xff]
          %v362 = vld [vmem:[#allocation3 + $0x28] sm:$0xff]
          %v363 = vld [vmem:[#allocation3 + $0x30] sm:$0xff]
          %v364 = vld [vmem:[#allocation3 + $0x38] sm:$0xff]
          %v365 = vld [vmem:[#allocation3 + $0x40] sm:$0xff]
          %v366 = vld [vmem:[#allocation3 + $0x48] sm:$0xff]
          %v367 = vld [vmem:[#allocation3 + $0x50] sm:$0xff]
          %v368 = vld [vmem:[#allocation3 + $0x58] sm:$0xff]
          %v369 = vld [vmem:[#allocation3 + $0x60] sm:$0xff]
          %v370 = vld [vmem:[#allocation3 + $0x68] sm:$0xff]
          %v371 = vld [vmem:[#allocation3 + $0x70] sm:$0xff]
          %v372 = vld [vmem:[#allocation3 + $0x78] sm:$0xff]
          %v373 = vld [vmem:[#allocation3 + $0x80] sm:$0xff]
          %v374 = vld [vmem:[#allocation3 + $0x88] sm:$0xff]
          %v375 = vld [vmem:[#allocation3 + $0x90] sm:$0xff]
          %v376 = vld [vmem:[#allocation3 + $0x98] sm:$0xff]
          %v377 = vld [vmem:[#allocation3 + $0xa0] sm:$0xff]
          %v378 = vld [vmem:[#allocation3 + $0xa8] sm:$0xff]
          %v379 = vld [vmem:[#allocation3 + $0xb0] sm:$0xff]
          %v380 = vld [vmem:[#allocation3 + $0xb8] sm:$0xff]
          %v381 = vld [vmem:[#allocation3 + $0xc0] sm:$0xff]
          %v382 = vld [vmem:[#allocation3 + $0xc8] sm:$0xff]
          %v383 = vld [vmem:[#allocation3 + $0xd0] sm:$0xff]
          %v384 = vld [vmem:[#allocation3 + $0xd8] sm:$0xff]
          %v385 = vld [vmem:[#allocation3 + $0xe0] sm:$0xff]
          %v386 = vld [vmem:[#allocation3 + $0xe8] sm:$0xff]
          %v387 = vld [vmem:[#allocation3 + $0xf0] sm:$0xff]
          %v388 = vld [vmem:[#allocation3 + $0xf8] sm:$0xff]
          %v389 = vld [vmem:[#allocation3 + $0x100] sm:$0xff]
          %v390 = vld [vmem:[#allocation3 + $0x108] sm:$0xff]
          %v391 = vld [vmem:[#allocation3 + $0x110] sm:$0xff]
          %v392 = vld [vmem:[#allocation3 + $0x118] sm:$0xff]
          %v393 = vld [vmem:[#allocation3 + $0x120] sm:$0xff]
          %v394 = vld [vmem:[#allocation3 + $0x128] sm:$0xff]
          %v395 = vld [vmem:[#allocation3 + $0x130] sm:$0xff]
          %v396 = vld [vmem:[#allocation3 + $0x138] sm:$0xff]
          %v397 = vld [vmem:[#allocation3 + $0x140] sm:$0xff]
          %v398 = vld [vmem:[#allocation3 + $0x148] sm:$0xff]
          %v399 = vld [vmem:[#allocation3 + $0x150] sm:$0xff]
          %v400 = vld [vmem:[#allocation3 + $0x158] sm:$0xff]
          %v401 = vld [vmem:[#allocation3 + $0x160] sm:$0xff]
          %v402 = vld [vmem:[#allocation3 + $0x168] sm:$0xff]
          %v403 = vld [vmem:[#allocation3 + $0x170] sm:$0xff]
          %v404 = vld [vmem:[#allocation3 + $0x178] sm:$0xff]
          %v405 = vld [vmem:[#allocation3 + $0x180] sm:$0xff]
          %v406 = vld [vmem:[#allocation3 + $0x188] sm:$0xff]
          %v407 = vld [vmem:[#allocation3 + $0x190] sm:$0xff]
          %v408 = vld [vmem:[#allocation3 + $0x198] sm:$0xff]
          %v409 = vld [vmem:[#allocation3 + $0x1a0] sm:$0xff]
          %v410 = vld [vmem:[#allocation3 + $0x1a8] sm:$0xff]
          %v411 = vld [vmem:[#allocation3 + $0x1b0] sm:$0xff]
          %v412 = vld [vmem:[#allocation3 + $0x1b8] sm:$0xff]
          %v413 = vld [vmem:[#allocation3 + $0x1c0] sm:$0xff]
          %v414 = vld [vmem:[#allocation3 + $0x1c8] sm:$0xff]
          %v415 = vld [vmem:[#allocation3 + $0x1d0] sm:$0xff]
          %v416 = vld [vmem:[#allocation3 + $0x1d8] sm:$0xff]
          %v417 = vld [vmem:[#allocation3 + $0x1e0] sm:$0xff]
          %v418 = vld [vmem:[#allocation3 + $0x1e8] sm:$0xff]
          %v419 = vld [vmem:[#allocation3 + $0x1f0] sm:$0xff]
          %v420 = vld [vmem:[#allocation3 + $0x1f8] sm:$0xff]
          %v421 = vld [vmem:[#allocation3 + $0x200] sm:$0xff]
          %v422 = vld [vmem:[#allocation3 + $0x208] sm:$0xff]
          %v423 = vld [vmem:[#allocation3 + $0x210] sm:$0xff]
          %v424 = vld [vmem:[#allocation3 + $0x218] sm:$0xff]
          %v425 = vld [vmem:[#allocation3 + $0x220] sm:$0xff]
          %v426 = vld [vmem:[#allocation3 + $0x228] sm:$0xff]
          %v427 = vld [vmem:[#allocation3 + $0x230] sm:$0xff]
          %v428 = vld [vmem:[#allocation3 + $0x238] sm:$0xff]
          %v429 = vld [vmem:[#allocation3 + $0x240] sm:$0xff]
          %v430 = vld [vmem:[#allocation3 + $0x248] sm:$0xff]
          %v431 = vld [vmem:[#allocation3 + $0x250] sm:$0xff]
          %v432 = vld [vmem:[#allocation3 + $0x258] sm:$0xff]
          %v433 = vld [vmem:[#allocation3 + $0x260] sm:$0xff]
          %v434 = vld [vmem:[#allocation3 + $0x268] sm:$0xff]
          %v435 = vld [vmem:[#allocation3 + $0x270] sm:$0xff]
          %v436 = vld [vmem:[#allocation3 + $0x278] sm:$0xff]
          %v437 = vld [vmem:[#allocation3 + $0x280] sm:$0xff]
          %v438 = vld [vmem:[#allocation3 + $0x288] sm:$0xff]
          %v439 = vld [vmem:[#allocation3 + $0x290] sm:$0xff]
          %v440 = vld [vmem:[#allocation3 + $0x298] sm:$0xff]
          %v441 = vld [vmem:[#allocation3 + $0x2a0] sm:$0xff]
          %v442 = vld [vmem:[#allocation3 + $0x2a8] sm:$0xff]
          %v443 = vld [vmem:[#allocation3 + $0x2b0] sm:$0xff]
          %v444 = vld [vmem:[#allocation3 + $0x2b8] sm:$0xff]
          %v445 = vld [vmem:[#allocation3 + $0x2c0] sm:$0xff]
          %v446 = vld [vmem:[#allocation3 + $0x2c8] sm:$0xff]
          %v447 = vld [vmem:[#allocation3 + $0x2d0] sm:$0xff]
          %v448 = vld [vmem:[#allocation3 + $0x2d8] sm:$0xff]
          %v449 = vld [vmem:[#allocation3 + $0x2e0] sm:$0xff]
          %v450 = vld [vmem:[#allocation3 + $0x2e8] sm:$0xff]
          %v451 = vld [vmem:[#allocation3 + $0x2f0] sm:$0xff]
          %v452 = vld [vmem:[#allocation3 + $0x2f8] sm:$0xff]
          %v453 = vld [vmem:[#allocation3 + $0x300] sm:$0xff]
          %v454 = vld [vmem:[#allocation3 + $0x308] sm:$0xff]
          %v455 = vld [vmem:[#allocation3 + $0x310] sm:$0xff]
          %v456 = vld [vmem:[#allocation3 + $0x318] sm:$0xff]
          %v457 = vld [vmem:[#allocation3 + $0x320] sm:$0xff]
          %v458 = vld [vmem:[#allocation3 + $0x328] sm:$0xff]
          %v459 = vld [vmem:[#allocation3 + $0x330] sm:$0xff]
          %v460 = vld [vmem:[#allocation3 + $0x338] sm:$0xff]
          %v461 = vld [vmem:[#allocation3 + $0x340] sm:$0xff]
          %v462 = vld [vmem:[#allocation3 + $0x348] sm:$0xff]
          %v463 = vld [vmem:[#allocation3 + $0x350] sm:$0xff]
          %v464 = vld [vmem:[#allocation3 + $0x358] sm:$0xff]
          %v465 = vld [vmem:[#allocation3 + $0x360] sm:$0xff]
          %v466 = vld [vmem:[#allocation3 + $0x368] sm:$0xff]
          %v467 = vld [vmem:[#allocation3 + $0x370] sm:$0xff]
          %v468 = vld [vmem:[#allocation3 + $0x378] sm:$0xff]
          %v469 = vld [vmem:[#allocation3 + $0x380] sm:$0xff]
          %v470 = vld [vmem:[#allocation3 + $0x388] sm:$0xff]
          %v471 = vld [vmem:[#allocation3 + $0x390] sm:$0xff]
          %v472 = vld [vmem:[#allocation3 + $0x398] sm:$0xff]
          %v473 = vld [vmem:[#allocation3 + $0x3a0] sm:$0xff]
          %v474 = vld [vmem:[#allocation3 + $0x3a8] sm:$0xff]
          %v475 = vld [vmem:[#allocation3 + $0x3b0] sm:$0xff]
          %v476 = vld [vmem:[#allocation3 + $0x3b8] sm:$0xff]
          %v477 = vld [vmem:[#allocation3 + $0x3c0] sm:$0xff]
          %v478 = vld [vmem:[#allocation3 + $0x3c8] sm:$0xff]
          %v479 = vld [vmem:[#allocation3 + $0x3d0] sm:$0xff]
          %v480 = vld [vmem:[#allocation3 + $0x3d8] sm:$0xff]
          %v481 = vld [vmem:[#allocation3 + $0x3e0] sm:$0xff]
          %v482 = vld [vmem:[#allocation3 + $0x3e8] sm:$0xff]
          %v483 = vld [vmem:[#allocation3 + $0x3f0] sm:$0xff]
          %v484 = vld [vmem:[#allocation3 + $0x3f8] sm:$0xff]
          %v485 = vld [vmem:[#allocation3 + $0x400] sm:$0xff]
          %v486 = vld [vmem:[#allocation3 + $0x408] sm:$0xff]
          %v487 = vld [vmem:[#allocation3 + $0x410] sm:$0xff]
          %v488 = vld [vmem:[#allocation3 + $0x418] sm:$0xff]
          %v489 = vld [vmem:[#allocation3 + $0x420] sm:$0xff]
          %v490 = vld [vmem:[#allocation3 + $0x428] sm:$0xff]
          %v491 = vld [vmem:[#allocation3 + $0x430] sm:$0xff]
          %v492 = vld [vmem:[#allocation3 + $0x438] sm:$0xff]
          %v493 = vld [vmem:[#allocation3 + $0x440] sm:$0xff]
          %v494 = vld [vmem:[#allocation3 + $0x448] sm:$0xff]
          %v495 = vld [vmem:[#allocation3 + $0x450] sm:$0xff]
          %v496 = vld [vmem:[#allocation3 + $0x458] sm:$0xff]
          %v497 = vld [vmem:[#allocation3 + $0x460] sm:$0xff]
          %v498 = vld [vmem:[#allocation3 + $0x468] sm:$0xff]
          %v499 = vld [vmem:[#allocation3 + $0x470] sm:$0xff]
          %v500 = vld [vmem:[#allocation3 + $0x478] sm:$0xff]
          %v501 = vld [vmem:[#allocation3 + $0x480] sm:$0xff]
          %v502 = vld [vmem:[#allocation3 + $0x488] sm:$0xff]
          %v503 = vld [vmem:[#allocation3 + $0x490] sm:$0xff]
          %v504 = vld [vmem:[#allocation3 + $0x498] sm:$0xff]
          %v505 = vld [vmem:[#allocation3 + $0x4a0] sm:$0xff]
          %v506 = vld [vmem:[#allocation3 + $0x4a8] sm:$0xff]
          %v507 = vld [vmem:[#allocation3 + $0x4b0] sm:$0xff]
          %v508 = vld [vmem:[#allocation3 + $0x4b8] sm:$0xff]
          %v509 = vld [vmem:[#allocation3 + $0x4c0] sm:$0xff]
          %v510 = vld [vmem:[#allocation3 + $0x4c8] sm:$0xff]
          %v511 = vld [vmem:[#allocation3 + $0x4d0] sm:$0xff]
          %v512 = vld [vmem:[#allocation3 + $0x4d8] sm:$0xff]
          %v513 = vld [vmem:[#allocation3 + $0x4e0] sm:$0xff]
          %v514 = vld [vmem:[#allocation3 + $0x4e8] sm:$0xff]
          %v515 = vld [vmem:[#allocation3 + $0x4f0] sm:$0xff]
          %v516 = vld [vmem:[#allocation3 + $0x4f8] sm:$0xff]
          %v517 = vld [vmem:[#allocation3 + $0x500] sm:$0xff]
          %v518 = vld [vmem:[#allocation3 + $0x508] sm:$0xff]
          %v519 = vld [vmem:[#allocation3 + $0x510] sm:$0xff]
          %v520 = vld [vmem:[#allocation3 + $0x518] sm:$0xff]
          %v521 = vld [vmem:[#allocation3 + $0x520] sm:$0xff]
          %v522 = vld [vmem:[#allocation3 + $0x528] sm:$0xff]
          %v523 = vld [vmem:[#allocation3 + $0x530] sm:$0xff]
          %v524 = vld [vmem:[#allocation3 + $0x538] sm:$0xff]
          %v525 = vld [vmem:[#allocation3 + $0x540] sm:$0xff]
          %v526 = vld [vmem:[#allocation3 + $0x548] sm:$0xff]
          %v527 = vld [vmem:[#allocation3 + $0x550] sm:$0xff]
          %v528 = vld [vmem:[#allocation3 + $0x558] sm:$0xff]
          %v529 = vld [vmem:[#allocation3 + $0x560] sm:$0xff]
          %v530 = vld [vmem:[#allocation3 + $0x568] sm:$0xff]
          %v531 = vld [vmem:[#allocation3 + $0x570] sm:$0xff]
          %v532 = vld [vmem:[#allocation3 + $0x578] sm:$0xff]
          %v533 = vld [vmem:[#allocation3 + $0x580] sm:$0xff]
          %v534 = vld [vmem:[#allocation3 + $0x588] sm:$0xff]
          %v535 = vld [vmem:[#allocation3 + $0x590] sm:$0xff]
          %v536 = vld [vmem:[#allocation3 + $0x598] sm:$0xff]
          %v537 = vld [vmem:[#allocation3 + $0x5a0] sm:$0xff]
          %v538 = vld [vmem:[#allocation3 + $0x5a8] sm:$0xff]
          %v539 = vld [vmem:[#allocation3 + $0x5b0] sm:$0xff]
          %v540 = vld [vmem:[#allocation3 + $0x5b8] sm:$0xff]
          %v541 = vld [vmem:[#allocation3 + $0x5c0] sm:$0xff]
          %v542 = vld [vmem:[#allocation3 + $0x5c8] sm:$0xff]
          %v543 = vld [vmem:[#allocation3 + $0x5d0] sm:$0xff]
          %v544 = vld [vmem:[#allocation3 + $0x5d8] sm:$0xff]
          %v545 = vld [vmem:[#allocation3 + $0x5e0] sm:$0xff]
          %v546 = vld [vmem:[#allocation3 + $0x5e8] sm:$0xff]
          %v547 = vld [vmem:[#allocation3 + $0x5f0] sm:$0xff]
          %v548 = vld [vmem:[#allocation3 + $0x5f8] sm:$0xff]
          %v549 = vld [vmem:[#allocation3 + $0x600] sm:$0xff]
          %v550 = vld [vmem:[#allocation3 + $0x608] sm:$0xff]
          %v551 = vld [vmem:[#allocation3 + $0x610] sm:$0xff]
          %v552 = vld [vmem:[#allocation3 + $0x618] sm:$0xff]
          %v553 = vld [vmem:[#allocation3 + $0x620] sm:$0xff]
          %v554 = vld [vmem:[#allocation3 + $0x628] sm:$0xff]
          %v555 = vld [vmem:[#allocation3 + $0x630] sm:$0xff]
          %v556 = vld [vmem:[#allocation3 + $0x638] sm:$0xff]
          %v557 = vld [vmem:[#allocation5] sm:$0xff]
          %v558 = vld [vmem:[#allocation5 + $0x8] sm:$0x3]
          %v561 = vlaneseq
          %v562 = vshrl.u32 %v561, 7
          %v563 = vsub.s32 0, %v562
          %v564 = vrot.slane %v557, %v563
          %v565 = vlaneseq
          %v566 = vshrl.u32 %v565, 7
          %v567 = vsub.s32 1, %v566
          %v568 = vrot.slane %v557, %v567
          %v569 = vlaneseq
          %v570 = vshrl.u32 %v569, 7
          %v571 = vsub.s32 2, %v570
          %v572 = vrot.slane %v557, %v571
          %v573 = vlaneseq
          %v574 = vshrl.u32 %v573, 7
          %v575 = vsub.s32 3, %v574
          %v576 = vrot.slane %v557, %v575
          %v577 = vlaneseq
          %v578 = vshrl.u32 %v577, 7
          %v579 = vsub.s32 4, %v578
          %v580 = vrot.slane %v557, %v579
          %v581 = vlaneseq
          %v582 = vshrl.u32 %v581, 7
          %v583 = vsub.s32 5, %v582
          %v584 = vrot.slane %v557, %v583
          %v585 = vlaneseq
          %v586 = vshrl.u32 %v585, 7
          %v587 = vsub.s32 6, %v586
          %v588 = vrot.slane %v557, %v587
          %v589 = vlaneseq
          %v590 = vshrl.u32 %v589, 7
          %v591 = vsub.s32 7, %v590
          %v592 = vrot.slane %v557, %v591
          %v593 = vlaneseq
          %v594 = vshrl.u32 %v593, 7
          %v595 = vsub.s32 0, %v594
          %v596 = vrot.slane %v558, %v595
          %v597 = vlaneseq
          %v598 = vshrl.u32 %v597, 7
          %v599 = vsub.s32 1, %v598
          %v600 = vrot.slane %v558, %v599
          %v811 = vunpack.c.l.b16 %v357
          %v812 = vunpack.c.h.b16 %v357
          %v813 = vunpack.c.l.b16 %v358
          %v814 = vunpack.c.h.b16 %v358
          %v815 = vunpack.c.l.b16 %v359
          %v816 = vunpack.c.h.b16 %v359
          %v817 = vunpack.c.l.b16 %v360
          %v818 = vunpack.c.h.b16 %v360
          %v819 = vunpack.c.l.b16 %v361
          %v820 = vunpack.c.h.b16 %v361
          %v821 = vunpack.c.l.b16 %v362
          %v822 = vunpack.c.h.b16 %v362
          %v823 = vunpack.c.l.b16 %v363
          %v824 = vunpack.c.h.b16 %v363
          %v825 = vunpack.c.l.b16 %v364
          %v826 = vunpack.c.h.b16 %v364
          %v827 = vunpack.c.l.b16 %v365
          %v828 = vunpack.c.h.b16 %v365
          %v829 = vunpack.c.l.b16 %v366
          %v830 = vunpack.c.h.b16 %v366
          %v831 = vunpack.c.l.b16 %v367
          %v832 = vunpack.c.h.b16 %v367
          %v833 = vunpack.c.l.b16 %v368
          %v834 = vunpack.c.h.b16 %v368
          %v835 = vunpack.c.l.b16 %v369
          %v836 = vunpack.c.h.b16 %v369
          %v837 = vunpack.c.l.b16 %v370
          %v838 = vunpack.c.h.b16 %v370
          %v839 = vunpack.c.l.b16 %v371
          %v840 = vunpack.c.h.b16 %v371
          %v841 = vunpack.c.l.b16 %v372
          %v842 = vunpack.c.h.b16 %v372
          %v843 = vunpack.c.l.b16 %v373
          %v844 = vunpack.c.h.b16 %v373
          %v845 = vunpack.c.l.b16 %v374
          %v846 = vunpack.c.h.b16 %v374
          %v847 = vunpack.c.l.b16 %v375
          %v848 = vunpack.c.h.b16 %v375
          %v849 = vunpack.c.l.b16 %v376
          %v850 = vunpack.c.h.b16 %v376
          %v851 = vunpack.c.l.b16 %v377
          %v852 = vunpack.c.h.b16 %v377
          %v853 = vunpack.c.l.b16 %v378
          %v854 = vunpack.c.h.b16 %v378
          %v855 = vunpack.c.l.b16 %v379
          %v856 = vunpack.c.h.b16 %v379
          %v857 = vunpack.c.l.b16 %v380
          %v858 = vunpack.c.h.b16 %v380
          %v859 = vunpack.c.l.b16 %v381
          %v860 = vunpack.c.h.b16 %v381
          %v861 = vunpack.c.l.b16 %v382
          %v862 = vunpack.c.h.b16 %v382
          %v863 = vunpack.c.l.b16 %v383
          %v864 = vunpack.c.h.b16 %v383
          %v865 = vunpack.c.l.b16 %v384
          %v866 = vunpack.c.h.b16 %v384
          %v867 = vunpack.c.l.b16 %v385
          %v868 = vunpack.c.h.b16 %v385
          %v869 = vunpack.c.l.b16 %v386
          %v870 = vunpack.c.h.b16 %v386
          %v871 = vunpack.c.l.b16 %v387
          %v872 = vunpack.c.h.b16 %v387
          %v873 = vunpack.c.l.b16 %v388
          %v874 = vunpack.c.h.b16 %v388
          %v875 = vunpack.c.l.b16 %v389
          %v876 = vunpack.c.h.b16 %v389
          %v877 = vunpack.c.l.b16 %v390
          %v878 = vunpack.c.h.b16 %v390
          %v879 = vunpack.c.l.b16 %v391
          %v880 = vunpack.c.h.b16 %v391
          %v881 = vunpack.c.l.b16 %v392
          %v882 = vunpack.c.h.b16 %v392
          %v883 = vunpack.c.l.b16 %v393
          %v884 = vunpack.c.h.b16 %v393
          %v885 = vunpack.c.l.b16 %v394
          %v886 = vunpack.c.h.b16 %v394
          %v887 = vunpack.c.l.b16 %v395
          %v888 = vunpack.c.h.b16 %v395
          %v889 = vunpack.c.l.b16 %v396
          %v890 = vunpack.c.h.b16 %v396
          %v891 = vunpack.c.l.b16 %v397
          %v892 = vunpack.c.h.b16 %v397
          %v893 = vunpack.c.l.b16 %v398
          %v894 = vunpack.c.h.b16 %v398
          %v895 = vunpack.c.l.b16 %v399
          %v896 = vunpack.c.h.b16 %v399
          %v897 = vunpack.c.l.b16 %v400
          %v898 = vunpack.c.h.b16 %v400
          %v899 = vunpack.c.l.b16 %v401
          %v900 = vunpack.c.h.b16 %v401
          %v901 = vunpack.c.l.b16 %v402
          %v902 = vunpack.c.h.b16 %v402
          %v903 = vunpack.c.l.b16 %v403
          %v904 = vunpack.c.h.b16 %v403
          %v905 = vunpack.c.l.b16 %v404
          %v906 = vunpack.c.h.b16 %v404
          %v907 = vunpack.c.l.b16 %v405
          %v908 = vunpack.c.h.b16 %v405
          %v909 = vunpack.c.l.b16 %v406
          %v910 = vunpack.c.h.b16 %v406
          %v911 = vunpack.c.l.b16 %v407
          %v912 = vunpack.c.h.b16 %v407
          %v913 = vunpack.c.l.b16 %v408
          %v914 = vunpack.c.h.b16 %v408
          %v915 = vunpack.c.l.b16 %v409
          %v916 = vunpack.c.h.b16 %v409
          %v917 = vunpack.c.l.b16 %v410
          %v918 = vunpack.c.h.b16 %v410
          %v919 = vunpack.c.l.b16 %v411
          %v920 = vunpack.c.h.b16 %v411
          %v921 = vunpack.c.l.b16 %v412
          %v922 = vunpack.c.h.b16 %v412
          %v923 = vunpack.c.l.b16 %v413
          %v924 = vunpack.c.h.b16 %v413
          %v925 = vunpack.c.l.b16 %v414
          %v926 = vunpack.c.h.b16 %v414
          %v927 = vunpack.c.l.b16 %v415
          %v928 = vunpack.c.h.b16 %v415
          %v929 = vunpack.c.l.b16 %v416
          %v930 = vunpack.c.h.b16 %v416
          %v931 = vunpack.c.l.b16 %v417
          %v932 = vunpack.c.h.b16 %v417
          %v933 = vunpack.c.l.b16 %v418
          %v934 = vunpack.c.h.b16 %v418
          %v935 = vunpack.c.l.b16 %v419
          %v936 = vunpack.c.h.b16 %v419
          %v937 = vunpack.c.l.b16 %v420
          %v938 = vunpack.c.h.b16 %v420
          %v939 = vunpack.c.l.b16 %v421
          %v940 = vunpack.c.h.b16 %v421
          %v941 = vunpack.c.l.b16 %v422
          %v942 = vunpack.c.h.b16 %v422
          %v943 = vunpack.c.l.b16 %v423
          %v944 = vunpack.c.h.b16 %v423
          %v945 = vunpack.c.l.b16 %v424
          %v946 = vunpack.c.h.b16 %v424
          %v947 = vunpack.c.l.b16 %v425
          %v948 = vunpack.c.h.b16 %v425
          %v949 = vunpack.c.l.b16 %v426
          %v950 = vunpack.c.h.b16 %v426
          %v951 = vunpack.c.l.b16 %v427
          %v952 = vunpack.c.h.b16 %v427
          %v953 = vunpack.c.l.b16 %v428
          %v954 = vunpack.c.h.b16 %v428
          %v955 = vunpack.c.l.b16 %v429
          %v956 = vunpack.c.h.b16 %v429
          %v957 = vunpack.c.l.b16 %v430
          %v958 = vunpack.c.h.b16 %v430
          %v959 = vunpack.c.l.b16 %v431
          %v960 = vunpack.c.h.b16 %v431
          %v961 = vunpack.c.l.b16 %v432
          %v962 = vunpack.c.h.b16 %v432
          %v963 = vunpack.c.l.b16 %v433
          %v964 = vunpack.c.h.b16 %v433
          %v965 = vunpack.c.l.b16 %v434
          %v966 = vunpack.c.h.b16 %v434
          %v967 = vunpack.c.l.b16 %v435
          %v968 = vunpack.c.h.b16 %v435
          %v969 = vunpack.c.l.b16 %v436
          %v970 = vunpack.c.h.b16 %v436
          %v971 = vunpack.c.l.b16 %v437
          %v972 = vunpack.c.h.b16 %v437
          %v973 = vunpack.c.l.b16 %v438
          %v974 = vunpack.c.h.b16 %v438
          %v975 = vunpack.c.l.b16 %v439
          %v976 = vunpack.c.h.b16 %v439
          %v977 = vunpack.c.l.b16 %v440
          %v978 = vunpack.c.h.b16 %v440
          %v979 = vunpack.c.l.b16 %v441
          %v980 = vunpack.c.h.b16 %v441
          %v981 = vunpack.c.l.b16 %v442
          %v982 = vunpack.c.h.b16 %v442
          %v983 = vunpack.c.l.b16 %v443
          %v984 = vunpack.c.h.b16 %v443
          %v985 = vunpack.c.l.b16 %v444
          %v986 = vunpack.c.h.b16 %v444
          %v987 = vunpack.c.l.b16 %v445
          %v988 = vunpack.c.h.b16 %v445
          %v989 = vunpack.c.l.b16 %v446
          %v990 = vunpack.c.h.b16 %v446
          %v991 = vunpack.c.l.b16 %v447
          %v992 = vunpack.c.h.b16 %v447
          %v993 = vunpack.c.l.b16 %v448
          %v994 = vunpack.c.h.b16 %v448
          %v995 = vunpack.c.l.b16 %v449
          %v996 = vunpack.c.h.b16 %v449
          %v997 = vunpack.c.l.b16 %v450
          %v998 = vunpack.c.h.b16 %v450
          %v999 = vunpack.c.l.b16 %v451
          %v1000 = vunpack.c.h.b16 %v451
          %v1001 = vunpack.c.l.b16 %v452
          %v1002 = vunpack.c.h.b16 %v452
          %v1003 = vunpack.c.l.b16 %v453
          %v1004 = vunpack.c.h.b16 %v453
          %v1005 = vunpack.c.l.b16 %v454
          %v1006 = vunpack.c.h.b16 %v454
          %v1007 = vunpack.c.l.b16 %v455
          %v1008 = vunpack.c.h.b16 %v455
          %v1009 = vunpack.c.l.b16 %v456
          %v1010 = vunpack.c.h.b16 %v456
          %v1011 = vunpack.c.l.b16 %v457
          %v1012 = vunpack.c.h.b16 %v457
          %v1013 = vunpack.c.l.b16 %v458
          %v1014 = vunpack.c.h.b16 %v458
          %v1015 = vunpack.c.l.b16 %v459
          %v1016 = vunpack.c.h.b16 %v459
          %v1017 = vunpack.c.l.b16 %v460
          %v1018 = vunpack.c.h.b16 %v460
          %v1019 = vunpack.c.l.b16 %v461
          %v1020 = vunpack.c.h.b16 %v461
          %v1021 = vunpack.c.l.b16 %v462
          %v1022 = vunpack.c.h.b16 %v462
          %v1023 = vunpack.c.l.b16 %v463
          %v1024 = vunpack.c.h.b16 %v463
          %v1025 = vunpack.c.l.b16 %v464
          %v1026 = vunpack.c.h.b16 %v464
          %v1027 = vunpack.c.l.b16 %v465
          %v1028 = vunpack.c.h.b16 %v465
          %v1029 = vunpack.c.l.b16 %v466
          %v1030 = vunpack.c.h.b16 %v466
          %v1031 = vunpack.c.l.b16 %v467
          %v1032 = vunpack.c.h.b16 %v467
          %v1033 = vunpack.c.l.b16 %v468
          %v1034 = vunpack.c.h.b16 %v468
          %v1035 = vunpack.c.l.b16 %v469
          %v1036 = vunpack.c.h.b16 %v469
          %v1037 = vunpack.c.l.b16 %v470
          %v1038 = vunpack.c.h.b16 %v470
          %v1039 = vunpack.c.l.b16 %v471
          %v1040 = vunpack.c.h.b16 %v471
          %v1041 = vunpack.c.l.b16 %v472
          %v1042 = vunpack.c.h.b16 %v472
          %v1043 = vunpack.c.l.b16 %v473
          %v1044 = vunpack.c.h.b16 %v473
          %v1045 = vunpack.c.l.b16 %v474
          %v1046 = vunpack.c.h.b16 %v474
          %v1047 = vunpack.c.l.b16 %v475
          %v1048 = vunpack.c.h.b16 %v475
          %v1049 = vunpack.c.l.b16 %v476
          %v1050 = vunpack.c.h.b16 %v476
          %v1051 = vunpack.c.l.b16 %v477
          %v1052 = vunpack.c.h.b16 %v477
          %v1053 = vunpack.c.l.b16 %v478
          %v1054 = vunpack.c.h.b16 %v478
          %v1055 = vunpack.c.l.b16 %v479
          %v1056 = vunpack.c.h.b16 %v479
          %v1057 = vunpack.c.l.b16 %v480
          %v1058 = vunpack.c.h.b16 %v480
          %v1059 = vunpack.c.l.b16 %v481
          %v1060 = vunpack.c.h.b16 %v481
          %v1061 = vunpack.c.l.b16 %v482
          %v1062 = vunpack.c.h.b16 %v482
          %v1063 = vunpack.c.l.b16 %v483
          %v1064 = vunpack.c.h.b16 %v483
          %v1065 = vunpack.c.l.b16 %v484
          %v1066 = vunpack.c.h.b16 %v484
          %v1067 = vunpack.c.l.b16 %v485
          %v1068 = vunpack.c.h.b16 %v485
          %v1069 = vunpack.c.l.b16 %v486
          %v1070 = vunpack.c.h.b16 %v486
          %v1071 = vunpack.c.l.b16 %v487
          %v1072 = vunpack.c.h.b16 %v487
          %v1073 = vunpack.c.l.b16 %v488
          %v1074 = vunpack.c.h.b16 %v488
          %v1075 = vunpack.c.l.b16 %v489
          %v1076 = vunpack.c.h.b16 %v489
          %v1077 = vunpack.c.l.b16 %v490
          %v1078 = vunpack.c.h.b16 %v490
          %v1079 = vunpack.c.l.b16 %v491
          %v1080 = vunpack.c.h.b16 %v491
          %v1081 = vunpack.c.l.b16 %v492
          %v1082 = vunpack.c.h.b16 %v492
          %v1083 = vunpack.c.l.b16 %v493
          %v1084 = vunpack.c.h.b16 %v493
          %v1085 = vunpack.c.l.b16 %v494
          %v1086 = vunpack.c.h.b16 %v494
          %v1087 = vunpack.c.l.b16 %v495
          %v1088 = vunpack.c.h.b16 %v495
          %v1089 = vunpack.c.l.b16 %v496
          %v1090 = vunpack.c.h.b16 %v496
          %v1091 = vunpack.c.l.b16 %v497
          %v1092 = vunpack.c.h.b16 %v497
          %v1093 = vunpack.c.l.b16 %v498
          %v1094 = vunpack.c.h.b16 %v498
          %v1095 = vunpack.c.l.b16 %v499
          %v1096 = vunpack.c.h.b16 %v499
          %v1097 = vunpack.c.l.b16 %v500
          %v1098 = vunpack.c.h.b16 %v500
          %v1099 = vunpack.c.l.b16 %v501
          %v1100 = vunpack.c.h.b16 %v501
          %v1101 = vunpack.c.l.b16 %v502
          %v1102 = vunpack.c.h.b16 %v502
          %v1103 = vunpack.c.l.b16 %v503
          %v1104 = vunpack.c.h.b16 %v503
          %v1105 = vunpack.c.l.b16 %v504
          %v1106 = vunpack.c.h.b16 %v504
          %v1107 = vunpack.c.l.b16 %v505
          %v1108 = vunpack.c.h.b16 %v505
          %v1109 = vunpack.c.l.b16 %v506
          %v1110 = vunpack.c.h.b16 %v506
          %v1111 = vunpack.c.l.b16 %v507
          %v1112 = vunpack.c.h.b16 %v507
          %v1113 = vunpack.c.l.b16 %v508
          %v1114 = vunpack.c.h.b16 %v508
          %v1115 = vunpack.c.l.b16 %v509
          %v1116 = vunpack.c.h.b16 %v509
          %v1117 = vunpack.c.l.b16 %v510
          %v1118 = vunpack.c.h.b16 %v510
          %v1119 = vunpack.c.l.b16 %v511
          %v1120 = vunpack.c.h.b16 %v511
          %v1121 = vunpack.c.l.b16 %v512
          %v1122 = vunpack.c.h.b16 %v512
          %v1123 = vunpack.c.l.b16 %v513
          %v1124 = vunpack.c.h.b16 %v513
          %v1125 = vunpack.c.l.b16 %v514
          %v1126 = vunpack.c.h.b16 %v514
          %v1127 = vunpack.c.l.b16 %v515
          %v1128 = vunpack.c.h.b16 %v515
          %v1129 = vunpack.c.l.b16 %v516
          %v1130 = vunpack.c.h.b16 %v516
          %v1131 = vunpack.c.l.b16 %v517
          %v1132 = vunpack.c.h.b16 %v517
          %v1133 = vunpack.c.l.b16 %v518
          %v1134 = vunpack.c.h.b16 %v518
          %v1135 = vunpack.c.l.b16 %v519
          %v1136 = vunpack.c.h.b16 %v519
          %v1137 = vunpack.c.l.b16 %v520
          %v1138 = vunpack.c.h.b16 %v520
          %v1139 = vunpack.c.l.b16 %v521
          %v1140 = vunpack.c.h.b16 %v521
          %v1141 = vunpack.c.l.b16 %v522
          %v1142 = vunpack.c.h.b16 %v522
          %v1143 = vunpack.c.l.b16 %v523
          %v1144 = vunpack.c.h.b16 %v523
          %v1145 = vunpack.c.l.b16 %v524
          %v1146 = vunpack.c.h.b16 %v524
          %v1147 = vunpack.c.l.b16 %v525
          %v1148 = vunpack.c.h.b16 %v525
          %v1149 = vunpack.c.l.b16 %v526
          %v1150 = vunpack.c.h.b16 %v526
          %v1151 = vunpack.c.l.b16 %v527
          %v1152 = vunpack.c.h.b16 %v527
          %v1153 = vunpack.c.l.b16 %v528
          %v1154 = vunpack.c.h.b16 %v528
          %v1155 = vunpack.c.l.b16 %v529
          %v1156 = vunpack.c.h.b16 %v529
          %v1157 = vunpack.c.l.b16 %v530
          %v1158 = vunpack.c.h.b16 %v530
          %v1159 = vunpack.c.l.b16 %v531
          %v1160 = vunpack.c.h.b16 %v531
          %v1161 = vunpack.c.l.b16 %v532
          %v1162 = vunpack.c.h.b16 %v532
          %v1163 = vunpack.c.l.b16 %v533
          %v1164 = vunpack.c.h.b16 %v533
          %v1165 = vunpack.c.l.b16 %v534
          %v1166 = vunpack.c.h.b16 %v534
          %v1167 = vunpack.c.l.b16 %v535
          %v1168 = vunpack.c.h.b16 %v535
          %v1169 = vunpack.c.l.b16 %v536
          %v1170 = vunpack.c.h.b16 %v536
          %v1171 = vunpack.c.l.b16 %v537
          %v1172 = vunpack.c.h.b16 %v537
          %v1173 = vunpack.c.l.b16 %v538
          %v1174 = vunpack.c.h.b16 %v538
          %v1175 = vunpack.c.l.b16 %v539
          %v1176 = vunpack.c.h.b16 %v539
          %v1177 = vunpack.c.l.b16 %v540
          %v1178 = vunpack.c.h.b16 %v540
          %v1179 = vunpack.c.l.b16 %v541
          %v1180 = vunpack.c.h.b16 %v541
          %v1181 = vunpack.c.l.b16 %v542
          %v1182 = vunpack.c.h.b16 %v542
          %v1183 = vunpack.c.l.b16 %v543
          %v1184 = vunpack.c.h.b16 %v543
          %v1185 = vunpack.c.l.b16 %v544
          %v1186 = vunpack.c.h.b16 %v544
          %v1187 = vunpack.c.l.b16 %v545
          %v1188 = vunpack.c.h.b16 %v545
          %v1189 = vunpack.c.l.b16 %v546
          %v1190 = vunpack.c.h.b16 %v546
          %v1191 = vunpack.c.l.b16 %v547
          %v1192 = vunpack.c.h.b16 %v547
          %v1193 = vunpack.c.l.b16 %v548
          %v1194 = vunpack.c.h.b16 %v548
          %v1195 = vunpack.c.l.b16 %v549
          %v1196 = vunpack.c.h.b16 %v549
          %v1197 = vunpack.c.l.b16 %v550
          %v1198 = vunpack.c.h.b16 %v550
          %v1199 = vunpack.c.l.b16 %v551
          %v1200 = vunpack.c.h.b16 %v551
          %v1201 = vunpack.c.l.b16 %v552
          %v1202 = vunpack.c.h.b16 %v552
          %v1203 = vunpack.c.l.b16 %v553
          %v1204 = vunpack.c.h.b16 %v553
          %v1205 = vunpack.c.l.b16 %v554
          %v1206 = vunpack.c.h.b16 %v554
          %v1207 = vunpack.c.l.b16 %v555
          %v1208 = vunpack.c.h.b16 %v555
          %v1209 = vunpack.c.l.b16 %v556
          %v1210 = vunpack.c.h.b16 %v556
          %v1211 = vpack.c.b16 %v821, %v811
          %v1212 = vpack.c.b16 %v822, %v812
          %v1213 = vpack.c.b16 %v823, %v813
          %v1214 = vpack.c.b16 %v824, %v814
          %v1215 = vpack.c.b16 %v825, %v815
          %v1216 = vpack.c.b16 %v826, %v816
          %v1217 = vpack.c.b16 %v827, %v817
          %v1218 = vpack.c.b16 %v828, %v818
          %v1219 = vpack.c.b16 %v829, %v819
          %v1220 = vpack.c.b16 %v830, %v820
          %v1221 = vpack.c.b16 %v841, %v831
          %v1222 = vpack.c.b16 %v842, %v832
          %v1223 = vpack.c.b16 %v843, %v833
          %v1224 = vpack.c.b16 %v844, %v834
          %v1225 = vpack.c.b16 %v845, %v835
          %v1226 = vpack.c.b16 %v846, %v836
          %v1227 = vpack.c.b16 %v847, %v837
          %v1228 = vpack.c.b16 %v848, %v838
          %v1229 = vpack.c.b16 %v849, %v839
          %v1230 = vpack.c.b16 %v850, %v840
          %v1231 = vpack.c.b16 %v861, %v851
          %v1232 = vpack.c.b16 %v862, %v852
          %v1233 = vpack.c.b16 %v863, %v853
          %v1234 = vpack.c.b16 %v864, %v854
          %v1235 = vpack.c.b16 %v865, %v855
          %v1236 = vpack.c.b16 %v866, %v856
          %v1237 = vpack.c.b16 %v867, %v857
          %v1238 = vpack.c.b16 %v868, %v858
          %v1239 = vpack.c.b16 %v869, %v859
          %v1240 = vpack.c.b16 %v870, %v860
          %v1241 = vpack.c.b16 %v881, %v871
          %v1242 = vpack.c.b16 %v882, %v872
          %v1243 = vpack.c.b16 %v883, %v873
          %v1244 = vpack.c.b16 %v884, %v874
          %v1245 = vpack.c.b16 %v885, %v875
          %v1246 = vpack.c.b16 %v886, %v876
          %v1247 = vpack.c.b16 %v887, %v877
          %v1248 = vpack.c.b16 %v888, %v878
          %v1249 = vpack.c.b16 %v889, %v879
          %v1250 = vpack.c.b16 %v890, %v880
          %v1251 = vpack.c.b16 %v901, %v891
          %v1252 = vpack.c.b16 %v902, %v892
          %v1253 = vpack.c.b16 %v903, %v893
          %v1254 = vpack.c.b16 %v904, %v894
          %v1255 = vpack.c.b16 %v905, %v895
          %v1256 = vpack.c.b16 %v906, %v896
          %v1257 = vpack.c.b16 %v907, %v897
          %v1258 = vpack.c.b16 %v908, %v898
          %v1259 = vpack.c.b16 %v909, %v899
          %v1260 = vpack.c.b16 %v910, %v900
          %v1261 = vpack.c.b16 %v921, %v911
          %v1262 = vpack.c.b16 %v922, %v912
          %v1263 = vpack.c.b16 %v923, %v913
          %v1264 = vpack.c.b16 %v924, %v914
          %v1265 = vpack.c.b16 %v925, %v915
          %v1266 = vpack.c.b16 %v926, %v916
          %v1267 = vpack.c.b16 %v927, %v917
          %v1268 = vpack.c.b16 %v928, %v918
          %v1269 = vpack.c.b16 %v929, %v919
          %v1270 = vpack.c.b16 %v930, %v920
          %v1271 = vpack.c.b16 %v941, %v931
          %v1272 = vpack.c.b16 %v942, %v932
          %v1273 = vpack.c.b16 %v943, %v933
          %v1274 = vpack.c.b16 %v944, %v934
          %v1275 = vpack.c.b16 %v945, %v935
          %v1276 = vpack.c.b16 %v946, %v936
          %v1277 = vpack.c.b16 %v947, %v937
          %v1278 = vpack.c.b16 %v948, %v938
          %v1279 = vpack.c.b16 %v949, %v939
          %v1280 = vpack.c.b16 %v950, %v940
          %v1281 = vpack.c.b16 %v961, %v951
          %v1282 = vpack.c.b16 %v962, %v952
          %v1283 = vpack.c.b16 %v963, %v953
          %v1284 = vpack.c.b16 %v964, %v954
          %v1285 = vpack.c.b16 %v965, %v955
          %v1286 = vpack.c.b16 %v966, %v956
          %v1287 = vpack.c.b16 %v967, %v957
          %v1288 = vpack.c.b16 %v968, %v958
          %v1289 = vpack.c.b16 %v969, %v959
          %v1290 = vpack.c.b16 %v970, %v960
          %v1291 = vpack.c.b16 %v981, %v971
          %v1292 = vpack.c.b16 %v982, %v972
          %v1293 = vpack.c.b16 %v983, %v973
          %v1294 = vpack.c.b16 %v984, %v974
          %v1295 = vpack.c.b16 %v985, %v975
          %v1296 = vpack.c.b16 %v986, %v976
          %v1297 = vpack.c.b16 %v987, %v977
          %v1298 = vpack.c.b16 %v988, %v978
          %v1299 = vpack.c.b16 %v989, %v979
          %v1300 = vpack.c.b16 %v990, %v980
          %v1301 = vpack.c.b16 %v1001, %v991
          %v1302 = vpack.c.b16 %v1002, %v992
          %v1303 = vpack.c.b16 %v1003, %v993
          %v1304 = vpack.c.b16 %v1004, %v994
          %v1305 = vpack.c.b16 %v1005, %v995
          %v1306 = vpack.c.b16 %v1006, %v996
          %v1307 = vpack.c.b16 %v1007, %v997
          %v1308 = vpack.c.b16 %v1008, %v998
          %v1309 = vpack.c.b16 %v1009, %v999
          %v1310 = vpack.c.b16 %v1010, %v1000
          %v1311 = vpack.c.b16 %v1021, %v1011
          %v1312 = vpack.c.b16 %v1022, %v1012
          %v1313 = vpack.c.b16 %v1023, %v1013
          %v1314 = vpack.c.b16 %v1024, %v1014
          %v1315 = vpack.c.b16 %v1025, %v1015
          %v1316 = vpack.c.b16 %v1026, %v1016
          %v1317 = vpack.c.b16 %v1027, %v1017
          %v1318 = vpack.c.b16 %v1028, %v1018
          %v1319 = vpack.c.b16 %v1029, %v1019
          %v1320 = vpack.c.b16 %v1030, %v1020
          %v1321 = vpack.c.b16 %v1041, %v1031
          %v1322 = vpack.c.b16 %v1042, %v1032
          %v1323 = vpack.c.b16 %v1043, %v1033
          %v1324 = vpack.c.b16 %v1044, %v1034
          %v1325 = vpack.c.b16 %v1045, %v1035
          %v1326 = vpack.c.b16 %v1046, %v1036
          %v1327 = vpack.c.b16 %v1047, %v1037
          %v1328 = vpack.c.b16 %v1048, %v1038
          %v1329 = vpack.c.b16 %v1049, %v1039
          %v1330 = vpack.c.b16 %v1050, %v1040
          %v1331 = vpack.c.b16 %v1061, %v1051
          %v1332 = vpack.c.b16 %v1062, %v1052
          %v1333 = vpack.c.b16 %v1063, %v1053
          %v1334 = vpack.c.b16 %v1064, %v1054
          %v1335 = vpack.c.b16 %v1065, %v1055
          %v1336 = vpack.c.b16 %v1066, %v1056
          %v1337 = vpack.c.b16 %v1067, %v1057
          %v1338 = vpack.c.b16 %v1068, %v1058
          %v1339 = vpack.c.b16 %v1069, %v1059
          %v1340 = vpack.c.b16 %v1070, %v1060
          %v1341 = vpack.c.b16 %v1081, %v1071
          %v1342 = vpack.c.b16 %v1082, %v1072
          %v1343 = vpack.c.b16 %v1083, %v1073
          %v1344 = vpack.c.b16 %v1084, %v1074
          %v1345 = vpack.c.b16 %v1085, %v1075
          %v1346 = vpack.c.b16 %v1086, %v1076
          %v1347 = vpack.c.b16 %v1087, %v1077
          %v1348 = vpack.c.b16 %v1088, %v1078
          %v1349 = vpack.c.b16 %v1089, %v1079
          %v1350 = vpack.c.b16 %v1090, %v1080
          %v1351 = vpack.c.b16 %v1101, %v1091
          %v1352 = vpack.c.b16 %v1102, %v1092
          %v1353 = vpack.c.b16 %v1103, %v1093
          %v1354 = vpack.c.b16 %v1104, %v1094
          %v1355 = vpack.c.b16 %v1105, %v1095
          %v1356 = vpack.c.b16 %v1106, %v1096
          %v1357 = vpack.c.b16 %v1107, %v1097
          %v1358 = vpack.c.b16 %v1108, %v1098
          %v1359 = vpack.c.b16 %v1109, %v1099
          %v1360 = vpack.c.b16 %v1110, %v1100
          %v1361 = vpack.c.b16 %v1121, %v1111
          %v1362 = vpack.c.b16 %v1122, %v1112
          %v1363 = vpack.c.b16 %v1123, %v1113
          %v1364 = vpack.c.b16 %v1124, %v1114
          %v1365 = vpack.c.b16 %v1125, %v1115
          %v1366 = vpack.c.b16 %v1126, %v1116
          %v1367 = vpack.c.b16 %v1127, %v1117
          %v1368 = vpack.c.b16 %v1128, %v1118
          %v1369 = vpack.c.b16 %v1129, %v1119
          %v1370 = vpack.c.b16 %v1130, %v1120
          %v1371 = vpack.c.b16 %v1141, %v1131
          %v1372 = vpack.c.b16 %v1142, %v1132
          %v1373 = vpack.c.b16 %v1143, %v1133
          %v1374 = vpack.c.b16 %v1144, %v1134
          %v1375 = vpack.c.b16 %v1145, %v1135
          %v1376 = vpack.c.b16 %v1146, %v1136
          %v1377 = vpack.c.b16 %v1147, %v1137
          %v1378 = vpack.c.b16 %v1148, %v1138
          %v1379 = vpack.c.b16 %v1149, %v1139
          %v1380 = vpack.c.b16 %v1150, %v1140
          %v1381 = vpack.c.b16 %v1161, %v1151
          %v1382 = vpack.c.b16 %v1162, %v1152
          %v1383 = vpack.c.b16 %v1163, %v1153
          %v1384 = vpack.c.b16 %v1164, %v1154
          %v1385 = vpack.c.b16 %v1165, %v1155
          %v1386 = vpack.c.b16 %v1166, %v1156
          %v1387 = vpack.c.b16 %v1167, %v1157
          %v1388 = vpack.c.b16 %v1168, %v1158
          %v1389 = vpack.c.b16 %v1169, %v1159
          %v1390 = vpack.c.b16 %v1170, %v1160
          %v1391 = vpack.c.b16 %v1181, %v1171
          %v1392 = vpack.c.b16 %v1182, %v1172
          %v1393 = vpack.c.b16 %v1183, %v1173
          %v1394 = vpack.c.b16 %v1184, %v1174
          %v1395 = vpack.c.b16 %v1185, %v1175
          %v1396 = vpack.c.b16 %v1186, %v1176
          %v1397 = vpack.c.b16 %v1187, %v1177
          %v1398 = vpack.c.b16 %v1188, %v1178
          %v1399 = vpack.c.b16 %v1189, %v1179
          %v1400 = vpack.c.b16 %v1190, %v1180
          %v1401 = vpack.c.b16 %v1201, %v1191
          %v1402 = vpack.c.b16 %v1202, %v1192
          %v1403 = vpack.c.b16 %v1203, %v1193
          %v1404 = vpack.c.b16 %v1204, %v1194
          %v1405 = vpack.c.b16 %v1205, %v1195
          %v1406 = vpack.c.b16 %v1206, %v1196
          %v1407 = vpack.c.b16 %v1207, %v1197
          %v1408 = vpack.c.b16 %v1208, %v1198
          %v1409 = vpack.c.b16 %v1209, %v1199
          %v1410 = vpack.c.b16 %v1210, %v1200
          %vm1611 = vcmask 523264
          %v1613 = vsel %vm1611, %v356, 0
          %1615 = vmatprep.subr.bf16.mxu0 %v1212
          %1616 = vmatpush1.bf16.msra.mxu0 %v1211
          %1617 = vmatprep.subr.bf16.mxu0 %v1222
          %1618 = vmatpush1.bf16.msra.mxu0 %v1221
          %1619 = vmatprep.subr.bf16.mxu0 %v1232
          %1620 = vmatpush1.bf16.msra.mxu0 %v1231
          %1621 = vmatprep.subr.bf16.mxu0 %v1242
          %1622 = vmatpush1.bf16.msra.mxu0 %v1241
          %1623 = vmatprep.subr.bf16.mxu0 %v1252
          %1624 = vmatpush1.bf16.msra.mxu0 %v1251
          %1625 = vmatprep.subr.bf16.mxu0 %v1262
          %1626 = vmatpush1.bf16.msra.mxu0 %v1261
          %1627 = vmatprep.subr.bf16.mxu0 %v1272
          %1628 = vmatpush1.bf16.msra.mxu0 %v1271
          %1629 = vmatprep.subr.bf16.mxu0 %v1282
          %1630 = vmatpush1.bf16.msra.mxu0 %v1281
          %1631 = vmatprep.subr.bf16.mxu0 %v1292
          %1632 = vmatpush1.bf16.msra.mxu0 %v1291
          %1633 = vmatprep.subr.bf16.mxu0 %v1302
          %1634 = vmatpush1.bf16.msra.mxu0 %v1301
          %1635 = vmatprep.subr.bf16.mxu0 %v1312
          %1636 = vmatpush1.bf16.msra.mxu0 %v1311
          %1637 = vmatprep.subr.bf16.mxu0 %v1322
          %1638 = vmatpush1.bf16.msra.mxu0 %v1321
          %1639 = vmatprep.subr.bf16.mxu0 %v1332
          %1640 = vmatpush1.bf16.msra.mxu0 %v1331
          %1641 = vmatprep.subr.bf16.mxu0 %v1342
          %1642 = vmatpush1.bf16.msra.mxu0 %v1341
          %1643 = vmatprep.subr.bf16.mxu0 %v1352
          %1644 = vmatpush1.bf16.msra.mxu0 %v1351
          %1645 = vmatprep.subr.bf16.mxu0 %v1362
          %1646 = vmatpush1.bf16.msra.mxu0 %v1361
          %1647 = vmatprep.mubr.bf16.mxu0 %v355
          %1648 = vmatmul.mubr.bf16.gmra.mrb[0].mxu0 %v354
          %v1649 = vpop.f32.mrb[0].mxu0
          %v1650 = vadd.f32 %v564, %v1649
          %v1651 = vpop.f32.mrb[0].mxu0
          %v1652 = vadd.f32 %v568, %v1651
          %v1653 = vpop.f32.mrb[0].mxu0
          %v1654 = vpop.f32.mrb[0].mxu0
          %1655 = vdwg.mxu0
          %1656 = vmatprep.subr.bf16.mxu0 %v1372
          %1657 = vmatpush1.bf16.msra.mxu0 %v1371
          %1658 = vmatprep.subr.bf16.mxu0 %v1382
          %1659 = vmatpush1.bf16.msra.mxu0 %v1381
          %1660 = vmatprep.subr.bf16.mxu0 %v1392
          %1661 = vmatpush1.bf16.msra.mxu0 %v1391
          %1662 = vmatprep.subr.bf16.mxu0 %v1402
          %1663 = vmatpush1.bf16.msra.mxu0 %v1401
          %1664 = vmatprep.subr.bf16.mxu0 0
          %1665 = vmatpush1.bf16.msra.mxu0 0
          %1666 = vmatprep.subr.bf16.mxu0 0
          %1667 = vmatpush1.bf16.msra.mxu0 0
          %1668 = vmatprep.subr.bf16.mxu0 0
          %1669 = vmatpush1.bf16.msra.mxu0 0
          %1670 = vmatprep.subr.bf16.mxu0 0
          %1671 = vmatpush1.bf16.msra.mxu0 0
          %1672 = vmatprep.subr.bf16.mxu0 0
          %1673 = vmatpush1.bf16.msra.mxu0 0
          %1674 = vmatprep.subr.bf16.mxu0 0
          %1675 = vmatpush1.bf16.msra.mxu0 0
          %1676 = vmatprep.subr.bf16.mxu0 0
          %1677 = vmatpush1.bf16.msra.mxu0 0
          %1678 = vmatprep.subr.bf16.mxu0 0
          %1679 = vmatpush1.bf16.msra.mxu0 0
          %1680 = vmatprep.subr.bf16.mxu0 0
          %1681 = vmatpush1.bf16.msra.mxu0 0
          %1682 = vmatprep.subr.bf16.mxu0 0
          %1683 = vmatpush1.bf16.msra.mxu0 0
          %1684 = vmatprep.subr.bf16.mxu0 0
          %1685 = vmatpush1.bf16.msra.mxu0 0
          %1686 = vmatprep.subr.bf16.mxu0 0
          %1687 = vmatpush1.bf16.msra.mxu0 0
          %1688 = vmatprep.mubr.bf16.mxu0 0
          %1689 = vmatmul.mubr.bf16.gmra.mrb[0].mxu0 %v1613
          %v1690 = vpop.f32.mrb[0].mxu0
          %v1691 = vadd.f32 %v1650, %v1690
          %v1692 = vpop.f32.mrb[0].mxu0
          %v1693 = vadd.f32 %v1652, %v1692
          %v1694 = vpop.f32.mrb[0].mxu0
          %v1695 = vpop.f32.mrb[0].mxu0
          %1696 = vdwg.mxu0
          %1697 = vmatprep.subr.bf16.mxu0 %v1214
          %1698 = vmatpush1.bf16.msra.mxu0 %v1213
          %1699 = vmatprep.subr.bf16.mxu0 %v1224
          %1700 = vmatpush1.bf16.msra.mxu0 %v1223
          %1701 = vmatprep.subr.bf16.mxu0 %v1234
          %1702 = vmatpush1.bf16.msra.mxu0 %v1233
          %1703 = vmatprep.subr.bf16.mxu0 %v1244
          %1704 = vmatpush1.bf16.msra.mxu0 %v1243
          %1705 = vmatprep.subr.bf16.mxu0 %v1254
          %1706 = vmatpush1.bf16.msra.mxu0 %v1253
          %1707 = vmatprep.subr.bf16.mxu0 %v1264
          %1708 = vmatpush1.bf16.msra.mxu0 %v1263
          %1709 = vmatprep.subr.bf16.mxu0 %v1274
          %1710 = vmatpush1.bf16.msra.mxu0 %v1273
          %1711 = vmatprep.subr.bf16.mxu0 %v1284
          %1712 = vmatpush1.bf16.msra.mxu0 %v1283
          %1713 = vmatprep.subr.bf16.mxu0 %v1294
          %1714 = vmatpush1.bf16.msra.mxu0 %v1293
          %1715 = vmatprep.subr.bf16.mxu0 %v1304
          %1716 = vmatpush1.bf16.msra.mxu0 %v1303
          %1717 = vmatprep.subr.bf16.mxu0 %v1314
          %1718 = vmatpush1.bf16.msra.mxu0 %v1313
          %1719 = vmatprep.subr.bf16.mxu0 %v1324
          %1720 = vmatpush1.bf16.msra.mxu0 %v1323
          %1721 = vmatprep.subr.bf16.mxu0 %v1334
          %1722 = vmatpush1.bf16.msra.mxu0 %v1333
          %1723 = vmatprep.subr.bf16.mxu0 %v1344
          %1724 = vmatpush1.bf16.msra.mxu0 %v1343
          %1725 = vmatprep.subr.bf16.mxu0 %v1354
          %1726 = vmatpush1.bf16.msra.mxu0 %v1353
          %1727 = vmatprep.subr.bf16.mxu0 %v1364
          %1728 = vmatpush1.bf16.msra.mxu0 %v1363
          %1729 = vmatprep.mubr.bf16.mxu0 %v355
          %1730 = vmatmul.mubr.bf16.gmra.mrb[0].mxu0 %v354
          %v1731 = vpop.f32.mrb[0].mxu0
          %v1732 = vadd.f32 %v572, %v1731
          %v1733 = vpop.f32.mrb[0].mxu0
          %v1734 = vadd.f32 %v576, %v1733
          %v1735 = vpop.f32.mrb[0].mxu0
          %v1736 = vpop.f32.mrb[0].mxu0
          %1737 = vdwg.mxu0
          %1738 = vmatprep.subr.bf16.mxu0 %v1374
          %1739 = vmatpush1.bf16.msra.mxu0 %v1373
          %1740 = vmatprep.subr.bf16.mxu0 %v1384
          %1741 = vmatpush1.bf16.msra.mxu0 %v1383
          %1742 = vmatprep.subr.bf16.mxu0 %v1394
          %1743 = vmatpush1.bf16.msra.mxu0 %v1393
          %1744 = vmatprep.subr.bf16.mxu0 %v1404
          %1745 = vmatpush1.bf16.msra.mxu0 %v1403
          %1746 = vmatprep.subr.bf16.mxu0 0
          %1747 = vmatpush1.bf16.msra.mxu0 0
          %1748 = vmatprep.subr.bf16.mxu0 0
          %1749 = vmatpush1.bf16.msra.mxu0 0
          %1750 = vmatprep.subr.bf16.mxu0 0
          %1751 = vmatpush1.bf16.msra.mxu0 0
          %1752 = vmatprep.subr.bf16.mxu0 0
          %1753 = vmatpush1.bf16.msra.mxu0 0
          %1754 = vmatprep.subr.bf16.mxu0 0
          %1755 = vmatpush1.bf16.msra.mxu0 0
          %1756 = vmatprep.subr.bf16.mxu0 0
          %1757 = vmatpush1.bf16.msra.mxu0 0
          %1758 = vmatprep.subr.bf16.mxu0 0
          %1759 = vmatpush1.bf16.msra.mxu0 0
          %1760 = vmatprep.subr.bf16.mxu0 0
          %1761 = vmatpush1.bf16.msra.mxu0 0
          %1762 = vmatprep.subr.bf16.mxu0 0
          %1763 = vmatpush1.bf16.msra.mxu0 0
          %1764 = vmatprep.subr.bf16.mxu0 0
          %1765 = vmatpush1.bf16.msra.mxu0 0
          %1766 = vmatprep.subr.bf16.mxu0 0
          %1767 = vmatpush1.bf16.msra.mxu0 0
          %1768 = vmatprep.subr.bf16.mxu0 0
          %1769 = vmatpush1.bf16.msra.mxu0 0
          %1770 = vmatprep.mubr.bf16.mxu0 0
          %1771 = vmatmul.mubr.bf16.gmra.mrb[0].mxu0 %v1613
          %v1772 = vpop.f32.mrb[0].mxu0
          %v1773 = vadd.f32 %v1732, %v1772
          %v1774 = vpop.f32.mrb[0].mxu0
          %v1775 = vadd.f32 %v1734, %v1774
          %v1776 = vpop.f32.mrb[0].mxu0
          %v1777 = vpop.f32.mrb[0].mxu0
          %1778 = vdwg.mxu0
          %1779 = vmatprep.subr.bf16.mxu0 %v1216
          %1780 = vmatpush1.bf16.msra.mxu0 %v1215
          %1781 = vmatprep.subr.bf16.mxu0 %v1226
          %1782 = vmatpush1.bf16.msra.mxu0 %v1225
          %1783 = vmatprep.subr.bf16.mxu0 %v1236
          %1784 = vmatpush1.bf16.msra.mxu0 %v1235
          %1785 = vmatprep.subr.bf16.mxu0 %v1246
          %1786 = vmatpush1.bf16.msra.mxu0 %v1245
          %1787 = vmatprep.subr.bf16.mxu0 %v1256
          %1788 = vmatpush1.bf16.msra.mxu0 %v1255
          %1789 = vmatprep.subr.bf16.mxu0 %v1266
          %1790 = vmatpush1.bf16.msra.mxu0 %v1265
          %1791 = vmatprep.subr.bf16.mxu0 %v1276
          %1792 = vmatpush1.bf16.msra.mxu0 %v1275
          %1793 = vmatprep.subr.bf16.mxu0 %v1286
          %1794 = vmatpush1.bf16.msra.mxu0 %v1285
          %1795 = vmatprep.subr.bf16.mxu0 %v1296
          %1796 = vmatpush1.bf16.msra.mxu0 %v1295
          %1797 = vmatprep.subr.bf16.mxu0 %v1306
          %1798 = vmatpush1.bf16.msra.mxu0 %v1305
          %1799 = vmatprep.subr.bf16.mxu0 %v1316
          %1800 = vmatpush1.bf16.msra.mxu0 %v1315
          %1801 = vmatprep.subr.bf16.mxu0 %v1326
          %1802 = vmatpush1.bf16.msra.mxu0 %v1325
          %1803 = vmatprep.subr.bf16.mxu0 %v1336
          %1804 = vmatpush1.bf16.msra.mxu0 %v1335
          %1805 = vmatprep.subr.bf16.mxu0 %v1346
          %1806 = vmatpush1.bf16.msra.mxu0 %v1345
          %1807 = vmatprep.subr.bf16.mxu0 %v1356
          %1808 = vmatpush1.bf16.msra.mxu0 %v1355
          %1809 = vmatprep.subr.bf16.mxu0 %v1366
          %1810 = vmatpush1.bf16.msra.mxu0 %v1365
          %1811 = vmatprep.mubr.bf16.mxu0 %v355
          %1812 = vmatmul.mubr.bf16.gmra.mrb[0].mxu0 %v354
          %v1813 = vpop.f32.mrb[0].mxu0
          %v1814 = vadd.f32 %v580, %v1813
          %v1815 = vpop.f32.mrb[0].mxu0
          %v1816 = vadd.f32 %v584, %v1815
          %v1817 = vpop.f32.mrb[0].mxu0
          %v1818 = vpop.f32.mrb[0].mxu0
          %1819 = vdwg.mxu0
          %1820 = vmatprep.subr.bf16.mxu0 %v1376
          %1821 = vmatpush1.bf16.msra.mxu0 %v1375
          %1822 = vmatprep.subr.bf16.mxu0 %v1386
          %1823 = vmatpush1.bf16.msra.mxu0 %v1385
          %1824 = vmatprep.subr.bf16.mxu0 %v1396
          %1825 = vmatpush1.bf16.msra.mxu0 %v1395
          %1826 = vmatprep.subr.bf16.mxu0 %v1406
          %1827 = vmatpush1.bf16.msra.mxu0 %v1405
          %1828 = vmatprep.subr.bf16.mxu0 0
          %1829 = vmatpush1.bf16.msra.mxu0 0
          %1830 = vmatprep.subr.bf16.mxu0 0
          %1831 = vmatpush1.bf16.msra.mxu0 0
          %1832 = vmatprep.subr.bf16.mxu0 0
          %1833 = vmatpush1.bf16.msra.mxu0 0
          %1834 = vmatprep.subr.bf16.mxu0 0
          %1835 = vmatpush1.bf16.msra.mxu0 0
          %1836 = vmatprep.subr.bf16.mxu0 0
          %1837 = vmatpush1.bf16.msra.mxu0 0
          %1838 = vmatprep.subr.bf16.mxu0 0
          %1839 = vmatpush1.bf16.msra.mxu0 0
          %1840 = vmatprep.subr.bf16.mxu0 0
          %1841 = vmatpush1.bf16.msra.mxu0 0
          %1842 = vmatprep.subr.bf16.mxu0 0
          %1843 = vmatpush1.bf16.msra.mxu0 0
          %1844 = vmatprep.subr.bf16.mxu0 0
          %1845 = vmatpush1.bf16.msra.mxu0 0
          %1846 = vmatprep.subr.bf16.mxu0 0
          %1847 = vmatpush1.bf16.msra.mxu0 0
          %1848 = vmatprep.subr.bf16.mxu0 0
          %1849 = vmatpush1.bf16.msra.mxu0 0
          %1850 = vmatprep.subr.bf16.mxu0 0
          %1851 = vmatpush1.bf16.msra.mxu0 0
          %1852 = vmatprep.mubr.bf16.mxu0 0
          %1853 = vmatmul.mubr.bf16.gmra.mrb[0].mxu0 %v1613
          %v1854 = vpop.f32.mrb[0].mxu0
          %v1855 = vadd.f32 %v1814, %v1854
          %v1856 = vpop.f32.mrb[0].mxu0
          %v1857 = vadd.f32 %v1816, %v1856
          %v1858 = vpop.f32.mrb[0].mxu0
          %v1859 = vpop.f32.mrb[0].mxu0
          %1860 = vdwg.mxu0
          %1861 = vmatprep.subr.bf16.mxu0 %v1218
          %1862 = vmatpush1.bf16.msra.mxu0 %v1217
          %1863 = vmatprep.subr.bf16.mxu0 %v1228
          %1864 = vmatpush1.bf16.msra.mxu0 %v1227
          %1865 = vmatprep.subr.bf16.mxu0 %v1238
          %1866 = vmatpush1.bf16.msra.mxu0 %v1237
          %1867 = vmatprep.subr.bf16.mxu0 %v1248
          %1868 = vmatpush1.bf16.msra.mxu0 %v1247
          %1869 = vmatprep.subr.bf16.mxu0 %v1258
          %1870 = vmatpush1.bf16.msra.mxu0 %v1257
          %1871 = vmatprep.subr.bf16.mxu0 %v1268
          %1872 = vmatpush1.bf16.msra.mxu0 %v1267
          %1873 = vmatprep.subr.bf16.mxu0 %v1278
          %1874 = vmatpush1.bf16.msra.mxu0 %v1277
          %1875 = vmatprep.subr.bf16.mxu0 %v1288
          %1876 = vmatpush1.bf16.msra.mxu0 %v1287
          %1877 = vmatprep.subr.bf16.mxu0 %v1298
          %1878 = vmatpush1.bf16.msra.mxu0 %v1297
          %1879 = vmatprep.subr.bf16.mxu0 %v1308
          %1880 = vmatpush1.bf16.msra.mxu0 %v1307
          %1881 = vmatprep.subr.bf16.mxu0 %v1318
          %1882 = vmatpush1.bf16.msra.mxu0 %v1317
          %1883 = vmatprep.subr.bf16.mxu0 %v1328
          %1884 = vmatpush1.bf16.msra.mxu0 %v1327
          %1885 = vmatprep.subr.bf16.mxu0 %v1338
          %1886 = vmatpush1.bf16.msra.mxu0 %v1337
          %1887 = vmatprep.subr.bf16.mxu0 %v1348
          %1888 = vmatpush1.bf16.msra.mxu0 %v1347
          %1889 = vmatprep.subr.bf16.mxu0 %v1358
          %1890 = vmatpush1.bf16.msra.mxu0 %v1357
          %1891 = vmatprep.subr.bf16.mxu0 %v1368
          %1892 = vmatpush1.bf16.msra.mxu0 %v1367
          %1893 = vmatprep.mubr.bf16.mxu0 %v355
          %1894 = vmatmul.mubr.bf16.gmra.mrb[0].mxu0 %v354
          %v1895 = vpop.f32.mrb[0].mxu0
          %v1896 = vadd.f32 %v588, %v1895
          %v1897 = vpop.f32.mrb[0].mxu0
          %v1898 = vadd.f32 %v592, %v1897
          %v1899 = vpop.f32.mrb[0].mxu0
          %v1900 = vpop.f32.mrb[0].mxu0
          %1901 = vdwg.mxu0
          %1902 = vmatprep.subr.bf16.mxu0 %v1378
          %1903 = vmatpush1.bf16.msra.mxu0 %v1377
          %1904 = vmatprep.subr.bf16.mxu0 %v1388
          %1905 = vmatpush1.bf16.msra.mxu0 %v1387
          %1906 = vmatprep.subr.bf16.mxu0 %v1398
          %1907 = vmatpush1.bf16.msra.mxu0 %v1397
          %1908 = vmatprep.subr.bf16.mxu0 %v1408
          %1909 = vmatpush1.bf16.msra.mxu0 %v1407
          %1910 = vmatprep.subr.bf16.mxu0 0
          %1911 = vmatpush1.bf16.msra.mxu0 0
          %1912 = vmatprep.subr.bf16.mxu0 0
          %1913 = vmatpush1.bf16.msra.mxu0 0
          %1914 = vmatprep.subr.bf16.mxu0 0
          %1915 = vmatpush1.bf16.msra.mxu0 0
          %1916 = vmatprep.subr.bf16.mxu0 0
          %1917 = vmatpush1.bf16.msra.mxu0 0
          %1918 = vmatprep.subr.bf16.mxu0 0
          %1919 = vmatpush1.bf16.msra.mxu0 0
          %1920 = vmatprep.subr.bf16.mxu0 0
          %1921 = vmatpush1.bf16.msra.mxu0 0
          %1922 = vmatprep.subr.bf16.mxu0 0
          %1923 = vmatpush1.bf16.msra.mxu0 0
          %1924 = vmatprep.subr.bf16.mxu0 0
          %1925 = vmatpush1.bf16.msra.mxu0 0
          %1926 = vmatprep.subr.bf16.mxu0 0
          %1927 = vmatpush1.bf16.msra.mxu0 0
          %1928 = vmatprep.subr.bf16.mxu0 0
          %1929 = vmatpush1.bf16.msra.mxu0 0
          %1930 = vmatprep.subr.bf16.mxu0 0
          %1931 = vmatpush1.bf16.msra.mxu0 0
          %1932 = vmatprep.subr.bf16.mxu0 0
          %1933 = vmatpush1.bf16.msra.mxu0 0
          %1934 = vmatprep.mubr.bf16.mxu0 0
          %1935 = vmatmul.mubr.bf16.gmra.mrb[0].mxu0 %v1613
          %v1936 = vpop.f32.mrb[0].mxu0
          %v1937 = vadd.f32 %v1896, %v1936
          %v1938 = vpop.f32.mrb[0].mxu0
          %v1939 = vadd.f32 %v1898, %v1938
          %v1940 = vpop.f32.mrb[0].mxu0
          %v1941 = vpop.f32.mrb[0].mxu0
          %1942 = vdwg.mxu0
          %1943 = vmatprep.subr.bf16.mxu0 %v1220
          %1944 = vmatpush1.bf16.msra.mxu0 %v1219
          %1945 = vmatprep.subr.bf16.mxu0 %v1230
          %1946 = vmatpush1.bf16.msra.mxu0 %v1229
          %1947 = vmatprep.subr.bf16.mxu0 %v1240
          %1948 = vmatpush1.bf16.msra.mxu0 %v1239
          %1949 = vmatprep.subr.bf16.mxu0 %v1250
          %1950 = vmatpush1.bf16.msra.mxu0 %v1249
          %1951 = vmatprep.subr.bf16.mxu0 %v1260
          %1952 = vmatpush1.bf16.msra.mxu0 %v1259
          %1953 = vmatprep.subr.bf16.mxu0 %v1270
          %1954 = vmatpush1.bf16.msra.mxu0 %v1269
          %1955 = vmatprep.subr.bf16.mxu0 %v1280
          %1956 = vmatpush1.bf16.msra.mxu0 %v1279
          %1957 = vmatprep.subr.bf16.mxu0 %v1290
          %1958 = vmatpush1.bf16.msra.mxu0 %v1289
          %1959 = vmatprep.subr.bf16.mxu0 %v1300
          %1960 = vmatpush1.bf16.msra.mxu0 %v1299
          %1961 = vmatprep.subr.bf16.mxu0 %v1310
          %1962 = vmatpush1.bf16.msra.mxu0 %v1309
          %1963 = vmatprep.subr.bf16.mxu0 %v1320
          %1964 = vmatpush1.bf16.msra.mxu0 %v1319
          %1965 = vmatprep.subr.bf16.mxu0 %v1330
          %1966 = vmatpush1.bf16.msra.mxu0 %v1329
          %1967 = vmatprep.subr.bf16.mxu0 %v1340
          %1968 = vmatpush1.bf16.msra.mxu0 %v1339
          %1969 = vmatprep.subr.bf16.mxu0 %v1350
          %1970 = vmatpush1.bf16.msra.mxu0 %v1349
          %1971 = vmatprep.subr.bf16.mxu0 %v1360
          %1972 = vmatpush1.bf16.msra.mxu0 %v1359
          %1973 = vmatprep.subr.bf16.mxu0 %v1370
          %1974 = vmatpush1.bf16.msra.mxu0 %v1369
          %1975 = vmatprep.mubr.bf16.mxu0 %v355
          %1976 = vmatmul.mubr.bf16.gmra.mrb[0].mxu0 %v354
          %v1977 = vpop.f32.mrb[0].mxu0
          %v1978 = vadd.f32 %v596, %v1977
          %v1979 = vpop.f32.mrb[0].mxu0
          %v1980 = vadd.f32 %v600, %v1979
          %v1981 = vpop.f32.mrb[0].mxu0
          %v1982 = vpop.f32.mrb[0].mxu0
          %1983 = vdwg.mxu0
          %1984 = vmatprep.subr.bf16.mxu0 %v1380
          %1985 = vmatpush1.bf16.msra.mxu0 %v1379
          %1986 = vmatprep.subr.bf16.mxu0 %v1390
          %1987 = vmatpush1.bf16.msra.mxu0 %v1389
          %1988 = vmatprep.subr.bf16.mxu0 %v1400
          %1989 = vmatpush1.bf16.msra.mxu0 %v1399
          %1990 = vmatprep.subr.bf16.mxu0 %v1410
          %1991 = vmatpush1.bf16.msra.mxu0 %v1409
          %1992 = vmatprep.subr.bf16.mxu0 0
          %1993 = vmatpush1.bf16.msra.mxu0 0
          %1994 = vmatprep.subr.bf16.mxu0 0
          %1995 = vmatpush1.bf16.msra.mxu0 0
          %1996 = vmatprep.subr.bf16.mxu0 0
          %1997 = vmatpush1.bf16.msra.mxu0 0
          %1998 = vmatprep.subr.bf16.mxu0 0
          %1999 = vmatpush1.bf16.msra.mxu0 0
          %2000 = vmatprep.subr.bf16.mxu0 0
          %2001 = vmatpush1.bf16.msra.mxu0 0
          %2002 = vmatprep.subr.bf16.mxu0 0
          %2003 = vmatpush1.bf16.msra.mxu0 0
          %2004 = vmatprep.subr.bf16.mxu0 0
          %2005 = vmatpush1.bf16.msra.mxu0 0
          %2006 = vmatprep.subr.bf16.mxu0 0
          %2007 = vmatpush1.bf16.msra.mxu0 0
          %2008 = vmatprep.subr.bf16.mxu0 0
          %2009 = vmatpush1.bf16.msra.mxu0 0
          %2010 = vmatprep.subr.bf16.mxu0 0
          %2011 = vmatpush1.bf16.msra.mxu0 0
          %2012 = vmatprep.subr.bf16.mxu0 0
          %2013 = vmatpush1.bf16.msra.mxu0 0
          %2014 = vmatprep.subr.bf16.mxu0 0
          %2015 = vmatpush1.bf16.msra.mxu0 0
          %2016 = vmatprep.mubr.bf16.mxu0 0
          %2017 = vmatmul.mubr.bf16.gmra.mrb[0].mxu0 %v1613
          %v2018 = vpop.f32.mrb[0].mxu0
          %v2019 = vadd.f32 %v1978, %v2018
          %v2020 = vpop.f32.mrb[0].mxu0
          %v2021 = vadd.f32 %v1980, %v2020
          %v2022 = vpop.f32.mrb[0].mxu0
          %v2023 = vpop.f32.mrb[0].mxu0
          %2024 = vdwg.mxu0
          %v2025 = vxor.u32 %v1691, 2147483648
          %v2026 = vxor.u32 %v1693, 2147483648
          %v2027 = vxor.u32 %v1773, 2147483648
          %v2028 = vxor.u32 %v1775, 2147483648
          %v2029 = vxor.u32 %v1855, 2147483648
          %v2030 = vxor.u32 %v1857, 2147483648
          %v2031 = vxor.u32 %v1937, 2147483648
          %v2032 = vxor.u32 %v1939, 2147483648
          %v2033 = vxor.u32 %v2019, 2147483648
          %v2034 = vxor.u32 %v2021, 2147483648
          %v2035 = vmul.f32 %v2025, 1.442695
          %v2036 = vpow.pop %v2035
          %v2037 = vmul.f32 %v2026, 1.442695
          %v2038 = vpow.pop %v2037
          %v2039 = vmul.f32 %v2027, 1.442695
          %v2040 = vpow.pop %v2039
          %v2041 = vmul.f32 %v2028, 1.442695
          %v2042 = vpow.pop %v2041
          %v2043 = vmul.f32 %v2029, 1.442695
          %v2044 = vpow.pop %v2043
          %v2045 = vmul.f32 %v2030, 1.442695
          %v2046 = vpow.pop %v2045
          %v2047 = vmul.f32 %v2031, 1.442695
          %v2048 = vpow.pop %v2047
          %v2049 = vmul.f32 %v2032, 1.442695
          %v2050 = vpow.pop %v2049
          %v2051 = vmul.f32 %v2033, 1.442695
          %v2052 = vpow.pop %v2051
          %v2053 = vmul.f32 %v2034, 1.442695
          %v2054 = vpow.pop %v2053
          %v2055 = vadd.f32 %v2036, 1.0
          %v2056 = vadd.f32 %v2038, 1.0
          %v2057 = vadd.f32 %v2040, 1.0
          %v2058 = vadd.f32 %v2042, 1.0
          %v2059 = vadd.f32 %v2044, 1.0
          %v2060 = vadd.f32 %v2046, 1.0
          %v2061 = vadd.f32 %v2048, 1.0
          %v2062 = vadd.f32 %v2050, 1.0
          %v2063 = vadd.f32 %v2052, 1.0
          %v2064 = vadd.f32 %v2054, 1.0
          %v2065 = vrcp.pop %v2055
          %v2066 = vmul.f32 1.0, %v2065
          %v2067 = vrcp.pop %v2056
          %v2068 = vmul.f32 1.0, %v2067
          %v2069 = vrcp.pop %v2057
          %v2070 = vmul.f32 1.0, %v2069
          %v2071 = vrcp.pop %v2058
          %v2072 = vmul.f32 1.0, %v2071
          %v2073 = vrcp.pop %v2059
          %v2074 = vmul.f32 1.0, %v2073
          %v2075 = vrcp.pop %v2060
          %v2076 = vmul.f32 1.0, %v2075
          %v2077 = vrcp.pop %v2061
          %v2078 = vmul.f32 1.0, %v2077
          %v2079 = vrcp.pop %v2062
          %v2080 = vmul.f32 1.0, %v2079
          %v2081 = vrcp.pop %v2063
          %v2082 = vmul.f32 1.0, %v2081
          %v2083 = vrcp.pop %v2064
          %v2084 = vmul.f32 1.0, %v2083
          %v2085 = vmul.f32 %v1691, %v2066
          %v2086 = vmul.f32 %v1693, %v2068
          %v2087 = vmul.f32 %v1773, %v2070
          %v2088 = vmul.f32 %v1775, %v2072
          %v2089 = vmul.f32 %v1855, %v2074
          %v2090 = vmul.f32 %v1857, %v2076
          %v2091 = vmul.f32 %v1937, %v2078
          %v2092 = vmul.f32 %v1939, %v2080
          %v2093 = vmul.f32 %v2019, %v2082
          %v2094 = vmul.f32 %v2021, %v2084
          %v2095 = vpack.c.bf16 %v2085, %v2085
          %v2096 = vpack.c.bf16 %v2086, %v2086
          %v2097 = vpack.c.bf16 %v2087, %v2087
          %v2098 = vpack.c.bf16 %v2088, %v2088
          %v2099 = vpack.c.bf16 %v2089, %v2089
          %v2100 = vpack.c.bf16 %v2090, %v2090
          %v2101 = vpack.c.bf16 %v2091, %v2091
          %v2102 = vpack.c.bf16 %v2092, %v2092
          %v2103 = vpack.c.bf16 %v2093, %v2093
          %v2104 = vpack.c.bf16 %v2094, %v2094
          %v2115 = vunpack.c.l.b16 %v2095
          %v2116 = vunpack.c.l.b16 %v2096
          %v2117 = vunpack.c.l.b16 %v2097
          %v2118 = vunpack.c.l.b16 %v2098
          %v2119 = vunpack.c.l.b16 %v2099
          %v2120 = vunpack.c.l.b16 %v2100
          %v2121 = vunpack.c.l.b16 %v2101
          %v2122 = vunpack.c.l.b16 %v2102
          %v2123 = vunpack.c.l.b16 %v2103
          %v2124 = vunpack.c.l.b16 %v2104
          %v2125 = vpack.c.b16 %v2116, %v2115
          %v2126 = vpack.c.b16 %v2118, %v2117
          %v2127 = vpack.c.b16 %v2120, %v2119
          %v2128 = vpack.c.b16 %v2122, %v2121
          %v2129 = vpack.c.b16 %v2124, %v2123
          %2135 = vst [vmem:[#allocation2] sm:$0xff] %v2125
          %2136 = vst [vmem:[#allocation2 + $0x8] sm:$0xff] %v2126
          %2137 = vst [vmem:[#allocation2 + $0x10] sm:$0xff] %v2127
          %2138 = vst [vmem:[#allocation2 + $0x18] sm:$0xff] %v2128
          %2139 = vst [vmem:[#allocation2 + $0x20] sm:$0xff] %v2129
        $region60: #{time_embedding.1} parent=39 // pred_fallthru
          _
        %v2140 = vld [vmem:[#allocation2] sm:$0xff]
        %v2141 = vld [vmem:[#allocation2 + $0x8] sm:$0xff]
        %v2142 = vld [vmem:[#allocation2 + $0x10] sm:$0xff]
        %v2143 = vld [vmem:[#allocation2 + $0x18] sm:$0xff]
        %v2144 = vld [vmem:[#allocation2 + $0x20] sm:$0xff]
        %v2145 = vld [vmem:[%s287] sm:$0xff]
        %v2146 = vld [vmem:[%s287 + $0x8] sm:$0xff]
        %v2147 = vld [vmem:[%s287 + $0x10] sm:$0xf]
        %v2148 = vld [vmem:[%s287 + $0x14] sm:$0xff]
        %v2149 = vld [vmem:[%s287 + $0x1c] sm:$0xff]
        %v2150 = vld [vmem:[%s287 + $0x24] sm:$0xf]
        %v2151 = vld [vmem:[%s287 + $0x28] sm:$0xff]
        %v2152 = vld [vmem:[%s287 + $0x30] sm:$0xff]
        %v2153 = vld [vmem:[%s287 + $0x38] sm:$0xf]
        %v2154 = vld [vmem:[%s287 + $0x3c] sm:$0xff]
        %v2155 = vld [vmem:[%s287 + $0x44] sm:$0xff]
        %v2156 = vld [vmem:[%s287 + $0x4c] sm:$0xf]
        %v2157 = vld [vmem:[%s287 + $0x50] sm:$0xff]
        %v2158 = vld [vmem:[%s287 + $0x58] sm:$0xff]
        %v2159 = vld [vmem:[%s287 + $0x60] sm:$0xf]
        %v2160 = vld [vmem:[%s287 + $0x64] sm:$0xff]
        %v2161 = vld [vmem:[%s287 + $0x6c] sm:$0xff]
        %v2162 = vld [vmem:[%s287 + $0x74] sm:$0xf]
        %v2163 = vld [vmem:[%s287 + $0x78] sm:$0xff]
        %v2164 = vld [vmem:[%s287 + $0x80] sm:$0xff]
        %v2165 = vld [vmem:[%s287 + $0x88] sm:$0xf]
        %v2166 = vld [vmem:[%s287 + $0x8c] sm:$0xff]
        %v2167 = vld [vmem:[%s287 + $0x94] sm:$0xff]
        %v2168 = vld [vmem:[%s287 + $0x9c] sm:$0xf]
        %v2169 = vld [vmem:[%s287 + $0xa0] sm:$0xff]
        %v2170 = vld [vmem:[%s287 + $0xa8] sm:$0xff]
        %v2171 = vld [vmem:[%s287 + $0xb0] sm:$0xf]
        %v2172 = vld [vmem:[%s287 + $0xb4] sm:$0xff]
        %v2173 = vld [vmem:[%s287 + $0xbc] sm:$0xff]
        %v2174 = vld [vmem:[%s287 + $0xc4] sm:$0xf]
        %v2175 = vld [vmem:[%s287 + $0xc8] sm:$0xff]
        %v2176 = vld [vmem:[%s287 + $0xd0] sm:$0xff]
        %v2177 = vld [vmem:[%s287 + $0xd8] sm:$0xf]
        %v2178 = vld [vmem:[%s287 + $0xdc] sm:$0xff]
        %v2179 = vld [vmem:[%s287 + $0xe4] sm:$0xff]
        %v2180 = vld [vmem:[%s287 + $0xec] sm:$0xf]
        %v2181 = vld [vmem:[%s287 + $0xf0] sm:$0xff]
        %v2182 = vld [vmem:[%s287 + $0xf8] sm:$0xff]
        %v2183 = vld [vmem:[%s287 + $0x100] sm:$0xf]
        %v2184 = vld [vmem:[%s287 + $0x104] sm:$0xff]
        %v2185 = vld [vmem:[%s287 + $0x10c] sm:$0xff]
        %v2186 = vld [vmem:[%s287 + $0x114] sm:$0xf]
        %v2187 = vld [vmem:[%s287 + $0x118] sm:$0xff]
        %v2188 = vld [vmem:[%s287 + $0x120] sm:$0xff]
        %v2189 = vld [vmem:[%s287 + $0x128] sm:$0xf]
        %v2190 = vld [vmem:[%s287 + $0x12c] sm:$0xff]
        %v2191 = vld [vmem:[%s287 + $0x134] sm:$0xff]
        %v2192 = vld [vmem:[%s287 + $0x13c] sm:$0xf]
        %v2193 = vld [vmem:[%s287 + $0x140] sm:$0xff]
        %v2194 = vld [vmem:[%s287 + $0x148] sm:$0xff]
        %v2195 = vld [vmem:[%s287 + $0x150] sm:$0xf]
        %v2196 = vld [vmem:[%s287 + $0x154] sm:$0xff]
        %v2197 = vld [vmem:[%s287 + $0x15c] sm:$0xff]
        %v2198 = vld [vmem:[%s287 + $0x164] sm:$0xf]
        %v2199 = vld [vmem:[%s287 + $0x168] sm:$0xff]
        %v2200 = vld [vmem:[%s287 + $0x170] sm:$0xff]
        %v2201 = vld [vmem:[%s287 + $0x178] sm:$0xf]
        %v2202 = vld [vmem:[%s287 + $0x17c] sm:$0xff]
        %v2203 = vld [vmem:[%s287 + $0x184] sm:$0xff]
        %v2204 = vld [vmem:[%s287 + $0x18c] sm:$0xf]
        %v2205 = vld [vmem:[%s287 + $0x190] sm:$0xff]
        %v2206 = vld [vmem:[%s287 + $0x198] sm:$0xff]
        %v2207 = vld [vmem:[%s287 + $0x1a0] sm:$0xf]
        %v2208 = vld [vmem:[%s287 + $0x1a4] sm:$0xff]
        %v2209 = vld [vmem:[%s287 + $0x1ac] sm:$0xff]
        %v2210 = vld [vmem:[%s287 + $0x1b4] sm:$0xf]
        %v2211 = vld [vmem:[%s287 + $0x1b8] sm:$0xff]
        %v2212 = vld [vmem:[%s287 + $0x1c0] sm:$0xff]
        %v2213 = vld [vmem:[%s287 + $0x1c8] sm:$0xf]
        %v2214 = vld [vmem:[%s287 + $0x1cc] sm:$0xff]
        %v2215 = vld [vmem:[%s287 + $0x1d4] sm:$0xff]
        %v2216 = vld [vmem:[%s287 + $0x1dc] sm:$0xf]
        %v2217 = vld [vmem:[%s287 + $0x1e0] sm:$0xff]
        %v2218 = vld [vmem:[%s287 + $0x1e8] sm:$0xff]
        %v2219 = vld [vmem:[%s287 + $0x1f0] sm:$0xf]
        %v2220 = vld [vmem:[%s287 + $0x1f4] sm:$0xff]
        %v2221 = vld [vmem:[%s287 + $0x1fc] sm:$0xff]
        %v2222 = vld [vmem:[%s287 + $0x204] sm:$0xf]
        %v2223 = vld [vmem:[%s287 + $0x208] sm:$0xff]
        %v2224 = vld [vmem:[%s287 + $0x210] sm:$0xff]
        %v2225 = vld [vmem:[%s287 + $0x218] sm:$0xf]
        %v2226 = vld [vmem:[%s287 + $0x21c] sm:$0xff]
        %v2227 = vld [vmem:[%s287 + $0x224] sm:$0xff]
        %v2228 = vld [vmem:[%s287 + $0x22c] sm:$0xf]
        %v2229 = vld [vmem:[%s287 + $0x230] sm:$0xff]
        %v2230 = vld [vmem:[%s287 + $0x238] sm:$0xff]
        %v2231 = vld [vmem:[%s287 + $0x240] sm:$0xf]
        %v2232 = vld [vmem:[%s287 + $0x244] sm:$0xff]
        %v2233 = vld [vmem:[%s287 + $0x24c] sm:$0xff]
        %v2234 = vld [vmem:[%s287 + $0x254] sm:$0xf]
        %v2235 = vld [vmem:[%s287 + $0x258] sm:$0xff]
        %v2236 = vld [vmem:[%s287 + $0x260] sm:$0xff]
        %v2237 = vld [vmem:[%s287 + $0x268] sm:$0xf]
        %v2238 = vld [vmem:[%s287 + $0x26c] sm:$0xff]
        %v2239 = vld [vmem:[%s287 + $0x274] sm:$0xff]
        %v2240 = vld [vmem:[%s287 + $0x27c] sm:$0xf]
        %v2241 = vld [vmem:[%s287 + $0x280] sm:$0xff]
        %v2242 = vld [vmem:[%s287 + $0x288] sm:$0xff]
        %v2243 = vld [vmem:[%s287 + $0x290] sm:$0xf]
        %v2244 = vld [vmem:[%s287 + $0x294] sm:$0xff]
        %v2245 = vld [vmem:[%s287 + $0x29c] sm:$0xff]
        %v2246 = vld [vmem:[%s287 + $0x2a4] sm:$0xf]
        %v2247 = vld [vmem:[%s287 + $0x2a8] sm:$0xff]
        %v2248 = vld [vmem:[%s287 + $0x2b0] sm:$0xff]
        %v2249 = vld [vmem:[%s287 + $0x2b8] sm:$0xf]
        %v2250 = vld [vmem:[%s287 + $0x2bc] sm:$0xff]
        %v2251 = vld [vmem:[%s287 + $0x2c4] sm:$0xff]
        %v2252 = vld [vmem:[%s287 + $0x2cc] sm:$0xf]
        %v2253 = vld [vmem:[%s287 + $0x2d0] sm:$0xff]
        %v2254 = vld [vmem:[%s287 + $0x2d8] sm:$0xff]
        %v2255 = vld [vmem:[%s287 + $0x2e0] sm:$0xf]
        %v2256 = vld [vmem:[%s287 + $0x2e4] sm:$0xff]
        %v2257 = vld [vmem:[%s287 + $0x2ec] sm:$0xff]
        %v2258 = vld [vmem:[%s287 + $0x2f4] sm:$0xf]
        %v2259 = vld [vmem:[%s287 + $0x2f8] sm:$0xff]
        %v2260 = vld [vmem:[%s287 + $0x300] sm:$0xff]
        %v2261 = vld [vmem:[%s287 + $0x308] sm:$0xf]
        %v2262 = vld [vmem:[%s287 + $0x30c] sm:$0xff]
        %v2263 = vld [vmem:[%s287 + $0x314] sm:$0xff]
        %v2264 = vld [vmem:[%s287 + $0x31c] sm:$0xf]
        %v2265 = vld [vmem:[%s287 + $0x320] sm:$0xff]
        %v2266 = vld [vmem:[%s287 + $0x328] sm:$0xff]
        %v2267 = vld [vmem:[%s287 + $0x330] sm:$0xf]
        %v2268 = vld [vmem:[%s287 + $0x334] sm:$0xff]
        %v2269 = vld [vmem:[%s287 + $0x33c] sm:$0xff]
        %v2270 = vld [vmem:[%s287 + $0x344] sm:$0xf]
        %v2271 = vld [vmem:[%s287 + $0x348] sm:$0xff]
        %v2272 = vld [vmem:[%s287 + $0x350] sm:$0xff]
        %v2273 = vld [vmem:[%s287 + $0x358] sm:$0xf]
        %v2274 = vld [vmem:[%s287 + $0x35c] sm:$0xff]
        %v2275 = vld [vmem:[%s287 + $0x364] sm:$0xff]
        %v2276 = vld [vmem:[%s287 + $0x36c] sm:$0xf]
        %v2277 = vld [vmem:[%s287 + $0x370] sm:$0xff]
        %v2278 = vld [vmem:[%s287 + $0x378] sm:$0xff]
        %v2279 = vld [vmem:[%s287 + $0x380] sm:$0xf]
        %v2280 = vld [vmem:[%s287 + $0x384] sm:$0xff]
        %v2281 = vld [vmem:[%s287 + $0x38c] sm:$0xff]
        %v2282 = vld [vmem:[%s287 + $0x394] sm:$0xf]
        %v2283 = vld [vmem:[%s287 + $0x398] sm:$0xff]
        %v2284 = vld [vmem:[%s287 + $0x3a0] sm:$0xff]
        %v2285 = vld [vmem:[%s287 + $0x3a8] sm:$0xf]
        %v2286 = vld [vmem:[%s287 + $0x3ac] sm:$0xff]
        %v2287 = vld [vmem:[%s287 + $0x3b4] sm:$0xff]
        %v2288 = vld [vmem:[%s287 + $0x3bc] sm:$0xf]
        %v2289 = vld [vmem:[%s287 + $0x3c0] sm:$0xff]
        %v2290 = vld [vmem:[%s287 + $0x3c8] sm:$0xff]
        %v2291 = vld [vmem:[%s287 + $0x3d0] sm:$0xf]
        %v2292 = vld [vmem:[%s287 + $0x3d4] sm:$0xff]
        %v2293 = vld [vmem:[%s287 + $0x3dc] sm:$0xff]
        %v2294 = vld [vmem:[%s287 + $0x3e4] sm:$0xf]
        %v2295 = vld [vmem:[%s287 + $0x3e8] sm:$0xff]
        %v2296 = vld [vmem:[%s287 + $0x3f0] sm:$0xff]
        %v2297 = vld [vmem:[%s287 + $0x3f8] sm:$0xf]
        %v2298 = vld [vmem:[%s287 + $0x3fc] sm:$0xff]
        %v2299 = vld [vmem:[%s287 + $0x404] sm:$0xff]
        %v2300 = vld [vmem:[%s287 + $0x40c] sm:$0xf]
        %v2301 = vld [vmem:[%s287 + $0x410] sm:$0xff]
        %v2302 = vld [vmem:[%s287 + $0x418] sm:$0xff]
        %v2303 = vld [vmem:[%s287 + $0x420] sm:$0xf]
        %v2304 = vld [vmem:[%s287 + $0x424] sm:$0xff]
        %v2305 = vld [vmem:[%s287 + $0x42c] sm:$0xff]
        %v2306 = vld [vmem:[%s287 + $0x434] sm:$0xf]
        %v2307 = vld [vmem:[%s287 + $0x438] sm:$0xff]
        %v2308 = vld [vmem:[%s287 + $0x440] sm:$0xff]
        %v2309 = vld [vmem:[%s287 + $0x448] sm:$0xf]
        %v2310 = vld [vmem:[%s287 + $0x44c] sm:$0xff]
        %v2311 = vld [vmem:[%s287 + $0x454] sm:$0xff]
        %v2312 = vld [vmem:[%s287 + $0x45c] sm:$0xf]
        %v2313 = vld [vmem:[%s287 + $0x460] sm:$0xff]
        %v2314 = vld [vmem:[%s287 + $0x468] sm:$0xff]
        %v2315 = vld [vmem:[%s287 + $0x470] sm:$0xf]
        %v2316 = vld [vmem:[%s287 + $0x474] sm:$0xff]
        %v2317 = vld [vmem:[%s287 + $0x47c] sm:$0xff]
        %v2318 = vld [vmem:[%s287 + $0x484] sm:$0xf]
        %v2319 = vld [vmem:[%s287 + $0x488] sm:$0xff]
        %v2320 = vld [vmem:[%s287 + $0x490] sm:$0xff]
        %v2321 = vld [vmem:[%s287 + $0x498] sm:$0xf]
        %v2322 = vld [vmem:[%s287 + $0x49c] sm:$0xff]
        %v2323 = vld [vmem:[%s287 + $0x4a4] sm:$0xff]
        %v2324 = vld [vmem:[%s287 + $0x4ac] sm:$0xf]
        %v2325 = vld [vmem:[%s287 + $0x4b0] sm:$0xff]
        %v2326 = vld [vmem:[%s287 + $0x4b8] sm:$0xff]
        %v2327 = vld [vmem:[%s287 + $0x4c0] sm:$0xf]
        %v2328 = vld [vmem:[%s287 + $0x4c4] sm:$0xff]
        %v2329 = vld [vmem:[%s287 + $0x4cc] sm:$0xff]
        %v2330 = vld [vmem:[%s287 + $0x4d4] sm:$0xf]
        %v2331 = vld [vmem:[%s287 + $0x4d8] sm:$0xff]
        %v2332 = vld [vmem:[%s287 + $0x4e0] sm:$0xff]
        %v2333 = vld [vmem:[%s287 + $0x4e8] sm:$0xf]
        %v2334 = vld [vmem:[%s287 + $0x4ec] sm:$0xff]
        %v2335 = vld [vmem:[%s287 + $0x4f4] sm:$0xff]
        %v2336 = vld [vmem:[%s287 + $0x4fc] sm:$0xf]
        %v2337 = vld [vmem:[%s287 + $0x500] sm:$0xff]
        %v2338 = vld [vmem:[%s287 + $0x508] sm:$0xff]
        %v2339 = vld [vmem:[%s287 + $0x510] sm:$0xf]
        %v2340 = vld [vmem:[%s287 + $0x514] sm:$0xff]
        %v2341 = vld [vmem:[%s287 + $0x51c] sm:$0xff]
        %v2342 = vld [vmem:[%s287 + $0x524] sm:$0xf]
        %v2343 = vld [vmem:[%s287 + $0x528] sm:$0xff]
        %v2344 = vld [vmem:[%s287 + $0x530] sm:$0xff]
        %v2345 = vld [vmem:[%s287 + $0x538] sm:$0xf]
        %v2346 = vld [vmem:[%s287 + $0x53c] sm:$0xff]
        %v2347 = vld [vmem:[%s287 + $0x544] sm:$0xff]
        %v2348 = vld [vmem:[%s287 + $0x54c] sm:$0xf]
        %v2349 = vld [vmem:[%s287 + $0x550] sm:$0xff]
        %v2350 = vld [vmem:[%s287 + $0x558] sm:$0xff]
        %v2351 = vld [vmem:[%s287 + $0x560] sm:$0xf]
        %v2352 = vld [vmem:[%s287 + $0x564] sm:$0xff]
        %v2353 = vld [vmem:[%s287 + $0x56c] sm:$0xff]
        %v2354 = vld [vmem:[%s287 + $0x574] sm:$0xf]
        %v2355 = vld [vmem:[%s287 + $0x578] sm:$0xff]
        %v2356 = vld [vmem:[%s287 + $0x580] sm:$0xff]
        %v2357 = vld [vmem:[%s287 + $0x588] sm:$0xf]
        %v2358 = vld [vmem:[%s287 + $0x58c] sm:$0xff]
        %v2359 = vld [vmem:[%s287 + $0x594] sm:$0xff]
        %v2360 = vld [vmem:[%s287 + $0x59c] sm:$0xf]
        %v2361 = vld [vmem:[%s287 + $0x5a0] sm:$0xff]
        %v2362 = vld [vmem:[%s287 + $0x5a8] sm:$0xff]
        %v2363 = vld [vmem:[%s287 + $0x5b0] sm:$0xf]
        %v2364 = vld [vmem:[%s287 + $0x5b4] sm:$0xff]
        %v2365 = vld [vmem:[%s287 + $0x5bc] sm:$0xff]
        %v2366 = vld [vmem:[%s287 + $0x5c4] sm:$0xf]
        %v2367 = vld [vmem:[%s287 + $0x5c8] sm:$0xff]
        %v2368 = vld [vmem:[%s287 + $0x5d0] sm:$0xff]
        %v2369 = vld [vmem:[%s287 + $0x5d8] sm:$0xf]
        %v2370 = vld [vmem:[%s287 + $0x5dc] sm:$0xff]
        %v2371 = vld [vmem:[%s287 + $0x5e4] sm:$0xff]
        %v2372 = vld [vmem:[%s287 + $0x5ec] sm:$0xf]
        %v2373 = vld [vmem:[%s287 + $0x5f0] sm:$0xff]
        %v2374 = vld [vmem:[%s287 + $0x5f8] sm:$0xff]
        %v2375 = vld [vmem:[%s287 + $0x600] sm:$0xf]
        %v2376 = vld [vmem:[%s287 + $0x604] sm:$0xff]
        %v2377 = vld [vmem:[%s287 + $0x60c] sm:$0xff]
        %v2378 = vld [vmem:[%s287 + $0x614] sm:$0xf]
        %v2379 = vld [vmem:[%s287 + $0x618] sm:$0xff]
        %v2380 = vld [vmem:[%s287 + $0x620] sm:$0xff]
        %v2381 = vld [vmem:[%s287 + $0x628] sm:$0xf]
        %v2382 = vld [vmem:[%s287 + $0x62c] sm:$0xff]
        %v2383 = vld [vmem:[%s287 + $0x634] sm:$0xff]
        %v2384 = vld [vmem:[%s287 + $0x63c] sm:$0xf]
        %v2385 = vld [vmem:[%s287 + $0x640] sm:$0xff]
        %v2386 = vld [vmem:[%s287 + $0x648] sm:$0xff]
        %v2387 = vld [vmem:[%s287 + $0x650] sm:$0xf]
        %v2388 = vld [vmem:[%s287 + $0x654] sm:$0xff]
        %v2389 = vld [vmem:[%s287 + $0x65c] sm:$0xff]
        %v2390 = vld [vmem:[%s287 + $0x664] sm:$0xf]
        %v2391 = vld [vmem:[%s287 + $0x668] sm:$0xff]
        %v2392 = vld [vmem:[%s287 + $0x670] sm:$0xff]
        %v2393 = vld [vmem:[%s287 + $0x678] sm:$0xf]
        %v2394 = vld [vmem:[%s287 + $0x67c] sm:$0xff]
        %v2395 = vld [vmem:[%s287 + $0x684] sm:$0xff]
        %v2396 = vld [vmem:[%s287 + $0x68c] sm:$0xf]
        %v2397 = vld [vmem:[%s287 + $0x690] sm:$0xff]
        %v2398 = vld [vmem:[%s287 + $0x698] sm:$0xff]
        %v2399 = vld [vmem:[%s287 + $0x6a0] sm:$0xf]
        %v2400 = vld [vmem:[%s287 + $0x6a4] sm:$0xff]
        %v2401 = vld [vmem:[%s287 + $0x6ac] sm:$0xff]
        %v2402 = vld [vmem:[%s287 + $0x6b4] sm:$0xf]
        %v2403 = vld [vmem:[%s287 + $0x6b8] sm:$0xff]
        %v2404 = vld [vmem:[%s287 + $0x6c0] sm:$0xff]
        %v2405 = vld [vmem:[%s287 + $0x6c8] sm:$0xf]
        %v2406 = vld [vmem:[%s287 + $0x6cc] sm:$0xff]
        %v2407 = vld [vmem:[%s287 + $0x6d4] sm:$0xff]
        %v2408 = vld [vmem:[%s287 + $0x6dc] sm:$0xf]
        %v2409 = vld [vmem:[%s287 + $0x6e0] sm:$0xff]
        %v2410 = vld [vmem:[%s287 + $0x6e8] sm:$0xff]
        %v2411 = vld [vmem:[%s287 + $0x6f0] sm:$0xf]
        %v2412 = vld [vmem:[%s287 + $0x6f4] sm:$0xff]
        %v2413 = vld [vmem:[%s287 + $0x6fc] sm:$0xff]
        %v2414 = vld [vmem:[%s287 + $0x704] sm:$0xf]
        %v2415 = vld [vmem:[%s287 + $0x708] sm:$0xff]
        %v2416 = vld [vmem:[%s287 + $0x710] sm:$0xff]
        %v2417 = vld [vmem:[%s287 + $0x718] sm:$0xf]
        %v2418 = vld [vmem:[%s287 + $0x71c] sm:$0xff]
        %v2419 = vld [vmem:[%s287 + $0x724] sm:$0xff]
        %v2420 = vld [vmem:[%s287 + $0x72c] sm:$0xf]
        %v2421 = vld [vmem:[%s287 + $0x730] sm:$0xff]
        %v2422 = vld [vmem:[%s287 + $0x738] sm:$0xff]
        %v2423 = vld [vmem:[%s287 + $0x740] sm:$0xf]
        %v2424 = vld [vmem:[%s287 + $0x744] sm:$0xff]
        %v2425 = vld [vmem:[%s287 + $0x74c] sm:$0xff]
        %v2426 = vld [vmem:[%s287 + $0x754] sm:$0xf]
        %v2427 = vld [vmem:[%s287 + $0x758] sm:$0xff]
        %v2428 = vld [vmem:[%s287 + $0x760] sm:$0xff]
        %v2429 = vld [vmem:[%s287 + $0x768] sm:$0xf]
        %v2430 = vld [vmem:[%s287 + $0x76c] sm:$0xff]
        %v2431 = vld [vmem:[%s287 + $0x774] sm:$0xff]
        %v2432 = vld [vmem:[%s287 + $0x77c] sm:$0xf]
        %v2433 = vld [vmem:[%s287 + $0x780] sm:$0xff]
        %v2434 = vld [vmem:[%s287 + $0x788] sm:$0xff]
        %v2435 = vld [vmem:[%s287 + $0x790] sm:$0xf]
        %v2436 = vld [vmem:[%s287 + $0x794] sm:$0xff]
        %v2437 = vld [vmem:[%s287 + $0x79c] sm:$0xff]
        %v2438 = vld [vmem:[%s287 + $0x7a4] sm:$0xf]
        %v2439 = vld [vmem:[%s287 + $0x7a8] sm:$0xff]
        %v2440 = vld [vmem:[%s287 + $0x7b0] sm:$0xff]
        %v2441 = vld [vmem:[%s287 + $0x7b8] sm:$0xf]
        %v2442 = vld [vmem:[%s287 + $0x7bc] sm:$0xff]
        %v2443 = vld [vmem:[%s287 + $0x7c4] sm:$0xff]
        %v2444 = vld [vmem:[%s287 + $0x7cc] sm:$0xf]
        %v2445 = vld [vmem:[%s287 + $0x7d0] sm:$0xff]
        %v2446 = vld [vmem:[%s287 + $0x7d8] sm:$0xff]
        %v2447 = vld [vmem:[%s287 + $0x7e0] sm:$0xf]
        %v2448 = vld [vmem:[%s287 + $0x7e4] sm:$0xff]
        %v2449 = vld [vmem:[%s287 + $0x7ec] sm:$0xff]
        %v2450 = vld [vmem:[%s287 + $0x7f4] sm:$0xf]
        %v2451 = vld [vmem:[%s287 + $0x7f8] sm:$0xff]
        %v2452 = vld [vmem:[%s287 + $0x800] sm:$0xff]
        %v2453 = vld [vmem:[%s287 + $0x808] sm:$0xf]
        %v2454 = vld [vmem:[%s287 + $0x80c] sm:$0xff]
        %v2455 = vld [vmem:[%s287 + $0x814] sm:$0xff]
        %v2456 = vld [vmem:[%s287 + $0x81c] sm:$0xf]
        %v2457 = vld [vmem:[%s287 + $0x820] sm:$0xff]
        %v2458 = vld [vmem:[%s287 + $0x828] sm:$0xff]
        %v2459 = vld [vmem:[%s287 + $0x830] sm:$0xf]
        %v2460 = vld [vmem:[%s287 + $0x834] sm:$0xff]
        %v2461 = vld [vmem:[%s287 + $0x83c] sm:$0xff]
        %v2462 = vld [vmem:[%s287 + $0x844] sm:$0xf]
        %v2463 = vld [vmem:[%s287 + $0x848] sm:$0xff]
        %v2464 = vld [vmem:[%s287 + $0x850] sm:$0xff]
        %v2465 = vld [vmem:[%s287 + $0x858] sm:$0xf]
        %v2466 = vld [vmem:[%s287 + $0x85c] sm:$0xff]
        %v2467 = vld [vmem:[%s287 + $0x864] sm:$0xff]
        %v2468 = vld [vmem:[%s287 + $0x86c] sm:$0xf]
        %v2469 = vld [vmem:[%s287 + $0x870] sm:$0xff]
        %v2470 = vld [vmem:[%s287 + $0x878] sm:$0xff]
        %v2471 = vld [vmem:[%s287 + $0x880] sm:$0xf]
        %v2472 = vld [vmem:[%s287 + $0x884] sm:$0xff]
        %v2473 = vld [vmem:[%s287 + $0x88c] sm:$0xff]
        %v2474 = vld [vmem:[%s287 + $0x894] sm:$0xf]
        %v2475 = vld [vmem:[%s287 + $0x898] sm:$0xff]
        %v2476 = vld [vmem:[%s287 + $0x8a0] sm:$0xff]
        %v2477 = vld [vmem:[%s287 + $0x8a8] sm:$0xf]
        %v2478 = vld [vmem:[%s287 + $0x8ac] sm:$0xff]
        %v2479 = vld [vmem:[%s287 + $0x8b4] sm:$0xff]
        %v2480 = vld [vmem:[%s287 + $0x8bc] sm:$0xf]
        %v2481 = vld [vmem:[%s287 + $0x8c0] sm:$0xff]
        %v2482 = vld [vmem:[%s287 + $0x8c8] sm:$0xff]
        %v2483 = vld [vmem:[%s287 + $0x8d0] sm:$0xf]
        %v2484 = vld [vmem:[%s287 + $0x8d4] sm:$0xff]
        %v2485 = vld [vmem:[%s287 + $0x8dc] sm:$0xff]
        %v2486 = vld [vmem:[%s287 + $0x8e4] sm:$0xf]
        %v2487 = vld [vmem:[%s287 + $0x8e8] sm:$0xff]
        %v2488 = vld [vmem:[%s287 + $0x8f0] sm:$0xff]
        %v2489 = vld [vmem:[%s287 + $0x8f8] sm:$0xf]
        %v2490 = vld [vmem:[%s287 + $0x8fc] sm:$0xff]
        %v2491 = vld [vmem:[%s287 + $0x904] sm:$0xff]
        %v2492 = vld [vmem:[%s287 + $0x90c] sm:$0xf]
        %v2493 = vld [vmem:[%s287 + $0x910] sm:$0xff]
        %v2494 = vld [vmem:[%s287 + $0x918] sm:$0xff]
        %v2495 = vld [vmem:[%s287 + $0x920] sm:$0xf]
        %v2496 = vld [vmem:[%s287 + $0x924] sm:$0xff]
        %v2497 = vld [vmem:[%s287 + $0x92c] sm:$0xff]
        %v2498 = vld [vmem:[%s287 + $0x934] sm:$0xf]
        %v2499 = vld [vmem:[%s287 + $0x938] sm:$0xff]
        %v2500 = vld [vmem:[%s287 + $0x940] sm:$0xff]
        %v2501 = vld [vmem:[%s287 + $0x948] sm:$0xf]
        %v2502 = vld [vmem:[%s287 + $0x94c] sm:$0xff]
        %v2503 = vld [vmem:[%s287 + $0x954] sm:$0xff]
        %v2504 = vld [vmem:[%s287 + $0x95c] sm:$0xf]
        %v2505 = vld [vmem:[%s287 + $0x960] sm:$0xff]
        %v2506 = vld [vmem:[%s287 + $0x968] sm:$0xff]
        %v2507 = vld [vmem:[%s287 + $0x970] sm:$0xf]
        %v2508 = vld [vmem:[%s287 + $0x974] sm:$0xff]
        %v2509 = vld [vmem:[%s287 + $0x97c] sm:$0xff]
        %v2510 = vld [vmem:[%s287 + $0x984] sm:$0xf]
        %v2511 = vld [vmem:[%s287 + $0x988] sm:$0xff]
        %v2512 = vld [vmem:[%s287 + $0x990] sm:$0xff]
        %v2513 = vld [vmem:[%s287 + $0x998] sm:$0xf]
        %v2514 = vld [vmem:[%s287 + $0x99c] sm:$0xff]
        %v2515 = vld [vmem:[%s287 + $0x9a4] sm:$0xff]
        %v2516 = vld [vmem:[%s287 + $0x9ac] sm:$0xf]
        %v2517 = vld [vmem:[%s287 + $0x9b0] sm:$0xff]
        %v2518 = vld [vmem:[%s287 + $0x9b8] sm:$0xff]
        %v2519 = vld [vmem:[%s287 + $0x9c0] sm:$0xf]
        %v2520 = vld [vmem:[%s287 + $0x9c4] sm:$0xff]
        %v2521 = vld [vmem:[%s287 + $0x9cc] sm:$0xff]
        %v2522 = vld [vmem:[%s287 + $0x9d4] sm:$0xf]
        %v2523 = vld [vmem:[%s287 + $0x9d8] sm:$0xff]
        %v2524 = vld [vmem:[%s287 + $0x9e0] sm:$0xff]
        %v2525 = vld [vmem:[%s287 + $0x9e8] sm:$0xf]
        %v2526 = vld [vmem:[%s287 + $0x9ec] sm:$0xff]
        %v2527 = vld [vmem:[%s287 + $0x9f4] sm:$0xff]
        %v2528 = vld [vmem:[%s287 + $0x9fc] sm:$0xf]
        %v2529 = vld [vmem:[%s287 + $0xa00] sm:$0xff]
        %v2530 = vld [vmem:[%s287 + $0xa08] sm:$0xff]
        %v2531 = vld [vmem:[%s287 + $0xa10] sm:$0xf]
        %v2532 = vld [vmem:[%s287 + $0xa14] sm:$0xff]
        %v2533 = vld [vmem:[%s287 + $0xa1c] sm:$0xff]
        %v2534 = vld [vmem:[%s287 + $0xa24] sm:$0xf]
        %v2535 = vld [vmem:[%s287 + $0xa28] sm:$0xff]
        %v2536 = vld [vmem:[%s287 + $0xa30] sm:$0xff]
        %v2537 = vld [vmem:[%s287 + $0xa38] sm:$0xf]
        %v2538 = vld [vmem:[%s287 + $0xa3c] sm:$0xff]
        %v2539 = vld [vmem:[%s287 + $0xa44] sm:$0xff]
        %v2540 = vld [vmem:[%s287 + $0xa4c] sm:$0xf]
        %v2541 = vld [vmem:[%s287 + $0xa50] sm:$0xff]
        %v2542 = vld [vmem:[%s287 + $0xa58] sm:$0xff]
        %v2543 = vld [vmem:[%s287 + $0xa60] sm:$0xf]
        %v2544 = vld [vmem:[%s287 + $0xa64] sm:$0xff]
        %v2545 = vld [vmem:[%s287 + $0xa6c] sm:$0xff]
        %v2546 = vld [vmem:[%s287 + $0xa74] sm:$0xf]
        %v2547 = vld [vmem:[%s287 + $0xa78] sm:$0xff]
        %v2548 = vld [vmem:[%s287 + $0xa80] sm:$0xff]
        %v2549 = vld [vmem:[%s287 + $0xa88] sm:$0xf]
        %v2550 = vld [vmem:[%s287 + $0xa8c] sm:$0xff]
        %v2551 = vld [vmem:[%s287 + $0xa94] sm:$0xff]
        %v2552 = vld [vmem:[%s287 + $0xa9c] sm:$0xf]
        %v2553 = vld [vmem:[%s287 + $0xaa0] sm:$0xff]
        %v2554 = vld [vmem:[%s287 + $0xaa8] sm:$0xff]
        %v2555 = vld [vmem:[%s287 + $0xab0] sm:$0xf]
        %v2556 = vld [vmem:[%s287 + $0xab4] sm:$0xff]
        %v2557 = vld [vmem:[%s287 + $0xabc] sm:$0xff]
        %v2558 = vld [vmem:[%s287 + $0xac4] sm:$0xf]
        %v2559 = vld [vmem:[%s287 + $0xac8] sm:$0xff]
        %v2560 = vld [vmem:[%s287 + $0xad0] sm:$0xff]
        %v2561 = vld [vmem:[%s287 + $0xad8] sm:$0xf]
        %v2562 = vld [vmem:[%s287 + $0xadc] sm:$0xff]
        %v2563 = vld [vmem:[%s287 + $0xae4] sm:$0xff]
        %v2564 = vld [vmem:[%s287 + $0xaec] sm:$0xf]
        %v2565 = vld [vmem:[%s287 + $0xaf0] sm:$0xff]
        %v2566 = vld [vmem:[%s287 + $0xaf8] sm:$0xff]
        %v2567 = vld [vmem:[%s287 + $0xb00] sm:$0xf]
        %v2568 = vld [vmem:[%s287 + $0xb04] sm:$0xff]
        %v2569 = vld [vmem:[%s287 + $0xb0c] sm:$0xff]
        %v2570 = vld [vmem:[%s287 + $0xb14] sm:$0xf]
        %v2571 = vld [vmem:[%s287 + $0xb18] sm:$0xff]
        %v2572 = vld [vmem:[%s287 + $0xb20] sm:$0xff]
        %v2573 = vld [vmem:[%s287 + $0xb28] sm:$0xf]
        %v2574 = vld [vmem:[%s287 + $0xb2c] sm:$0xff]
        %v2575 = vld [vmem:[%s287 + $0xb34] sm:$0xff]
        %v2576 = vld [vmem:[%s287 + $0xb3c] sm:$0xf]
        %v2577 = vld [vmem:[%s287 + $0xb40] sm:$0xff]
        %v2578 = vld [vmem:[%s287 + $0xb48] sm:$0xff]
        %v2579 = vld [vmem:[%s287 + $0xb50] sm:$0xf]
        %v2580 = vld [vmem:[%s287 + $0xb54] sm:$0xff]
        %v2581 = vld [vmem:[%s287 + $0xb5c] sm:$0xff]
        %v2582 = vld [vmem:[%s287 + $0xb64] sm:$0xf]
        %v2583 = vld [vmem:[%s287 + $0xb68] sm:$0xff]
        %v2584 = vld [vmem:[%s287 + $0xb70] sm:$0xff]
        %v2585 = vld [vmem:[%s287 + $0xb78] sm:$0xf]
        %v2586 = vld [vmem:[%s287 + $0xb7c] sm:$0xff]
        %v2587 = vld [vmem:[%s287 + $0xb84] sm:$0xff]
        %v2588 = vld [vmem:[%s287 + $0xb8c] sm:$0xf]
        %v2589 = vld [vmem:[%s287 + $0xb90] sm:$0xff]
        %v2590 = vld [vmem:[%s287 + $0xb98] sm:$0xff]
        %v2591 = vld [vmem:[%s287 + $0xba0] sm:$0xf]
        %v2592 = vld [vmem:[%s287 + $0xba4] sm:$0xff]
        %v2593 = vld [vmem:[%s287 + $0xbac] sm:$0xff]
        %v2594 = vld [vmem:[%s287 + $0xbb4] sm:$0xf]
        %v2595 = vld [vmem:[%s287 + $0xbb8] sm:$0xff]
        %v2596 = vld [vmem:[%s287 + $0xbc0] sm:$0xff]
        %v2597 = vld [vmem:[%s287 + $0xbc8] sm:$0xf]
        %v2598 = vld [vmem:[%s287 + $0xbcc] sm:$0xff]
        %v2599 = vld [vmem:[%s287 + $0xbd4] sm:$0xff]
        %v2600 = vld [vmem:[%s287 + $0xbdc] sm:$0xf]
        %v2601 = vld [vmem:[%s287 + $0xbe0] sm:$0xff]
        %v2602 = vld [vmem:[%s287 + $0xbe8] sm:$0xff]
        %v2603 = vld [vmem:[%s287 + $0xbf0] sm:$0xf]
        %v2604 = vld [vmem:[%s287 + $0xbf4] sm:$0xff]
        %v2605 = vld [vmem:[%s287 + $0xbfc] sm:$0xff]
        %v2606 = vld [vmem:[%s287 + $0xc04] sm:$0xf]
        %v2607 = vld [vmem:[%s287 + $0xc08] sm:$0xff]
        %v2608 = vld [vmem:[%s287 + $0xc10] sm:$0xff]
        %v2609 = vld [vmem:[%s287 + $0xc18] sm:$0xf]
        %v2610 = vld [vmem:[%s287 + $0xc1c] sm:$0xff]
        %v2611 = vld [vmem:[%s287 + $0xc24] sm:$0xff]
        %v2612 = vld [vmem:[%s287 + $0xc2c] sm:$0xf]
        %v2613 = vld [vmem:[%s287 + $0xc30] sm:$0xff]
        %v2614 = vld [vmem:[%s287 + $0xc38] sm:$0xff]
        %v2615 = vld [vmem:[%s287 + $0xc40] sm:$0xf]
        %v2616 = vld [vmem:[%s287 + $0xc44] sm:$0xff]
        %v2617 = vld [vmem:[%s287 + $0xc4c] sm:$0xff]
        %v2618 = vld [vmem:[%s287 + $0xc54] sm:$0xf]
        %v2619 = vld [vmem:[%s287 + $0xc58] sm:$0xff]
        %v2620 = vld [vmem:[%s287 + $0xc60] sm:$0xff]
        %v2621 = vld [vmem:[%s287 + $0xc68] sm:$0xf]
        %v2622 = vld [vmem:[%s287 + $0xc6c] sm:$0xff]
        %v2623 = vld [vmem:[%s287 + $0xc74] sm:$0xff]
        %v2624 = vld [vmem:[%s287 + $0xc7c] sm:$0xf]
        %v2625 = vld [vmem:[%s296] sm:$0x1f]
        %v2627 = vlaneseq
        %v2628 = vshrl.u32 %v2627, 7
        %v2629 = vsub.s32 0, %v2628
        %v2630 = vrot.slane %v2625, %v2629
        %v2631 = vlaneseq
        %v2632 = vshrl.u32 %v2631, 7
        %v2633 = vsub.s32 1, %v2632
        %v2634 = vrot.slane %v2625, %v2633
        %v2635 = vlaneseq
        %v2636 = vshrl.u32 %v2635, 7
        %v2637 = vsub.s32 2, %v2636
        %v2638 = vrot.slane %v2625, %v2637
        %v2639 = vlaneseq
        %v2640 = vshrl.u32 %v2639, 7
        %v2641 = vsub.s32 3, %v2640
        %v2642 = vrot.slane %v2625, %v2641
        %v2643 = vlaneseq
        %v2644 = vshrl.u32 %v2643, 7
        %v2645 = vsub.s32 4, %v2644
        %v2646 = vrot.slane %v2625, %v2645
        %v2657 = vunpack.c.l.b16 %v2140
        %v2658 = vunpack.c.h.b16 %v2140
        %v2659 = vunpack.c.l.b16 %v2141
        %v2660 = vunpack.c.h.b16 %v2141
        %v2661 = vunpack.c.l.b16 %v2142
        %v2662 = vunpack.c.h.b16 %v2142
        %v2663 = vunpack.c.l.b16 %v2143
        %v2664 = vunpack.c.h.b16 %v2143
        %v2665 = vunpack.c.l.b16 %v2144
        %v2666 = vunpack.c.h.b16 %v2144
        %v2667 = vpack.c.b16 %v2657, %v2657
        %v2668 = vpack.c.b16 %v2658, %v2658
        %v2669 = vpack.c.b16 %v2659, %v2659
        %v2670 = vpack.c.b16 %v2660, %v2660
        %v2671 = vpack.c.b16 %v2661, %v2661
        %v2672 = vpack.c.b16 %v2662, %v2662
        %v2673 = vpack.c.b16 %v2663, %v2663
        %v2674 = vpack.c.b16 %v2664, %v2664
        %v2675 = vpack.c.b16 %v2665, %v2665
        %v2676 = vpack.c.b16 %v2666, %v2666
        %v3167 = vunpack.c.l.b16 %v2145
        %v3168 = vunpack.c.h.b16 %v2145
        %v3169 = vunpack.c.l.b16 %v2146
        %v3170 = vunpack.c.h.b16 %v2146
        %v3171 = vunpack.c.l.b16 %v2147
        %v3172 = vunpack.c.l.b16 %v2148
        %v3173 = vunpack.c.h.b16 %v2148
        %v3174 = vunpack.c.l.b16 %v2149
        %v3175 = vunpack.c.h.b16 %v2149
        %v3176 = vunpack.c.l.b16 %v2150
        %v3177 = vunpack.c.l.b16 %v2151
        %v3178 = vunpack.c.h.b16 %v2151
        %v3179 = vunpack.c.l.b16 %v2152
        %v3180 = vunpack.c.h.b16 %v2152
        %v3181 = vunpack.c.l.b16 %v2153
        %v3182 = vunpack.c.l.b16 %v2154
        %v3183 = vunpack.c.h.b16 %v2154
        %v3184 = vunpack.c.l.b16 %v2155
        %v3185 = vunpack.c.h.b16 %v2155
        %v3186 = vunpack.c.l.b16 %v2156
        %v3187 = vunpack.c.l.b16 %v2157
        %v3188 = vunpack.c.h.b16 %v2157
        %v3189 = vunpack.c.l.b16 %v2158
        %v3190 = vunpack.c.h.b16 %v2158
        %v3191 = vunpack.c.l.b16 %v2159
        %v3192 = vunpack.c.l.b16 %v2160
        %v3193 = vunpack.c.h.b16 %v2160
        %v3194 = vunpack.c.l.b16 %v2161
        %v3195 = vunpack.c.h.b16 %v2161
        %v3196 = vunpack.c.l.b16 %v2162
        %v3197 = vunpack.c.l.b16 %v2163
        %v3198 = vunpack.c.h.b16 %v2163
        %v3199 = vunpack.c.l.b16 %v2164
        %v3200 = vunpack.c.h.b16 %v2164
        %v3201 = vunpack.c.l.b16 %v2165
        %v3202 = vunpack.c.l.b16 %v2166
        %v3203 = vunpack.c.h.b16 %v2166
        %v3204 = vunpack.c.l.b16 %v2167
        %v3205 = vunpack.c.h.b16 %v2167
        %v3206 = vunpack.c.l.b16 %v2168
        %v3207 = vunpack.c.l.b16 %v2169
        %v3208 = vunpack.c.h.b16 %v2169
        %v3209 = vunpack.c.l.b16 %v2170
        %v3210 = vunpack.c.h.b16 %v2170
        %v3211 = vunpack.c.l.b16 %v2171
        %v3212 = vunpack.c.l.b16 %v2172
        %v3213 = vunpack.c.h.b16 %v2172
        %v3214 = vunpack.c.l.b16 %v2173
        %v3215 = vunpack.c.h.b16 %v2173
        %v3216 = vunpack.c.l.b16 %v2174
        %v3217 = vunpack.c.l.b16 %v2175
        %v3218 = vunpack.c.h.b16 %v2175
        %v3219 = vunpack.c.l.b16 %v2176
        %v3220 = vunpack.c.h.b16 %v2176
        %v3221 = vunpack.c.l.b16 %v2177
        %v3222 = vunpack.c.l.b16 %v2178
        %v3223 = vunpack.c.h.b16 %v2178
        %v3224 = vunpack.c.l.b16 %v2179
        %v3225 = vunpack.c.h.b16 %v2179
        %v3226 = vunpack.c.l.b16 %v2180
        %v3227 = vunpack.c.l.b16 %v2181
        %v3228 = vunpack.c.h.b16 %v2181
        %v3229 = vunpack.c.l.b16 %v2182
        %v3230 = vunpack.c.h.b16 %v2182
        %v3231 = vunpack.c.l.b16 %v2183
        %v3232 = vunpack.c.l.b16 %v2184
        %v3233 = vunpack.c.h.b16 %v2184
        %v3234 = vunpack.c.l.b16 %v2185
        %v3235 = vunpack.c.h.b16 %v2185
        %v3236 = vunpack.c.l.b16 %v2186
        %v3237 = vunpack.c.l.b16 %v2187
        %v3238 = vunpack.c.h.b16 %v2187
        %v3239 = vunpack.c.l.b16 %v2188
        %v3240 = vunpack.c.h.b16 %v2188
        %v3241 = vunpack.c.l.b16 %v2189
        %v3242 = vunpack.c.l.b16 %v2190
        %v3243 = vunpack.c.h.b16 %v2190
        %v3244 = vunpack.c.l.b16 %v2191
        %v3245 = vunpack.c.h.b16 %v2191
        %v3246 = vunpack.c.l.b16 %v2192
        %v3247 = vunpack.c.l.b16 %v2193
        %v3248 = vunpack.c.h.b16 %v2193
        %v3249 = vunpack.c.l.b16 %v2194
        %v3250 = vunpack.c.h.b16 %v2194
        %v3251 = vunpack.c.l.b16 %v2195
        %v3252 = vunpack.c.l.b16 %v2196
        %v3253 = vunpack.c.h.b16 %v2196
        %v3254 = vunpack.c.l.b16 %v2197
        %v3255 = vunpack.c.h.b16 %v2197
        %v3256 = vunpack.c.l.b16 %v2198
        %v3257 = vunpack.c.l.b16 %v2199
        %v3258 = vunpack.c.h.b16 %v2199
        %v3259 = vunpack.c.l.b16 %v2200
        %v3260 = vunpack.c.h.b16 %v2200
        %v3261 = vunpack.c.l.b16 %v2201
        %v3262 = vunpack.c.l.b16 %v2202
        %v3263 = vunpack.c.h.b16 %v2202
        %v3264 = vunpack.c.l.b16 %v2203
        %v3265 = vunpack.c.h.b16 %v2203
        %v3266 = vunpack.c.l.b16 %v2204
        %v3267 = vunpack.c.l.b16 %v2205
        %v3268 = vunpack.c.h.b16 %v2205
        %v3269 = vunpack.c.l.b16 %v2206
        %v3270 = vunpack.c.h.b16 %v2206
        %v3271 = vunpack.c.l.b16 %v2207
        %v3272 = vunpack.c.l.b16 %v2208
        %v3273 = vunpack.c.h.b16 %v2208
        %v3274 = vunpack.c.l.b16 %v2209
        %v3275 = vunpack.c.h.b16 %v2209
        %v3276 = vunpack.c.l.b16 %v2210
        %v3277 = vunpack.c.l.b16 %v2211
        %v3278 = vunpack.c.h.b16 %v2211
        %v3279 = vunpack.c.l.b16 %v2212
        %v3280 = vunpack.c.h.b16 %v2212
        %v3281 = vunpack.c.l.b16 %v2213
        %v3282 = vunpack.c.l.b16 %v2214
        %v3283 = vunpack.c.h.b16 %v2214
        %v3284 = vunpack.c.l.b16 %v2215
        %v3285 = vunpack.c.h.b16 %v2215
        %v3286 = vunpack.c.l.b16 %v2216
        %v3287 = vunpack.c.l.b16 %v2217
        %v3288 = vunpack.c.h.b16 %v2217
        %v3289 = vunpack.c.l.b16 %v2218
        %v3290 = vunpack.c.h.b16 %v2218
        %v3291 = vunpack.c.l.b16 %v2219
        %v3292 = vunpack.c.l.b16 %v2220
        %v3293 = vunpack.c.h.b16 %v2220
        %v3294 = vunpack.c.l.b16 %v2221
        %v3295 = vunpack.c.h.b16 %v2221
        %v3296 = vunpack.c.l.b16 %v2222
        %v3297 = vunpack.c.l.b16 %v2223
        %v3298 = vunpack.c.h.b16 %v2223
        %v3299 = vunpack.c.l.b16 %v2224
        %v3300 = vunpack.c.h.b16 %v2224
        %v3301 = vunpack.c.l.b16 %v2225
        %v3302 = vunpack.c.l.b16 %v2226
        %v3303 = vunpack.c.h.b16 %v2226
        %v3304 = vunpack.c.l.b16 %v2227
        %v3305 = vunpack.c.h.b16 %v2227
        %v3306 = vunpack.c.l.b16 %v2228
        %v3307 = vunpack.c.l.b16 %v2229
        %v3308 = vunpack.c.h.b16 %v2229
        %v3309 = vunpack.c.l.b16 %v2230
        %v3310 = vunpack.c.h.b16 %v2230
        %v3311 = vunpack.c.l.b16 %v2231
        %v3312 = vunpack.c.l.b16 %v2232
        %v3313 = vunpack.c.h.b16 %v2232
        %v3314 = vunpack.c.l.b16 %v2233
        %v3315 = vunpack.c.h.b16 %v2233
        %v3316 = vunpack.c.l.b16 %v2234
        %v3317 = vunpack.c.l.b16 %v2235
        %v3318 = vunpack.c.h.b16 %v2235
        %v3319 = vunpack.c.l.b16 %v2236
        %v3320 = vunpack.c.h.b16 %v2236
        %v3321 = vunpack.c.l.b16 %v2237
        %v3322 = vunpack.c.l.b16 %v2238
        %v3323 = vunpack.c.h.b16 %v2238
        %v3324 = vunpack.c.l.b16 %v2239
        %v3325 = vunpack.c.h.b16 %v2239
        %v3326 = vunpack.c.l.b16 %v2240
        %v3327 = vunpack.c.l.b16 %v2241
        %v3328 = vunpack.c.h.b16 %v2241
        %v3329 = vunpack.c.l.b16 %v2242
        %v3330 = vunpack.c.h.b16 %v2242
        %v3331 = vunpack.c.l.b16 %v2243
        %v3332 = vunpack.c.l.b16 %v2244
        %v3333 = vunpack.c.h.b16 %v2244
        %v3334 = vunpack.c.l.b16 %v2245
        %v3335 = vunpack.c.h.b16 %v2245
        %v3336 = vunpack.c.l.b16 %v2246
        %v3337 = vunpack.c.l.b16 %v2247
        %v3338 = vunpack.c.h.b16 %v2247
        %v3339 = vunpack.c.l.b16 %v2248
        %v3340 = vunpack.c.h.b16 %v2248
        %v3341 = vunpack.c.l.b16 %v2249
        %v3342 = vunpack.c.l.b16 %v2250
        %v3343 = vunpack.c.h.b16 %v2250
        %v3344 = vunpack.c.l.b16 %v2251
        %v3345 = vunpack.c.h.b16 %v2251
        %v3346 = vunpack.c.l.b16 %v2252
        %v3347 = vunpack.c.l.b16 %v2253
        %v3348 = vunpack.c.h.b16 %v2253
        %v3349 = vunpack.c.l.b16 %v2254
        %v3350 = vunpack.c.h.b16 %v2254
        %v3351 = vunpack.c.l.b16 %v2255
        %v3352 = vunpack.c.l.b16 %v2256
        %v3353 = vunpack.c.h.b16 %v2256
        %v3354 = vunpack.c.l.b16 %v2257
        %v3355 = vunpack.c.h.b16 %v2257
        %v3356 = vunpack.c.l.b16 %v2258
        %v3357 = vunpack.c.l.b16 %v2259
        %v3358 = vunpack.c.h.b16 %v2259
        %v3359 = vunpack.c.l.b16 %v2260
        %v3360 = vunpack.c.h.b16 %v2260
        %v3361 = vunpack.c.l.b16 %v2261
        %v3362 = vunpack.c.l.b16 %v2262
        %v3363 = vunpack.c.h.b16 %v2262
        %v3364 = vunpack.c.l.b16 %v2263
        %v3365 = vunpack.c.h.b16 %v2263
        %v3366 = vunpack.c.l.b16 %v2264
        %v3367 = vunpack.c.l.b16 %v2265
        %v3368 = vunpack.c.h.b16 %v2265
        %v3369 = vunpack.c.l.b16 %v2266
        %v3370 = vunpack.c.h.b16 %v2266
        %v3371 = vunpack.c.l.b16 %v2267
        %v3372 = vunpack.c.l.b16 %v2268
        %v3373 = vunpack.c.h.b16 %v2268
        %v3374 = vunpack.c.l.b16 %v2269
        %v3375 = vunpack.c.h.b16 %v2269
        %v3376 = vunpack.c.l.b16 %v2270
        %v3377 = vunpack.c.l.b16 %v2271
        %v3378 = vunpack.c.h.b16 %v2271
        %v3379 = vunpack.c.l.b16 %v2272
        %v3380 = vunpack.c.h.b16 %v2272
        %v3381 = vunpack.c.l.b16 %v2273
        %v3382 = vunpack.c.l.b16 %v2274
        %v3383 = vunpack.c.h.b16 %v2274
        %v3384 = vunpack.c.l.b16 %v2275
        %v3385 = vunpack.c.h.b16 %v2275
        %v3386 = vunpack.c.l.b16 %v2276
        %v3387 = vunpack.c.l.b16 %v2277
        %v3388 = vunpack.c.h.b16 %v2277
        %v3389 = vunpack.c.l.b16 %v2278
        %v3390 = vunpack.c.h.b16 %v2278
        %v3391 = vunpack.c.l.b16 %v2279
        %v3392 = vunpack.c.l.b16 %v2280
        %v3393 = vunpack.c.h.b16 %v2280
        %v3394 = vunpack.c.l.b16 %v2281
        %v3395 = vunpack.c.h.b16 %v2281
        %v3396 = vunpack.c.l.b16 %v2282
        %v3397 = vunpack.c.l.b16 %v2283
        %v3398 = vunpack.c.h.b16 %v2283
        %v3399 = vunpack.c.l.b16 %v2284
        %v3400 = vunpack.c.h.b16 %v2284
        %v3401 = vunpack.c.l.b16 %v2285
        %v3402 = vunpack.c.l.b16 %v2286
        %v3403 = vunpack.c.h.b16 %v2286
        %v3404 = vunpack.c.l.b16 %v2287
        %v3405 = vunpack.c.h.b16 %v2287
        %v3406 = vunpack.c.l.b16 %v2288
        %v3407 = vunpack.c.l.b16 %v2289
        %v3408 = vunpack.c.h.b16 %v2289
        %v3409 = vunpack.c.l.b16 %v2290
        %v3410 = vunpack.c.h.b16 %v2290
        %v3411 = vunpack.c.l.b16 %v2291
        %v3412 = vunpack.c.l.b16 %v2292
        %v3413 = vunpack.c.h.b16 %v2292
        %v3414 = vunpack.c.l.b16 %v2293
        %v3415 = vunpack.c.h.b16 %v2293
        %v3416 = vunpack.c.l.b16 %v2294
        %v3417 = vunpack.c.l.b16 %v2295
        %v3418 = vunpack.c.h.b16 %v2295
        %v3419 = vunpack.c.l.b16 %v2296
        %v3420 = vunpack.c.h.b16 %v2296
        %v3421 = vunpack.c.l.b16 %v2297
        %v3422 = vunpack.c.l.b16 %v2298
        %v3423 = vunpack.c.h.b16 %v2298
        %v3424 = vunpack.c.l.b16 %v2299
        %v3425 = vunpack.c.h.b16 %v2299
        %v3426 = vunpack.c.l.b16 %v2300
        %v3427 = vunpack.c.l.b16 %v2301
        %v3428 = vunpack.c.h.b16 %v2301
        %v3429 = vunpack.c.l.b16 %v2302
        %v3430 = vunpack.c.h.b16 %v2302
        %v3431 = vunpack.c.l.b16 %v2303
        %v3432 = vunpack.c.l.b16 %v2304
        %v3433 = vunpack.c.h.b16 %v2304
        %v3434 = vunpack.c.l.b16 %v2305
        %v3435 = vunpack.c.h.b16 %v2305
        %v3436 = vunpack.c.l.b16 %v2306
        %v3437 = vunpack.c.l.b16 %v2307
        %v3438 = vunpack.c.h.b16 %v2307
        %v3439 = vunpack.c.l.b16 %v2308
        %v3440 = vunpack.c.h.b16 %v2308
        %v3441 = vunpack.c.l.b16 %v2309
        %v3442 = vunpack.c.l.b16 %v2310
        %v3443 = vunpack.c.h.b16 %v2310
        %v3444 = vunpack.c.l.b16 %v2311
        %v3445 = vunpack.c.h.b16 %v2311
        %v3446 = vunpack.c.l.b16 %v2312
        %v3447 = vunpack.c.l.b16 %v2313
        %v3448 = vunpack.c.h.b16 %v2313
        %v3449 = vunpack.c.l.b16 %v2314
        %v3450 = vunpack.c.h.b16 %v2314
        %v3451 = vunpack.c.l.b16 %v2315
        %v3452 = vunpack.c.l.b16 %v2316
        %v3453 = vunpack.c.h.b16 %v2316
        %v3454 = vunpack.c.l.b16 %v2317
        %v3455 = vunpack.c.h.b16 %v2317
        %v3456 = vunpack.c.l.b16 %v2318
        %v3457 = vunpack.c.l.b16 %v2319
        %v3458 = vunpack.c.h.b16 %v2319
        %v3459 = vunpack.c.l.b16 %v2320
        %v3460 = vunpack.c.h.b16 %v2320
        %v3461 = vunpack.c.l.b16 %v2321
        %v3462 = vunpack.c.l.b16 %v2322
        %v3463 = vunpack.c.h.b16 %v2322
        %v3464 = vunpack.c.l.b16 %v2323
        %v3465 = vunpack.c.h.b16 %v2323
        %v3466 = vunpack.c.l.b16 %v2324
        %v3467 = vunpack.c.l.b16 %v2325
        %v3468 = vunpack.c.h.b16 %v2325
        %v3469 = vunpack.c.l.b16 %v2326
        %v3470 = vunpack.c.h.b16 %v2326
        %v3471 = vunpack.c.l.b16 %v2327
        %v3472 = vunpack.c.l.b16 %v2328
        %v3473 = vunpack.c.h.b16 %v2328
        %v3474 = vunpack.c.l.b16 %v2329
        %v3475 = vunpack.c.h.b16 %v2329
        %v3476 = vunpack.c.l.b16 %v2330
        %v3477 = vunpack.c.l.b16 %v2331
        %v3478 = vunpack.c.h.b16 %v2331
        %v3479 = vunpack.c.l.b16 %v2332
        %v3480 = vunpack.c.h.b16 %v2332
        %v3481 = vunpack.c.l.b16 %v2333
        %v3482 = vunpack.c.l.b16 %v2334
        %v3483 = vunpack.c.h.b16 %v2334
        %v3484 = vunpack.c.l.b16 %v2335
        %v3485 = vunpack.c.h.b16 %v2335
        %v3486 = vunpack.c.l.b16 %v2336
        %v3487 = vunpack.c.l.b16 %v2337
        %v3488 = vunpack.c.h.b16 %v2337
        %v3489 = vunpack.c.l.b16 %v2338
        %v3490 = vunpack.c.h.b16 %v2338
        %v3491 = vunpack.c.l.b16 %v2339
        %v3492 = vunpack.c.l.b16 %v2340
        %v3493 = vunpack.c.h.b16 %v2340
        %v3494 = vunpack.c.l.b16 %v2341
        %v3495 = vunpack.c.h.b16 %v2341
        %v3496 = vunpack.c.l.b16 %v2342
        %v3497 = vunpack.c.l.b16 %v2343
        %v3498 = vunpack.c.h.b16 %v2343
        %v3499 = vunpack.c.l.b16 %v2344
        %v3500 = vunpack.c.h.b16 %v2344
        %v3501 = vunpack.c.l.b16 %v2345
        %v3502 = vunpack.c.l.b16 %v2346
        %v3503 = vunpack.c.h.b16 %v2346
        %v3504 = vunpack.c.l.b16 %v2347
        %v3505 = vunpack.c.h.b16 %v2347
        %v3506 = vunpack.c.l.b16 %v2348
        %v3507 = vunpack.c.l.b16 %v2349
        %v3508 = vunpack.c.h.b16 %v2349
        %v3509 = vunpack.c.l.b16 %v2350
        %v3510 = vunpack.c.h.b16 %v2350
        %v3511 = vunpack.c.l.b16 %v2351
        %v3512 = vunpack.c.l.b16 %v2352
        %v3513 = vunpack.c.h.b16 %v2352
        %v3514 = vunpack.c.l.b16 %v2353
        %v3515 = vunpack.c.h.b16 %v2353
        %v3516 = vunpack.c.l.b16 %v2354
        %v3517 = vunpack.c.l.b16 %v2355
        %v3518 = vunpack.c.h.b16 %v2355
        %v3519 = vunpack.c.l.b16 %v2356
        %v3520 = vunpack.c.h.b16 %v2356
        %v3521 = vunpack.c.l.b16 %v2357
        %v3522 = vunpack.c.l.b16 %v2358
        %v3523 = vunpack.c.h.b16 %v2358
        %v3524 = vunpack.c.l.b16 %v2359
        %v3525 = vunpack.c.h.b16 %v2359
        %v3526 = vunpack.c.l.b16 %v2360
        %v3527 = vunpack.c.l.b16 %v2361
        %v3528 = vunpack.c.h.b16 %v2361
        %v3529 = vunpack.c.l.b16 %v2362
        %v3530 = vunpack.c.h.b16 %v2362
        %v3531 = vunpack.c.l.b16 %v2363
        %v3532 = vunpack.c.l.b16 %v2364
        %v3533 = vunpack.c.h.b16 %v2364
        %v3534 = vunpack.c.l.b16 %v2365
        %v3535 = vunpack.c.h.b16 %v2365
        %v3536 = vunpack.c.l.b16 %v2366
        %v3537 = vunpack.c.l.b16 %v2367
        %v3538 = vunpack.c.h.b16 %v2367
        %v3539 = vunpack.c.l.b16 %v2368
        %v3540 = vunpack.c.h.b16 %v2368
        %v3541 = vunpack.c.l.b16 %v2369
        %v3542 = vunpack.c.l.b16 %v2370
        %v3543 = vunpack.c.h.b16 %v2370
        %v3544 = vunpack.c.l.b16 %v2371
        %v3545 = vunpack.c.h.b16 %v2371
        %v3546 = vunpack.c.l.b16 %v2372
        %v3547 = vunpack.c.l.b16 %v2373
        %v3548 = vunpack.c.h.b16 %v2373
        %v3549 = vunpack.c.l.b16 %v2374
        %v3550 = vunpack.c.h.b16 %v2374
        %v3551 = vunpack.c.l.b16 %v2375
        %v3552 = vunpack.c.l.b16 %v2376
        %v3553 = vunpack.c.h.b16 %v2376
        %v3554 = vunpack.c.l.b16 %v2377
        %v3555 = vunpack.c.h.b16 %v2377
        %v3556 = vunpack.c.l.b16 %v2378
        %v3557 = vunpack.c.l.b16 %v2379
        %v3558 = vunpack.c.h.b16 %v2379
        %v3559 = vunpack.c.l.b16 %v2380
        %v3560 = vunpack.c.h.b16 %v2380
        %v3561 = vunpack.c.l.b16 %v2381
        %v3562 = vunpack.c.l.b16 %v2382
        %v3563 = vunpack.c.h.b16 %v2382
        %v3564 = vunpack.c.l.b16 %v2383
        %v3565 = vunpack.c.h.b16 %v2383
        %v3566 = vunpack.c.l.b16 %v2384
        %v3567 = vunpack.c.l.b16 %v2385
        %v3568 = vunpack.c.h.b16 %v2385
        %v3569 = vunpack.c.l.b16 %v2386
        %v3570 = vunpack.c.h.b16 %v2386
        %v3571 = vunpack.c.l.b16 %v2387
        %v3572 = vunpack.c.l.b16 %v2388
        %v3573 = vunpack.c.h.b16 %v2388
        %v3574 = vunpack.c.l.b16 %v2389
        %v3575 = vunpack.c.h.b16 %v2389
        %v3576 = vunpack.c.l.b16 %v2390
        %v3577 = vunpack.c.l.b16 %v2391
        %v3578 = vunpack.c.h.b16 %v2391
        %v3579 = vunpack.c.l.b16 %v2392
        %v3580 = vunpack.c.h.b16 %v2392
        %v3581 = vunpack.c.l.b16 %v2393
        %v3582 = vunpack.c.l.b16 %v2394
        %v3583 = vunpack.c.h.b16 %v2394
        %v3584 = vunpack.c.l.b16 %v2395
        %v3585 = vunpack.c.h.b16 %v2395
        %v3586 = vunpack.c.l.b16 %v2396
        %v3587 = vunpack.c.l.b16 %v2397
        %v3588 = vunpack.c.h.b16 %v2397
        %v3589 = vunpack.c.l.b16 %v2398
        %v3590 = vunpack.c.h.b16 %v2398
        %v3591 = vunpack.c.l.b16 %v2399
        %v3592 = vunpack.c.l.b16 %v2400
        %v3593 = vunpack.c.h.b16 %v2400
        %v3594 = vunpack.c.l.b16 %v2401
        %v3595 = vunpack.c.h.b16 %v2401
        %v3596 = vunpack.c.l.b16 %v2402
        %v3597 = vunpack.c.l.b16 %v2403
        %v3598 = vunpack.c.h.b16 %v2403
        %v3599 = vunpack.c.l.b16 %v2404
        %v3600 = vunpack.c.h.b16 %v2404
        %v3601 = vunpack.c.l.b16 %v2405
        %v3602 = vunpack.c.l.b16 %v2406
        %v3603 = vunpack.c.h.b16 %v2406
        %v3604 = vunpack.c.l.b16 %v2407
        %v3605 = vunpack.c.h.b16 %v2407
        %v3606 = vunpack.c.l.b16 %v2408
        %v3607 = vunpack.c.l.b16 %v2409
        %v3608 = vunpack.c.h.b16 %v2409
        %v3609 = vunpack.c.l.b16 %v2410
        %v3610 = vunpack.c.h.b16 %v2410
        %v3611 = vunpack.c.l.b16 %v2411
        %v3612 = vunpack.c.l.b16 %v2412
        %v3613 = vunpack.c.h.b16 %v2412
        %v3614 = vunpack.c.l.b16 %v2413
        %v3615 = vunpack.c.h.b16 %v2413
        %v3616 = vunpack.c.l.b16 %v2414
        %v3617 = vunpack.c.l.b16 %v2415
        %v3618 = vunpack.c.h.b16 %v2415
        %v3619 = vunpack.c.l.b16 %v2416
        %v3620 = vunpack.c.h.b16 %v2416
        %v3621 = vunpack.c.l.b16 %v2417
        %v3622 = vunpack.c.l.b16 %v2418
        %v3623 = vunpack.c.h.b16 %v2418
        %v3624 = vunpack.c.l.b16 %v2419
        %v3625 = vunpack.c.h.b16 %v2419
        %v3626 = vunpack.c.l.b16 %v2420
        %v3627 = vunpack.c.l.b16 %v2421
        %v3628 = vunpack.c.h.b16 %v2421
        %v3629 = vunpack.c.l.b16 %v2422
        %v3630 = vunpack.c.h.b16 %v2422
        %v3631 = vunpack.c.l.b16 %v2423
        %v3632 = vunpack.c.l.b16 %v2424
        %v3633 = vunpack.c.h.b16 %v2424
        %v3634 = vunpack.c.l.b16 %v2425
        %v3635 = vunpack.c.h.b16 %v2425
        %v3636 = vunpack.c.l.b16 %v2426
        %v3637 = vunpack.c.l.b16 %v2427
        %v3638 = vunpack.c.h.b16 %v2427
        %v3639 = vunpack.c.l.b16 %v2428
        %v3640 = vunpack.c.h.b16 %v2428
        %v3641 = vunpack.c.l.b16 %v2429
        %v3642 = vunpack.c.l.b16 %v2430
        %v3643 = vunpack.c.h.b16 %v2430
        %v3644 = vunpack.c.l.b16 %v2431
        %v3645 = vunpack.c.h.b16 %v2431
        %v3646 = vunpack.c.l.b16 %v2432
        %v3647 = vunpack.c.l.b16 %v2433
        %v3648 = vunpack.c.h.b16 %v2433
        %v3649 = vunpack.c.l.b16 %v2434
        %v3650 = vunpack.c.h.b16 %v2434
        %v3651 = vunpack.c.l.b16 %v2435
        %v3652 = vunpack.c.l.b16 %v2436
        %v3653 = vunpack.c.h.b16 %v2436
        %v3654 = vunpack.c.l.b16 %v2437
        %v3655 = vunpack.c.h.b16 %v2437
        %v3656 = vunpack.c.l.b16 %v2438
        %v3657 = vunpack.c.l.b16 %v2439
        %v3658 = vunpack.c.h.b16 %v2439
        %v3659 = vunpack.c.l.b16 %v2440
        %v3660 = vunpack.c.h.b16 %v2440
        %v3661 = vunpack.c.l.b16 %v2441
        %v3662 = vunpack.c.l.b16 %v2442
        %v3663 = vunpack.c.h.b16 %v2442
        %v3664 = vunpack.c.l.b16 %v2443
        %v3665 = vunpack.c.h.b16 %v2443
        %v3666 = vunpack.c.l.b16 %v2444
        %v3667 = vunpack.c.l.b16 %v2445
        %v3668 = vunpack.c.h.b16 %v2445
        %v3669 = vunpack.c.l.b16 %v2446
        %v3670 = vunpack.c.h.b16 %v2446
        %v3671 = vunpack.c.l.b16 %v2447
        %v3672 = vunpack.c.l.b16 %v2448
        %v3673 = vunpack.c.h.b16 %v2448
        %v3674 = vunpack.c.l.b16 %v2449
        %v3675 = vunpack.c.h.b16 %v2449
        %v3676 = vunpack.c.l.b16 %v2450
        %v3677 = vunpack.c.l.b16 %v2451
        %v3678 = vunpack.c.h.b16 %v2451
        %v3679 = vunpack.c.l.b16 %v2452
        %v3680 = vunpack.c.h.b16 %v2452
        %v3681 = vunpack.c.l.b16 %v2453
        %v3682 = vunpack.c.l.b16 %v2454
        %v3683 = vunpack.c.h.b16 %v2454
        %v3684 = vunpack.c.l.b16 %v2455
        %v3685 = vunpack.c.h.b16 %v2455
        %v3686 = vunpack.c.l.b16 %v2456
        %v3687 = vunpack.c.l.b16 %v2457
        %v3688 = vunpack.c.h.b16 %v2457
        %v3689 = vunpack.c.l.b16 %v2458
        %v3690 = vunpack.c.h.b16 %v2458
        %v3691 = vunpack.c.l.b16 %v2459
        %v3692 = vunpack.c.l.b16 %v2460
        %v3693 = vunpack.c.h.b16 %v2460
        %v3694 = vunpack.c.l.b16 %v2461
        %v3695 = vunpack.c.h.b16 %v2461
        %v3696 = vunpack.c.l.b16 %v2462
        %v3697 = vunpack.c.l.b16 %v2463
        %v3698 = vunpack.c.h.b16 %v2463
        %v3699 = vunpack.c.l.b16 %v2464
        %v3700 = vunpack.c.h.b16 %v2464
        %v3701 = vunpack.c.l.b16 %v2465
        %v3702 = vunpack.c.l.b16 %v2466
        %v3703 = vunpack.c.h.b16 %v2466
        %v3704 = vunpack.c.l.b16 %v2467
        %v3705 = vunpack.c.h.b16 %v2467
        %v3706 = vunpack.c.l.b16 %v2468
        %v3707 = vunpack.c.l.b16 %v2469
        %v3708 = vunpack.c.h.b16 %v2469
        %v3709 = vunpack.c.l.b16 %v2470
        %v3710 = vunpack.c.h.b16 %v2470
        %v3711 = vunpack.c.l.b16 %v2471
        %v3712 = vunpack.c.l.b16 %v2472
        %v3713 = vunpack.c.h.b16 %v2472
        %v3714 = vunpack.c.l.b16 %v2473
        %v3715 = vunpack.c.h.b16 %v2473
        %v3716 = vunpack.c.l.b16 %v2474
        %v3717 = vunpack.c.l.b16 %v2475
        %v3718 = vunpack.c.h.b16 %v2475
        %v3719 = vunpack.c.l.b16 %v2476
        %v3720 = vunpack.c.h.b16 %v2476
        %v3721 = vunpack.c.l.b16 %v2477
        %v3722 = vunpack.c.l.b16 %v2478
        %v3723 = vunpack.c.h.b16 %v2478
        %v3724 = vunpack.c.l.b16 %v2479
        %v3725 = vunpack.c.h.b16 %v2479
        %v3726 = vunpack.c.l.b16 %v2480
        %v3727 = vunpack.c.l.b16 %v2481
        %v3728 = vunpack.c.h.b16 %v2481
        %v3729 = vunpack.c.l.b16 %v2482
        %v3730 = vunpack.c.h.b16 %v2482
        %v3731 = vunpack.c.l.b16 %v2483
        %v3732 = vunpack.c.l.b16 %v2484
        %v3733 = vunpack.c.h.b16 %v2484
        %v3734 = vunpack.c.l.b16 %v2485
        %v3735 = vunpack.c.h.b16 %v2485
        %v3736 = vunpack.c.l.b16 %v2486
        %v3737 = vunpack.c.l.b16 %v2487
        %v3738 = vunpack.c.h.b16 %v2487
        %v3739 = vunpack.c.l.b16 %v2488
        %v3740 = vunpack.c.h.b16 %v2488
        %v3741 = vunpack.c.l.b16 %v2489
        %v3742 = vunpack.c.l.b16 %v2490
        %v3743 = vunpack.c.h.b16 %v2490
        %v3744 = vunpack.c.l.b16 %v2491
        %v3745 = vunpack.c.h.b16 %v2491
        %v3746 = vunpack.c.l.b16 %v2492
        %v3747 = vunpack.c.l.b16 %v2493
        %v3748 = vunpack.c.h.b16 %v2493
        %v3749 = vunpack.c.l.b16 %v2494
        %v3750 = vunpack.c.h.b16 %v2494
        %v3751 = vunpack.c.l.b16 %v2495
        %v3752 = vunpack.c.l.b16 %v2496
        %v3753 = vunpack.c.h.b16 %v2496
        %v3754 = vunpack.c.l.b16 %v2497
        %v3755 = vunpack.c.h.b16 %v2497
        %v3756 = vunpack.c.l.b16 %v2498
        %v3757 = vunpack.c.l.b16 %v2499
        %v3758 = vunpack.c.h.b16 %v2499
        %v3759 = vunpack.c.l.b16 %v2500
        %v3760 = vunpack.c.h.b16 %v2500
        %v3761 = vunpack.c.l.b16 %v2501
        %v3762 = vunpack.c.l.b16 %v2502
        %v3763 = vunpack.c.h.b16 %v2502
        %v3764 = vunpack.c.l.b16 %v2503
        %v3765 = vunpack.c.h.b16 %v2503
        %v3766 = vunpack.c.l.b16 %v2504
        %v3767 = vunpack.c.l.b16 %v2505
        %v3768 = vunpack.c.h.b16 %v2505
        %v3769 = vunpack.c.l.b16 %v2506
        %v3770 = vunpack.c.h.b16 %v2506
        %v3771 = vunpack.c.l.b16 %v2507
        %v3772 = vunpack.c.l.b16 %v2508
        %v3773 = vunpack.c.h.b16 %v2508
        %v3774 = vunpack.c.l.b16 %v2509
        %v3775 = vunpack.c.h.b16 %v2509
        %v3776 = vunpack.c.l.b16 %v2510
        %v3777 = vunpack.c.l.b16 %v2511
        %v3778 = vunpack.c.h.b16 %v2511
        %v3779 = vunpack.c.l.b16 %v2512
        %v3780 = vunpack.c.h.b16 %v2512
        %v3781 = vunpack.c.l.b16 %v2513
        %v3782 = vunpack.c.l.b16 %v2514
        %v3783 = vunpack.c.h.b16 %v2514
        %v3784 = vunpack.c.l.b16 %v2515
        %v3785 = vunpack.c.h.b16 %v2515
        %v3786 = vunpack.c.l.b16 %v2516
        %v3787 = vunpack.c.l.b16 %v2517
        %v3788 = vunpack.c.h.b16 %v2517
        %v3789 = vunpack.c.l.b16 %v2518
        %v3790 = vunpack.c.h.b16 %v2518
        %v3791 = vunpack.c.l.b16 %v2519
        %v3792 = vunpack.c.l.b16 %v2520
        %v3793 = vunpack.c.h.b16 %v2520
        %v3794 = vunpack.c.l.b16 %v2521
        %v3795 = vunpack.c.h.b16 %v2521
        %v3796 = vunpack.c.l.b16 %v2522
        %v3797 = vunpack.c.l.b16 %v2523
        %v3798 = vunpack.c.h.b16 %v2523
        %v3799 = vunpack.c.l.b16 %v2524
        %v3800 = vunpack.c.h.b16 %v2524
        %v3801 = vunpack.c.l.b16 %v2525
        %v3802 = vunpack.c.l.b16 %v2526
        %v3803 = vunpack.c.h.b16 %v2526
        %v3804 = vunpack.c.l.b16 %v2527
        %v3805 = vunpack.c.h.b16 %v2527
        %v3806 = vunpack.c.l.b16 %v2528
        %v3807 = vunpack.c.l.b16 %v2529
        %v3808 = vunpack.c.h.b16 %v2529
        %v3809 = vunpack.c.l.b16 %v2530
        %v3810 = vunpack.c.h.b16 %v2530
        %v3811 = vunpack.c.l.b16 %v2531
        %v3812 = vunpack.c.l.b16 %v2532
        %v3813 = vunpack.c.h.b16 %v2532
        %v3814 = vunpack.c.l.b16 %v2533
        %v3815 = vunpack.c.h.b16 %v2533
        %v3816 = vunpack.c.l.b16 %v2534
        %v3817 = vunpack.c.l.b16 %v2535
        %v3818 = vunpack.c.h.b16 %v2535
        %v3819 = vunpack.c.l.b16 %v2536
        %v3820 = vunpack.c.h.b16 %v2536
        %v3821 = vunpack.c.l.b16 %v2537
        %v3822 = vunpack.c.l.b16 %v2538
        %v3823 = vunpack.c.h.b16 %v2538
        %v3824 = vunpack.c.l.b16 %v2539
        %v3825 = vunpack.c.h.b16 %v2539
        %v3826 = vunpack.c.l.b16 %v2540
        %v3827 = vunpack.c.l.b16 %v2541
        %v3828 = vunpack.c.h.b16 %v2541
        %v3829 = vunpack.c.l.b16 %v2542
        %v3830 = vunpack.c.h.b16 %v2542
        %v3831 = vunpack.c.l.b16 %v2543
        %v3832 = vunpack.c.l.b16 %v2544
        %v3833 = vunpack.c.h.b16 %v2544
        %v3834 = vunpack.c.l.b16 %v2545
        %v3835 = vunpack.c.h.b16 %v2545
        %v3836 = vunpack.c.l.b16 %v2546
        %v3837 = vunpack.c.l.b16 %v2547
        %v3838 = vunpack.c.h.b16 %v2547
        %v3839 = vunpack.c.l.b16 %v2548
        %v3840 = vunpack.c.h.b16 %v2548
        %v3841 = vunpack.c.l.b16 %v2549
        %v3842 = vunpack.c.l.b16 %v2550
        %v3843 = vunpack.c.h.b16 %v2550
        %v3844 = vunpack.c.l.b16 %v2551
        %v3845 = vunpack.c.h.b16 %v2551
        %v3846 = vunpack.c.l.b16 %v2552
        %v3847 = vunpack.c.l.b16 %v2553
        %v3848 = vunpack.c.h.b16 %v2553
        %v3849 = vunpack.c.l.b16 %v2554
        %v3850 = vunpack.c.h.b16 %v2554
        %v3851 = vunpack.c.l.b16 %v2555
        %v3852 = vunpack.c.l.b16 %v2556
        %v3853 = vunpack.c.h.b16 %v2556
        %v3854 = vunpack.c.l.b16 %v2557
        %v3855 = vunpack.c.h.b16 %v2557
        %v3856 = vunpack.c.l.b16 %v2558
        %v3857 = vunpack.c.l.b16 %v2559
        %v3858 = vunpack.c.h.b16 %v2559
        %v3859 = vunpack.c.l.b16 %v2560
        %v3860 = vunpack.c.h.b16 %v2560
        %v3861 = vunpack.c.l.b16 %v2561
        %v3862 = vunpack.c.l.b16 %v2562
        %v3863 = vunpack.c.h.b16 %v2562
        %v3864 = vunpack.c.l.b16 %v2563
        %v3865 = vunpack.c.h.b16 %v2563
        %v3866 = vunpack.c.l.b16 %v2564
        %v3867 = vunpack.c.l.b16 %v2565
        %v3868 = vunpack.c.h.b16 %v2565
        %v3869 = vunpack.c.l.b16 %v2566
        %v3870 = vunpack.c.h.b16 %v2566
        %v3871 = vunpack.c.l.b16 %v2567
        %v3872 = vunpack.c.l.b16 %v2568
        %v3873 = vunpack.c.h.b16 %v2568
        %v3874 = vunpack.c.l.b16 %v2569
        %v3875 = vunpack.c.h.b16 %v2569
        %v3876 = vunpack.c.l.b16 %v2570
        %v3877 = vunpack.c.l.b16 %v2571
        %v3878 = vunpack.c.h.b16 %v2571
        %v3879 = vunpack.c.l.b16 %v2572
        %v3880 = vunpack.c.h.b16 %v2572
        %v3881 = vunpack.c.l.b16 %v2573
        %v3882 = vunpack.c.l.b16 %v2574
        %v3883 = vunpack.c.h.b16 %v2574
        %v3884 = vunpack.c.l.b16 %v2575
        %v3885 = vunpack.c.h.b16 %v2575
        %v3886 = vunpack.c.l.b16 %v2576
        %v3887 = vunpack.c.l.b16 %v2577
        %v3888 = vunpack.c.h.b16 %v2577
        %v3889 = vunpack.c.l.b16 %v2578
        %v3890 = vunpack.c.h.b16 %v2578
        %v3891 = vunpack.c.l.b16 %v2579
        %v3892 = vunpack.c.l.b16 %v2580
        %v3893 = vunpack.c.h.b16 %v2580
        %v3894 = vunpack.c.l.b16 %v2581
        %v3895 = vunpack.c.h.b16 %v2581
        %v3896 = vunpack.c.l.b16 %v2582
        %v3897 = vunpack.c.l.b16 %v2583
        %v3898 = vunpack.c.h.b16 %v2583
        %v3899 = vunpack.c.l.b16 %v2584
        %v3900 = vunpack.c.h.b16 %v2584
        %v3901 = vunpack.c.l.b16 %v2585
        %v3902 = vunpack.c.l.b16 %v2586
        %v3903 = vunpack.c.h.b16 %v2586
        %v3904 = vunpack.c.l.b16 %v2587
        %v3905 = vunpack.c.h.b16 %v2587
        %v3906 = vunpack.c.l.b16 %v2588
        %v3907 = vunpack.c.l.b16 %v2589
        %v3908 = vunpack.c.h.b16 %v2589
        %v3909 = vunpack.c.l.b16 %v2590
        %v3910 = vunpack.c.h.b16 %v2590
        %v3911 = vunpack.c.l.b16 %v2591
        %v3912 = vunpack.c.l.b16 %v2592
        %v3913 = vunpack.c.h.b16 %v2592
        %v3914 = vunpack.c.l.b16 %v2593
        %v3915 = vunpack.c.h.b16 %v2593
        %v3916 = vunpack.c.l.b16 %v2594
        %v3917 = vunpack.c.l.b16 %v2595
        %v3918 = vunpack.c.h.b16 %v2595
        %v3919 = vunpack.c.l.b16 %v2596
        %v3920 = vunpack.c.h.b16 %v2596
        %v3921 = vunpack.c.l.b16 %v2597
        %v3922 = vunpack.c.l.b16 %v2598
        %v3923 = vunpack.c.h.b16 %v2598
        %v3924 = vunpack.c.l.b16 %v2599
        %v3925 = vunpack.c.h.b16 %v2599
        %v3926 = vunpack.c.l.b16 %v2600
        %v3927 = vunpack.c.l.b16 %v2601
        %v3928 = vunpack.c.h.b16 %v2601
        %v3929 = vunpack.c.l.b16 %v2602
        %v3930 = vunpack.c.h.b16 %v2602
        %v3931 = vunpack.c.l.b16 %v2603
        %v3932 = vunpack.c.l.b16 %v2604
        %v3933 = vunpack.c.h.b16 %v2604
        %v3934 = vunpack.c.l.b16 %v2605
        %v3935 = vunpack.c.h.b16 %v2605
        %v3936 = vunpack.c.l.b16 %v2606
        %v3937 = vunpack.c.l.b16 %v2607
        %v3938 = vunpack.c.h.b16 %v2607
        %v3939 = vunpack.c.l.b16 %v2608
        %v3940 = vunpack.c.h.b16 %v2608
        %v3941 = vunpack.c.l.b16 %v2609
        %v3942 = vunpack.c.l.b16 %v2610
        %v3943 = vunpack.c.h.b16 %v2610
        %v3944 = vunpack.c.l.b16 %v2611
        %v3945 = vunpack.c.h.b16 %v2611
        %v3946 = vunpack.c.l.b16 %v2612
        %v3947 = vunpack.c.l.b16 %v2613
        %v3948 = vunpack.c.h.b16 %v2613
        %v3949 = vunpack.c.l.b16 %v2614
        %v3950 = vunpack.c.h.b16 %v2614
        %v3951 = vunpack.c.l.b16 %v2615
        %v3952 = vunpack.c.l.b16 %v2616
        %v3953 = vunpack.c.h.b16 %v2616
        %v3954 = vunpack.c.l.b16 %v2617
        %v3955 = vunpack.c.h.b16 %v2617
        %v3956 = vunpack.c.l.b16 %v2618
        %v3957 = vunpack.c.l.b16 %v2619
        %v3958 = vunpack.c.h.b16 %v2619
        %v3959 = vunpack.c.l.b16 %v2620
        %v3960 = vunpack.c.h.b16 %v2620
        %v3961 = vunpack.c.l.b16 %v2621
        %v3962 = vunpack.c.l.b16 %v2622
        %v3963 = vunpack.c.h.b16 %v2622
        %v3964 = vunpack.c.l.b16 %v2623
        %v3965 = vunpack.c.h.b16 %v2623
        %v3966 = vunpack.c.l.b16 %v2624
        %v3967 = vpack.c.b16 %v3172, %v3167
        %v3968 = vpack.c.b16 %v3173, %v3168
        %v3969 = vpack.c.b16 %v3174, %v3169
        %v3970 = vpack.c.b16 %v3175, %v3170
        %v3971 = vpack.c.b16 %v3176, %v3171
        %v3972 = vpack.c.b16 %v3182, %v3177
        %v3973 = vpack.c.b16 %v3183, %v3178
        %v3974 = vpack.c.b16 %v3184, %v3179
        %v3975 = vpack.c.b16 %v3185, %v3180
        %v3976 = vpack.c.b16 %v3186, %v3181
        %v3977 = vpack.c.b16 %v3192, %v3187
        %v3978 = vpack.c.b16 %v3193, %v3188
        %v3979 = vpack.c.b16 %v3194, %v3189
        %v3980 = vpack.c.b16 %v3195, %v3190
        %v3981 = vpack.c.b16 %v3196, %v3191
        %v3982 = vpack.c.b16 %v3202, %v3197
        %v3983 = vpack.c.b16 %v3203, %v3198
        %v3984 = vpack.c.b16 %v3204, %v3199
        %v3985 = vpack.c.b16 %v3205, %v3200
        %v3986 = vpack.c.b16 %v3206, %v3201
        %v3987 = vpack.c.b16 %v3212, %v3207
        %v3988 = vpack.c.b16 %v3213, %v3208
        %v3989 = vpack.c.b16 %v3214, %v3209
        %v3990 = vpack.c.b16 %v3215, %v3210
        %v3991 = vpack.c.b16 %v3216, %v3211
        %v3992 = vpack.c.b16 %v3222, %v3217
        %v3993 = vpack.c.b16 %v3223, %v3218
        %v3994 = vpack.c.b16 %v3224, %v3219
        %v3995 = vpack.c.b16 %v3225, %v3220
        %v3996 = vpack.c.b16 %v3226, %v3221
        %v3997 = vpack.c.b16 %v3232, %v3227
        %v3998 = vpack.c.b16 %v3233, %v3228
        %v3999 = vpack.c.b16 %v3234, %v3229
        %v4000 = vpack.c.b16 %v3235, %v3230
        %v4001 = vpack.c.b16 %v3236, %v3231
        %v4002 = vpack.c.b16 %v3242, %v3237
        %v4003 = vpack.c.b16 %v3243, %v3238
        %v4004 = vpack.c.b16 %v3244, %v3239
        %v4005 = vpack.c.b16 %v3245, %v3240
        %v4006 = vpack.c.b16 %v3246, %v3241
        %v4007 = vpack.c.b16 %v3252, %v3247
        %v4008 = vpack.c.b16 %v3253, %v3248
        %v4009 = vpack.c.b16 %v3254, %v3249
        %v4010 = vpack.c.b16 %v3255, %v3250
        %v4011 = vpack.c.b16 %v3256, %v3251
        %v4012 = vpack.c.b16 %v3262, %v3257
        %v4013 = vpack.c.b16 %v3263, %v3258
        %v4014 = vpack.c.b16 %v3264, %v3259
        %v4015 = vpack.c.b16 %v3265, %v3260
        %v4016 = vpack.c.b16 %v3266, %v3261
        %v4017 = vpack.c.b16 %v3272, %v3267
        %v4018 = vpack.c.b16 %v3273, %v3268
        %v4019 = vpack.c.b16 %v3274, %v3269
        %v4020 = vpack.c.b16 %v3275, %v3270
        %v4021 = vpack.c.b16 %v3276, %v3271
        %v4022 = vpack.c.b16 %v3282, %v3277
        %v4023 = vpack.c.b16 %v3283, %v3278
        %v4024 = vpack.c.b16 %v3284, %v3279
        %v4025 = vpack.c.b16 %v3285, %v3280
        %v4026 = vpack.c.b16 %v3286, %v3281
        %v4027 = vpack.c.b16 %v3292, %v3287
        %v4028 = vpack.c.b16 %v3293, %v3288
        %v4029 = vpack.c.b16 %v3294, %v3289
        %v4030 = vpack.c.b16 %v3295, %v3290
        %v4031 = vpack.c.b16 %v3296, %v3291
        %v4032 = vpack.c.b16 %v3302, %v3297
        %v4033 = vpack.c.b16 %v3303, %v3298
        %v4034 = vpack.c.b16 %v3304, %v3299
        %v4035 = vpack.c.b16 %v3305, %v3300
        %v4036 = vpack.c.b16 %v3306, %v3301
        %v4037 = vpack.c.b16 %v3312, %v3307
        %v4038 = vpack.c.b16 %v3313, %v3308
        %v4039 = vpack.c.b16 %v3314, %v3309
        %v4040 = vpack.c.b16 %v3315, %v3310
        %v4041 = vpack.c.b16 %v3316, %v3311
        %v4042 = vpack.c.b16 %v3322, %v3317
        %v4043 = vpack.c.b16 %v3323, %v3318
        %v4044 = vpack.c.b16 %v3324, %v3319
        %v4045 = vpack.c.b16 %v3325, %v3320
        %v4046 = vpack.c.b16 %v3326, %v3321
        %v4047 = vpack.c.b16 %v3332, %v3327
        %v4048 = vpack.c.b16 %v3333, %v3328
        %v4049 = vpack.c.b16 %v3334, %v3329
        %v4050 = vpack.c.b16 %v3335, %v3330
        %v4051 = vpack.c.b16 %v3336, %v3331
        %v4052 = vpack.c.b16 %v3342, %v3337
        %v4053 = vpack.c.b16 %v3343, %v3338
        %v4054 = vpack.c.b16 %v3344, %v3339
        %v4055 = vpack.c.b16 %v3345, %v3340
        %v4056 = vpack.c.b16 %v3346, %v3341
        %v4057 = vpack.c.b16 %v3352, %v3347
        %v4058 = vpack.c.b16 %v3353, %v3348
        %v4059 = vpack.c.b16 %v3354, %v3349
        %v4060 = vpack.c.b16 %v3355, %v3350
        %v4061 = vpack.c.b16 %v3356, %v3351
        %v4062 = vpack.c.b16 %v3362, %v3357
        %v4063 = vpack.c.b16 %v3363, %v3358
        %v4064 = vpack.c.b16 %v3364, %v3359
        %v4065 = vpack.c.b16 %v3365, %v3360
        %v4066 = vpack.c.b16 %v3366, %v3361
        %v4067 = vpack.c.b16 %v3372, %v3367
        %v4068 = vpack.c.b16 %v3373, %v3368
        %v4069 = vpack.c.b16 %v3374, %v3369
        %v4070 = vpack.c.b16 %v3375, %v3370
        %v4071 = vpack.c.b16 %v3376, %v3371
        %v4072 = vpack.c.b16 %v3382, %v3377
        %v4073 = vpack.c.b16 %v3383, %v3378
        %v4074 = vpack.c.b16 %v3384, %v3379
        %v4075 = vpack.c.b16 %v3385, %v3380
        %v4076 = vpack.c.b16 %v3386, %v3381
        %v4077 = vpack.c.b16 %v3392, %v3387
        %v4078 = vpack.c.b16 %v3393, %v3388
        %v4079 = vpack.c.b16 %v3394, %v3389
        %v4080 = vpack.c.b16 %v3395, %v3390
        %v4081 = vpack.c.b16 %v3396, %v3391
        %v4082 = vpack.c.b16 %v3402, %v3397
        %v4083 = vpack.c.b16 %v3403, %v3398
        %v4084 = vpack.c.b16 %v3404, %v3399
        %v4085 = vpack.c.b16 %v3405, %v3400
        %v4086 = vpack.c.b16 %v3406, %v3401
        %v4087 = vpack.c.b16 %v3412, %v3407
        %v4088 = vpack.c.b16 %v3413, %v3408
        %v4089 = vpack.c.b16 %v3414, %v3409
        %v4090 = vpack.c.b16 %v3415, %v3410
        %v4091 = vpack.c.b16 %v3416, %v3411
        %v4092 = vpack.c.b16 %v3422, %v3417
        %v4093 = vpack.c.b16 %v3423, %v3418
        %v4094 = vpack.c.b16 %v3424, %v3419
        %v4095 = vpack.c.b16 %v3425, %v3420
        %v4096 = vpack.c.b16 %v3426, %v3421
        %v4097 = vpack.c.b16 %v3432, %v3427
        %v4098 = vpack.c.b16 %v3433, %v3428
        %v4099 = vpack.c.b16 %v3434, %v3429
        %v4100 = vpack.c.b16 %v3435, %v3430
        %v4101 = vpack.c.b16 %v3436, %v3431
        %v4102 = vpack.c.b16 %v3442, %v3437
        %v4103 = vpack.c.b16 %v3443, %v3438
        %v4104 = vpack.c.b16 %v3444, %v3439
        %v4105 = vpack.c.b16 %v3445, %v3440
        %v4106 = vpack.c.b16 %v3446, %v3441
        %v4107 = vpack.c.b16 %v3452, %v3447
        %v4108 = vpack.c.b16 %v3453, %v3448
        %v4109 = vpack.c.b16 %v3454, %v3449
        %v4110 = vpack.c.b16 %v3455, %v3450
        %v4111 = vpack.c.b16 %v3456, %v3451
        %v4112 = vpack.c.b16 %v3462, %v3457
        %v4113 = vpack.c.b16 %v3463, %v3458
        %v4114 = vpack.c.b16 %v3464, %v3459
        %v4115 = vpack.c.b16 %v3465, %v3460
        %v4116 = vpack.c.b16 %v3466, %v3461
        %v4117 = vpack.c.b16 %v3472, %v3467
        %v4118 = vpack.c.b16 %v3473, %v3468
        %v4119 = vpack.c.b16 %v3474, %v3469
        %v4120 = vpack.c.b16 %v3475, %v3470
        %v4121 = vpack.c.b16 %v3476, %v3471
        %v4122 = vpack.c.b16 %v3482, %v3477
        %v4123 = vpack.c.b16 %v3483, %v3478
        %v4124 = vpack.c.b16 %v3484, %v3479
        %v4125 = vpack.c.b16 %v3485, %v3480
        %v4126 = vpack.c.b16 %v3486, %v3481
        %v4127 = vpack.c.b16 %v3492, %v3487
        %v4128 = vpack.c.b16 %v3493, %v3488
        %v4129 = vpack.c.b16 %v3494, %v3489
        %v4130 = vpack.c.b16 %v3495, %v3490
        %v4131 = vpack.c.b16 %v3496, %v3491
        %v4132 = vpack.c.b16 %v3502, %v3497
        %v4133 = vpack.c.b16 %v3503, %v3498
        %v4134 = vpack.c.b16 %v3504, %v3499
        %v4135 = vpack.c.b16 %v3505, %v3500
        %v4136 = vpack.c.b16 %v3506, %v3501
        %v4137 = vpack.c.b16 %v3512, %v3507
        %v4138 = vpack.c.b16 %v3513, %v3508
        %v4139 = vpack.c.b16 %v3514, %v3509
        %v4140 = vpack.c.b16 %v3515, %v3510
        %v4141 = vpack.c.b16 %v3516, %v3511
        %v4142 = vpack.c.b16 %v3522, %v3517
        %v4143 = vpack.c.b16 %v3523, %v3518
        %v4144 = vpack.c.b16 %v3524, %v3519
        %v4145 = vpack.c.b16 %v3525, %v3520
        %v4146 = vpack.c.b16 %v3526, %v3521
        %v4147 = vpack.c.b16 %v3532, %v3527
        %v4148 = vpack.c.b16 %v3533, %v3528
        %v4149 = vpack.c.b16 %v3534, %v3529
        %v4150 = vpack.c.b16 %v3535, %v3530
        %v4151 = vpack.c.b16 %v3536, %v3531
        %v4152 = vpack.c.b16 %v3542, %v3537
        %v4153 = vpack.c.b16 %v3543, %v3538
        %v4154 = vpack.c.b16 %v3544, %v3539
        %v4155 = vpack.c.b16 %v3545, %v3540
        %v4156 = vpack.c.b16 %v3546, %v3541
        %v4157 = vpack.c.b16 %v3552, %v3547
        %v4158 = vpack.c.b16 %v3553, %v3548
        %v4159 = vpack.c.b16 %v3554, %v3549
        %v4160 = vpack.c.b16 %v3555, %v3550
        %v4161 = vpack.c.b16 %v3556, %v3551
        %v4162 = vpack.c.b16 %v3562, %v3557
        %v4163 = vpack.c.b16 %v3563, %v3558
        %v4164 = vpack.c.b16 %v3564, %v3559
        %v4165 = vpack.c.b16 %v3565, %v3560
        %v4166 = vpack.c.b16 %v3566, %v3561
        %v4167 = vpack.c.b16 %v3572, %v3567
        %v4168 = vpack.c.b16 %v3573, %v3568
        %v4169 = vpack.c.b16 %v3574, %v3569
        %v4170 = vpack.c.b16 %v3575, %v3570
        %v4171 = vpack.c.b16 %v3576, %v3571
        %v4172 = vpack.c.b16 %v3582, %v3577
        %v4173 = vpack.c.b16 %v3583, %v3578
        %v4174 = vpack.c.b16 %v3584, %v3579
        %v4175 = vpack.c.b16 %v3585, %v3580
        %v4176 = vpack.c.b16 %v3586, %v3581
        %v4177 = vpack.c.b16 %v3592, %v3587
        %v4178 = vpack.c.b16 %v3593, %v3588
        %v4179 = vpack.c.b16 %v3594, %v3589
        %v4180 = vpack.c.b16 %v3595, %v3590
        %v4181 = vpack.c.b16 %v3596, %v3591
        %v4182 = vpack.c.b16 %v3602, %v3597
        %v4183 = vpack.c.b16 %v3603, %v3598
        %v4184 = vpack.c.b16 %v3604, %v3599
        %v4185 = vpack.c.b16 %v3605, %v3600
        %v4186 = vpack.c.b16 %v3606, %v3601
        %v4187 = vpack.c.b16 %v3612, %v3607
        %v4188 = vpack.c.b16 %v3613, %v3608
        %v4189 = vpack.c.b16 %v3614, %v3609
        %v4190 = vpack.c.b16 %v3615, %v3610
        %v4191 = vpack.c.b16 %v3616, %v3611
        %v4192 = vpack.c.b16 %v3622, %v3617
        %v4193 = vpack.c.b16 %v3623, %v3618
        %v4194 = vpack.c.b16 %v3624, %v3619
        %v4195 = vpack.c.b16 %v3625, %v3620
        %v4196 = vpack.c.b16 %v3626, %v3621
        %v4197 = vpack.c.b16 %v3632, %v3627
        %v4198 = vpack.c.b16 %v3633, %v3628
        %v4199 = vpack.c.b16 %v3634, %v3629
        %v4200 = vpack.c.b16 %v3635, %v3630
        %v4201 = vpack.c.b16 %v3636, %v3631
        %v4202 = vpack.c.b16 %v3642, %v3637
        %v4203 = vpack.c.b16 %v3643, %v3638
        %v4204 = vpack.c.b16 %v3644, %v3639
        %v4205 = vpack.c.b16 %v3645, %v3640
        %v4206 = vpack.c.b16 %v3646, %v3641
        %v4207 = vpack.c.b16 %v3652, %v3647
        %v4208 = vpack.c.b16 %v3653, %v3648
        %v4209 = vpack.c.b16 %v3654, %v3649
        %v4210 = vpack.c.b16 %v3655, %v3650
        %v4211 = vpack.c.b16 %v3656, %v3651
        %v4212 = vpack.c.b16 %v3662, %v3657
        %v4213 = vpack.c.b16 %v3663, %v3658
        %v4214 = vpack.c.b16 %v3664, %v3659
        %v4215 = vpack.c.b16 %v3665, %v3660
        %v4216 = vpack.c.b16 %v3666, %v3661
        %v4217 = vpack.c.b16 %v3672, %v3667
        %v4218 = vpack.c.b16 %v3673, %v3668
        %v4219 = vpack.c.b16 %v3674, %v3669
        %v4220 = vpack.c.b16 %v3675, %v3670
        %v4221 = vpack.c.b16 %v3676, %v3671
        %v4222 = vpack.c.b16 %v3682, %v3677
        %v4223 = vpack.c.b16 %v3683, %v3678
        %v4224 = vpack.c.b16 %v3684, %v3679
        %v4225 = vpack.c.b16 %v3685, %v3680
        %v4226 = vpack.c.b16 %v3686, %v3681
        %v4227 = vpack.c.b16 %v3692, %v3687
        %v4228 = vpack.c.b16 %v3693, %v3688
        %v4229 = vpack.c.b16 %v3694, %v3689
        %v4230 = vpack.c.b16 %v3695, %v3690
        %v4231 = vpack.c.b16 %v3696, %v3691
        %v4232 = vpack.c.b16 %v3702, %v3697
        %v4233 = vpack.c.b16 %v3703, %v3698
        %v4234 = vpack.c.b16 %v3704, %v3699
        %v4235 = vpack.c.b16 %v3705, %v3700
        %v4236 = vpack.c.b16 %v3706, %v3701
        %v4237 = vpack.c.b16 %v3712, %v3707
        %v4238 = vpack.c.b16 %v3713, %v3708
        %v4239 = vpack.c.b16 %v3714, %v3709
        %v4240 = vpack.c.b16 %v3715, %v3710
        %v4241 = vpack.c.b16 %v3716, %v3711
        %v4242 = vpack.c.b16 %v3722, %v3717
        %v4243 = vpack.c.b16 %v3723, %v3718
        %v4244 = vpack.c.b16 %v3724, %v3719
        %v4245 = vpack.c.b16 %v3725, %v3720
        %v4246 = vpack.c.b16 %v3726, %v3721
        %v4247 = vpack.c.b16 %v3732, %v3727
        %v4248 = vpack.c.b16 %v3733, %v3728
        %v4249 = vpack.c.b16 %v3734, %v3729
        %v4250 = vpack.c.b16 %v3735, %v3730
        %v4251 = vpack.c.b16 %v3736, %v3731
        %v4252 = vpack.c.b16 %v3742, %v3737
        %v4253 = vpack.c.b16 %v3743, %v3738
        %v4254 = vpack.c.b16 %v3744, %v3739
        %v4255 = vpack.c.b16 %v3745, %v3740
        %v4256 = vpack.c.b16 %v3746, %v3741
        %v4257 = vpack.c.b16 %v3752, %v3747
        %v4258 = vpack.c.b16 %v3753, %v3748
        %v4259 = vpack.c.b16 %v3754, %v3749
        %v4260 = vpack.c.b16 %v3755, %v3750
        %v4261 = vpack.c.b16 %v3756, %v3751
        %v4262 = vpack.c.b16 %v3762, %v3757
        %v4263 = vpack.c.b16 %v3763, %v3758
        %v4264 = vpack.c.b16 %v3764, %v3759
        %v4265 = vpack.c.b16 %v3765, %v3760
        %v4266 = vpack.c.b16 %v3766, %v3761
        %v4267 = vpack.c.b16 %v3772, %v3767
        %v4268 = vpack.c.b16 %v3773, %v3768
        %v4269 = vpack.c.b16 %v3774, %v3769
        %v4270 = vpack.c.b16 %v3775, %v3770
        %v4271 = vpack.c.b16 %v3776, %v3771
        %v4272 = vpack.c.b16 %v3782, %v3777
        %v4273 = vpack.c.b16 %v3783, %v3778
        %v4274 = vpack.c.b16 %v3784, %v3779
        %v4275 = vpack.c.b16 %v3785, %v3780
        %v4276 = vpack.c.b16 %v3786, %v3781
        %v4277 = vpack.c.b16 %v3792, %v3787
        %v4278 = vpack.c.b16 %v3793, %v3788
        %v4279 = vpack.c.b16 %v3794, %v3789
        %v4280 = vpack.c.b16 %v3795, %v3790
        %v4281 = vpack.c.b16 %v3796, %v3791
        %v4282 = vpack.c.b16 %v3802, %v3797
        %v4283 = vpack.c.b16 %v3803, %v3798
        %v4284 = vpack.c.b16 %v3804, %v3799
        %v4285 = vpack.c.b16 %v3805, %v3800
        %v4286 = vpack.c.b16 %v3806, %v3801
        %v4287 = vpack.c.b16 %v3812, %v3807
        %v4288 = vpack.c.b16 %v3813, %v3808
        %v4289 = vpack.c.b16 %v3814, %v3809
        %v4290 = vpack.c.b16 %v3815, %v3810
        %v4291 = vpack.c.b16 %v3816, %v3811
        %v4292 = vpack.c.b16 %v3822, %v3817
        %v4293 = vpack.c.b16 %v3823, %v3818
        %v4294 = vpack.c.b16 %v3824, %v3819
        %v4295 = vpack.c.b16 %v3825, %v3820
        %v4296 = vpack.c.b16 %v3826, %v3821
        %v4297 = vpack.c.b16 %v3832, %v3827
        %v4298 = vpack.c.b16 %v3833, %v3828
        %v4299 = vpack.c.b16 %v3834, %v3829
        %v4300 = vpack.c.b16 %v3835, %v3830
        %v4301 = vpack.c.b16 %v3836, %v3831
        %v4302 = vpack.c.b16 %v3842, %v3837
        %v4303 = vpack.c.b16 %v3843, %v3838
        %v4304 = vpack.c.b16 %v3844, %v3839
        %v4305 = vpack.c.b16 %v3845, %v3840
        %v4306 = vpack.c.b16 %v3846, %v3841
        %v4307 = vpack.c.b16 %v3852, %v3847
        %v4308 = vpack.c.b16 %v3853, %v3848
        %v4309 = vpack.c.b16 %v3854, %v3849
        %v4310 = vpack.c.b16 %v3855, %v3850
        %v4311 = vpack.c.b16 %v3856, %v3851
        %v4312 = vpack.c.b16 %v3862, %v3857
        %v4313 = vpack.c.b16 %v3863, %v3858
        %v4314 = vpack.c.b16 %v3864, %v3859
        %v4315 = vpack.c.b16 %v3865, %v3860
        %v4316 = vpack.c.b16 %v3866, %v3861
        %v4317 = vpack.c.b16 %v3872, %v3867
        %v4318 = vpack.c.b16 %v3873, %v3868
        %v4319 = vpack.c.b16 %v3874, %v3869
        %v4320 = vpack.c.b16 %v3875, %v3870
        %v4321 = vpack.c.b16 %v3876, %v3871
        %v4322 = vpack.c.b16 %v3882, %v3877
        %v4323 = vpack.c.b16 %v3883, %v3878
        %v4324 = vpack.c.b16 %v3884, %v3879
        %v4325 = vpack.c.b16 %v3885, %v3880
        %v4326 = vpack.c.b16 %v3886, %v3881
        %v4327 = vpack.c.b16 %v3892, %v3887
        %v4328 = vpack.c.b16 %v3893, %v3888
        %v4329 = vpack.c.b16 %v3894, %v3889
        %v4330 = vpack.c.b16 %v3895, %v3890
        %v4331 = vpack.c.b16 %v3896, %v3891
        %v4332 = vpack.c.b16 %v3902, %v3897
        %v4333 = vpack.c.b16 %v3903, %v3898
        %v4334 = vpack.c.b16 %v3904, %v3899
        %v4335 = vpack.c.b16 %v3905, %v3900
        %v4336 = vpack.c.b16 %v3906, %v3901
        %v4337 = vpack.c.b16 %v3912, %v3907
        %v4338 = vpack.c.b16 %v3913, %v3908
        %v4339 = vpack.c.b16 %v3914, %v3909
        %v4340 = vpack.c.b16 %v3915, %v3910
        %v4341 = vpack.c.b16 %v3916, %v3911
        %v4342 = vpack.c.b16 %v3922, %v3917
        %v4343 = vpack.c.b16 %v3923, %v3918
        %v4344 = vpack.c.b16 %v3924, %v3919
        %v4345 = vpack.c.b16 %v3925, %v3920
        %v4346 = vpack.c.b16 %v3926, %v3921
        %v4347 = vpack.c.b16 %v3932, %v3927
        %v4348 = vpack.c.b16 %v3933, %v3928
        %v4349 = vpack.c.b16 %v3934, %v3929
        %v4350 = vpack.c.b16 %v3935, %v3930
        %v4351 = vpack.c.b16 %v3936, %v3931
        %v4352 = vpack.c.b16 %v3942, %v3937
        %v4353 = vpack.c.b16 %v3943, %v3938
        %v4354 = vpack.c.b16 %v3944, %v3939
        %v4355 = vpack.c.b16 %v3945, %v3940
        %v4356 = vpack.c.b16 %v3946, %v3941
        %v4357 = vpack.c.b16 %v3952, %v3947
        %v4358 = vpack.c.b16 %v3953, %v3948
        %v4359 = vpack.c.b16 %v3954, %v3949
        %v4360 = vpack.c.b16 %v3955, %v3950
        %v4361 = vpack.c.b16 %v3956, %v3951
        %v4362 = vpack.c.b16 %v3962, %v3957
        %v4363 = vpack.c.b16 %v3963, %v3958
        %v4364 = vpack.c.b16 %v3964, %v3959
        %v4365 = vpack.c.b16 %v3965, %v3960
        %v4366 = vpack.c.b16 %v3966, %v3961
        %4767 = vmatprep.subr.bf16.mxu0 %v3968
        %4768 = vmatpush1.bf16.msra.mxu0 %v3967
        %4769 = vmatprep.subr.bf16.mxu0 %v3973
        %4770 = vmatpush1.bf16.msra.mxu0 %v3972
        %4771 = vmatprep.subr.bf16.mxu0 %v3978
        %4772 = vmatpush1.bf16.msra.mxu0 %v3977
        %4773 = vmatprep.subr.bf16.mxu0 %v3983
        %4774 = vmatpush1.bf16.msra.mxu0 %v3982
        %4775 = vmatprep.subr.bf16.mxu0 %v3988
        %4776 = vmatpush1.bf16.msra.mxu0 %v3987
        %4777 = vmatprep.subr.bf16.mxu0 %v3993
        %4778 = vmatpush1.bf16.msra.mxu0 %v3992
        %4779 = vmatprep.subr.bf16.mxu0 %v3998
        %4780 = vmatpush1.bf16.msra.mxu0 %v3997
        %4781 = vmatprep.subr.bf16.mxu0 %v4003
        %4782 = vmatpush1.bf16.msra.mxu0 %v4002
        %4783 = vmatprep.subr.bf16.mxu0 %v4008
        %4784 = vmatpush1.bf16.msra.mxu0 %v4007
        %4785 = vmatprep.subr.bf16.mxu0 %v4013
        %4786 = vmatpush1.bf16.msra.mxu0 %v4012
        %4787 = vmatprep.subr.bf16.mxu0 %v4018
        %4788 = vmatpush1.bf16.msra.mxu0 %v4017
        %4789 = vmatprep.subr.bf16.mxu0 %v4023
        %4790 = vmatpush1.bf16.msra.mxu0 %v4022
        %4791 = vmatprep.subr.bf16.mxu0 %v4028
        %4792 = vmatpush1.bf16.msra.mxu0 %v4027
        %4793 = vmatprep.subr.bf16.mxu0 %v4033
        %4794 = vmatpush1.bf16.msra.mxu0 %v4032
        %4795 = vmatprep.subr.bf16.mxu0 %v4038
        %4796 = vmatpush1.bf16.msra.mxu0 %v4037
        %4797 = vmatprep.subr.bf16.mxu0 %v4043
        %4798 = vmatpush1.bf16.msra.mxu0 %v4042
        %4799 = vmatprep.mubr.bf16.mxu0 %v2668
        %4800 = vmatmul.mubr.bf16.gmra.mrb[0].mxu0 %v2667
        %v4801 = vpop.f32.mrb[0].mxu0
        %v4802 = vadd.f32 %v2630, %v4801
        %v4803 = vpop.f32.mrb[0].mxu0
        %v4804 = vadd.f32 %v2634, %v4803
        %v4805 = vpop.f32.mrb[0].mxu0
        %v4806 = vpop.f32.mrb[0].mxu0
        %4807 = vdwg.mxu0
        %4808 = vmatprep.subr.bf16.mxu0 %v4048
        %4809 = vmatpush1.bf16.msra.mxu0 %v4047
        %4810 = vmatprep.subr.bf16.mxu0 %v4053
        %4811 = vmatpush1.bf16.msra.mxu0 %v4052
        %4812 = vmatprep.subr.bf16.mxu0 %v4058
        %4813 = vmatpush1.bf16.msra.mxu0 %v4057
        %4814 = vmatprep.subr.bf16.mxu0 %v4063
        %4815 = vmatpush1.bf16.msra.mxu0 %v4062
        %4816 = vmatprep.subr.bf16.mxu0 %v4068
        %4817 = vmatpush1.bf16.msra.mxu0 %v4067
        %4818 = vmatprep.subr.bf16.mxu0 %v4073
        %4819 = vmatpush1.bf16.msra.mxu0 %v4072
        %4820 = vmatprep.subr.bf16.mxu0 %v4078
        %4821 = vmatpush1.bf16.msra.mxu0 %v4077
        %4822 = vmatprep.subr.bf16.mxu0 %v4083
        %4823 = vmatpush1.bf16.msra.mxu0 %v4082
        %4824 = vmatprep.subr.bf16.mxu0 %v4088
        %4825 = vmatpush1.bf16.msra.mxu0 %v4087
        %4826 = vmatprep.subr.bf16.mxu0 %v4093
        %4827 = vmatpush1.bf16.msra.mxu0 %v4092
        %4828 = vmatprep.subr.bf16.mxu0 %v4098
        %4829 = vmatpush1.bf16.msra.mxu0 %v4097
        %4830 = vmatprep.subr.bf16.mxu0 %v4103
        %4831 = vmatpush1.bf16.msra.mxu0 %v4102
        %4832 = vmatprep.subr.bf16.mxu0 %v4108
        %4833 = vmatpush1.bf16.msra.mxu0 %v4107
        %4834 = vmatprep.subr.bf16.mxu0 %v4113
        %4835 = vmatpush1.bf16.msra.mxu0 %v4112
        %4836 = vmatprep.subr.bf16.mxu0 %v4118
        %4837 = vmatpush1.bf16.msra.mxu0 %v4117
        %4838 = vmatprep.subr.bf16.mxu0 %v4123
        %4839 = vmatpush1.bf16.msra.mxu0 %v4122
        %4840 = vmatprep.mubr.bf16.mxu0 %v2670
        %4841 = vmatmul.mubr.bf16.gmra.mrb[0].mxu0 %v2669
        %v4842 = vpop.f32.mrb[0].mxu0
        %v4843 = vadd.f32 %v4802, %v4842
        %v4844 = vpop.f32.mrb[0].mxu0
        %v4845 = vadd.f32 %v4804, %v4844
        %v4846 = vpop.f32.mrb[0].mxu0
        %v4847 = vpop.f32.mrb[0].mxu0
        %4848 = vdwg.mxu0
        %4849 = vmatprep.subr.bf16.mxu0 %v4128
        %4850 = vmatpush1.bf16.msra.mxu0 %v4127
        %4851 = vmatprep.subr.bf16.mxu0 %v4133
        %4852 = vmatpush1.bf16.msra.mxu0 %v4132
        %4853 = vmatprep.subr.bf16.mxu0 %v4138
        %4854 = vmatpush1.bf16.msra.mxu0 %v4137
        %4855 = vmatprep.subr.bf16.mxu0 %v4143
        %4856 = vmatpush1.bf16.msra.mxu0 %v4142
        %4857 = vmatprep.subr.bf16.mxu0 %v4148
        %4858 = vmatpush1.bf16.msra.mxu0 %v4147
        %4859 = vmatprep.subr.bf16.mxu0 %v4153
        %4860 = vmatpush1.bf16.msra.mxu0 %v4152
        %4861 = vmatprep.subr.bf16.mxu0 %v4158
        %4862 = vmatpush1.bf16.msra.mxu0 %v4157
        %4863 = vmatprep.subr.bf16.mxu0 %v4163
        %4864 = vmatpush1.bf16.msra.mxu0 %v4162
        %4865 = vmatprep.subr.bf16.mxu0 %v4168
        %4866 = vmatpush1.bf16.msra.mxu0 %v4167
        %4867 = vmatprep.subr.bf16.mxu0 %v4173
        %4868 = vmatpush1.bf16.msra.mxu0 %v4172
        %4869 = vmatprep.subr.bf16.mxu0 %v4178
        %4870 = vmatpush1.bf16.msra.mxu0 %v4177
        %4871 = vmatprep.subr.bf16.mxu0 %v4183
        %4872 = vmatpush1.bf16.msra.mxu0 %v4182
        %4873 = vmatprep.subr.bf16.mxu0 %v4188
        %4874 = vmatpush1.bf16.msra.mxu0 %v4187
        %4875 = vmatprep.subr.bf16.mxu0 %v4193
        %4876 = vmatpush1.bf16.msra.mxu0 %v4192
        %4877 = vmatprep.subr.bf16.mxu0 %v4198
        %4878 = vmatpush1.bf16.msra.mxu0 %v4197
        %4879 = vmatprep.subr.bf16.mxu0 %v4203
        %4880 = vmatpush1.bf16.msra.mxu0 %v4202
        %4881 = vmatprep.mubr.bf16.mxu0 %v2672
        %4882 = vmatmul.mubr.bf16.gmra.mrb[0].mxu0 %v2671
        %v4883 = vpop.f32.mrb[0].mxu0
        %v4884 = vadd.f32 %v4843, %v4883
        %v4885 = vpop.f32.mrb[0].mxu0
        %v4886 = vadd.f32 %v4845, %v4885
        %v4887 = vpop.f32.mrb[0].mxu0
        %v4888 = vpop.f32.mrb[0].mxu0
        %4889 = vdwg.mxu0
        %4890 = vmatprep.subr.bf16.mxu0 %v4208
        %4891 = vmatpush1.bf16.msra.mxu0 %v4207
        %4892 = vmatprep.subr.bf16.mxu0 %v4213
        %4893 = vmatpush1.bf16.msra.mxu0 %v4212
        %4894 = vmatprep.subr.bf16.mxu0 %v4218
        %4895 = vmatpush1.bf16.msra.mxu0 %v4217
        %4896 = vmatprep.subr.bf16.mxu0 %v4223
        %4897 = vmatpush1.bf16.msra.mxu0 %v4222
        %4898 = vmatprep.subr.bf16.mxu0 %v4228
        %4899 = vmatpush1.bf16.msra.mxu0 %v4227
        %4900 = vmatprep.subr.bf16.mxu0 %v4233
        %4901 = vmatpush1.bf16.msra.mxu0 %v4232
        %4902 = vmatprep.subr.bf16.mxu0 %v4238
        %4903 = vmatpush1.bf16.msra.mxu0 %v4237
        %4904 = vmatprep.subr.bf16.mxu0 %v4243
        %4905 = vmatpush1.bf16.msra.mxu0 %v4242
        %4906 = vmatprep.subr.bf16.mxu0 %v4248
        %4907 = vmatpush1.bf16.msra.mxu0 %v4247
        %4908 = vmatprep.subr.bf16.mxu0 %v4253
        %4909 = vmatpush1.bf16.msra.mxu0 %v4252
        %4910 = vmatprep.subr.bf16.mxu0 %v4258
        %4911 = vmatpush1.bf16.msra.mxu0 %v4257
        %4912 = vmatprep.subr.bf16.mxu0 %v4263
        %4913 = vmatpush1.bf16.msra.mxu0 %v4262
        %4914 = vmatprep.subr.bf16.mxu0 %v4268
        %4915 = vmatpush1.bf16.msra.mxu0 %v4267
        %4916 = vmatprep.subr.bf16.mxu0 %v4273
        %4917 = vmatpush1.bf16.msra.mxu0 %v4272
        %4918 = vmatprep.subr.bf16.mxu0 %v4278
        %4919 = vmatpush1.bf16.msra.mxu0 %v4277
        %4920 = vmatprep.subr.bf16.mxu0 %v4283
        %4921 = vmatpush1.bf16.msra.mxu0 %v4282
        %4922 = vmatprep.mubr.bf16.mxu0 %v2674
        %4923 = vmatmul.mubr.bf16.gmra.mrb[0].mxu0 %v2673
        %v4924 = vpop.f32.mrb[0].mxu0
        %v4925 = vadd.f32 %v4884, %v4924
        %v4926 = vpop.f32.mrb[0].mxu0
        %v4927 = vadd.f32 %v4886, %v4926
        %v4928 = vpop.f32.mrb[0].mxu0
        %v4929 = vpop.f32.mrb[0].mxu0
        %4930 = vdwg.mxu0
        %4931 = vmatprep.subr.bf16.mxu0 %v4288
        %4932 = vmatpush1.bf16.msra.mxu0 %v4287
        %4933 = vmatprep.subr.bf16.mxu0 %v4293
        %4934 = vmatpush1.bf16.msra.mxu0 %v4292
        %4935 = vmatprep.subr.bf16.mxu0 %v4298
        %4936 = vmatpush1.bf16.msra.mxu0 %v4297
        %4937 = vmatprep.subr.bf16.mxu0 %v4303
        %4938 = vmatpush1.bf16.msra.mxu0 %v4302
        %4939 = vmatprep.subr.bf16.mxu0 %v4308
        %4940 = vmatpush1.bf16.msra.mxu0 %v4307
        %4941 = vmatprep.subr.bf16.mxu0 %v4313
        %4942 = vmatpush1.bf16.msra.mxu0 %v4312
        %4943 = vmatprep.subr.bf16.mxu0 %v4318
        %4944 = vmatpush1.bf16.msra.mxu0 %v4317
        %4945 = vmatprep.subr.bf16.mxu0 %v4323
        %4946 = vmatpush1.bf16.msra.mxu0 %v4322
        %4947 = vmatprep.subr.bf16.mxu0 %v4328
        %4948 = vmatpush1.bf16.msra.mxu0 %v4327
        %4949 = vmatprep.subr.bf16.mxu0 %v4333
        %4950 = vmatpush1.bf16.msra.mxu0 %v4332
        %4951 = vmatprep.subr.bf16.mxu0 %v4338
        %4952 = vmatpush1.bf16.msra.mxu0 %v4337
        %4953 = vmatprep.subr.bf16.mxu0 %v4343
        %4954 = vmatpush1.bf16.msra.mxu0 %v4342
        %4955 = vmatprep.subr.bf16.mxu0 %v4348
        %4956 = vmatpush1.bf16.msra.mxu0 %v4347
        %4957 = vmatprep.subr.bf16.mxu0 %v4353
        %4958 = vmatpush1.bf16.msra.mxu0 %v4352
        %4959 = vmatprep.subr.bf16.mxu0 %v4358
        %4960 = vmatpush1.bf16.msra.mxu0 %v4357
        %4961 = vmatprep.subr.bf16.mxu0 %v4363
        %4962 = vmatpush1.bf16.msra.mxu0 %v4362
        %4963 = vmatprep.mubr.bf16.mxu0 %v2676
        %4964 = vmatmul.mubr.bf16.gmra.mrb[0].mxu0 %v2675
        %v4965 = vpop.f32.mrb[0].mxu0
        %v4966 = vadd.f32 %v4925, %v4965
        %v4967 = vpop.f32.mrb[0].mxu0
        %v4968 = vadd.f32 %v4927, %v4967
        %v4969 = vpop.f32.mrb[0].mxu0
        %v4970 = vpop.f32.mrb[0].mxu0
        %4971 = vdwg.mxu0
        %4972 = vmatprep.subr.bf16.mxu0 %v3970
        %4973 = vmatpush1.bf16.msra.mxu0 %v3969
        %4974 = vmatprep.subr.bf16.mxu0 %v3975
        %4975 = vmatpush1.bf16.msra.mxu0 %v3974
        %4976 = vmatprep.subr.bf16.mxu0 %v3980
        %4977 = vmatpush1.bf16.msra.mxu0 %v3979
        %4978 = vmatprep.subr.bf16.mxu0 %v3985
        %4979 = vmatpush1.bf16.msra.mxu0 %v3984
        %4980 = vmatprep.subr.bf16.mxu0 %v3990
        %4981 = vmatpush1.bf16.msra.mxu0 %v3989
        %4982 = vmatprep.subr.bf16.mxu0 %v3995
        %4983 = vmatpush1.bf16.msra.mxu0 %v3994
        %4984 = vmatprep.subr.bf16.mxu0 %v4000
        %4985 = vmatpush1.bf16.msra.mxu0 %v3999
        %4986 = vmatprep.subr.bf16.mxu0 %v4005
        %4987 = vmatpush1.bf16.msra.mxu0 %v4004
        %4988 = vmatprep.subr.bf16.mxu0 %v4010
        %4989 = vmatpush1.bf16.msra.mxu0 %v4009
        %4990 = vmatprep.subr.bf16.mxu0 %v4015
        %4991 = vmatpush1.bf16.msra.mxu0 %v4014
        %4992 = vmatprep.subr.bf16.mxu0 %v4020
        %4993 = vmatpush1.bf16.msra.mxu0 %v4019
        %4994 = vmatprep.subr.bf16.mxu0 %v4025
        %4995 = vmatpush1.bf16.msra.mxu0 %v4024
        %4996 = vmatprep.subr.bf16.mxu0 %v4030
        %4997 = vmatpush1.bf16.msra.mxu0 %v4029
        %4998 = vmatprep.subr.bf16.mxu0 %v4035
        %4999 = vmatpush1.bf16.msra.mxu0 %v4034
        %5000 = vmatprep.subr.bf16.mxu0 %v4040
        %5001 = vmatpush1.bf16.msra.mxu0 %v4039
        %5002 = vmatprep.subr.bf16.mxu0 %v4045
        %5003 = vmatpush1.bf16.msra.mxu0 %v4044
        %5004 = vmatprep.mubr.bf16.mxu0 %v2668
        %5005 = vmatmul.mubr.bf16.gmra.mrb[0].mxu0 %v2667
        %v5006 = vpop.f32.mrb[0].mxu0
        %v5007 = vadd.f32 %v2638, %v5006
        %v5008 = vpop.f32.mrb[0].mxu0
        %v5009 = vadd.f32 %v2642, %v5008
        %v5010 = vpop.f32.mrb[0].mxu0
        %v5011 = vpop.f32.mrb[0].mxu0
        %5012 = vdwg.mxu0
        %5013 = vmatprep.subr.bf16.mxu0 %v4050
        %5014 = vmatpush1.bf16.msra.mxu0 %v4049
        %5015 = vmatprep.subr.bf16.mxu0 %v4055
        %5016 = vmatpush1.bf16.msra.mxu0 %v4054
        %5017 = vmatprep.subr.bf16.mxu0 %v4060
        %5018 = vmatpush1.bf16.msra.mxu0 %v4059
        %5019 = vmatprep.subr.bf16.mxu0 %v4065
        %5020 = vmatpush1.bf16.msra.mxu0 %v4064
        %5021 = vmatprep.subr.bf16.mxu0 %v4070
        %5022 = vmatpush1.bf16.msra.mxu0 %v4069
        %5023 = vmatprep.subr.bf16.mxu0 %v4075
        %5024 = vmatpush1.bf16.msra.mxu0 %v4074
        %5025 = vmatprep.subr.bf16.mxu0 %v4080
        %5026 = vmatpush1.bf16.msra.mxu0 %v4079
        %5027 = vmatprep.subr.bf16.mxu0 %v4085
        %5028 = vmatpush1.bf16.msra.mxu0 %v4084
        %5029 = vmatprep.subr.bf16.mxu0 %v4090
        %5030 = vmatpush1.bf16.msra.mxu0 %v4089
        %5031 = vmatprep.subr.bf16.mxu0 %v4095
        %5032 = vmatpush1.bf16.msra.mxu0 %v4094
        %5033 = vmatprep.subr.bf16.mxu0 %v4100
        %5034 = vmatpush1.bf16.msra.mxu0 %v4099
        %5035 = vmatprep.subr.bf16.mxu0 %v4105
        %5036 = vmatpush1.bf16.msra.mxu0 %v4104
        %5037 = vmatprep.subr.bf16.mxu0 %v4110
        %5038 = vmatpush1.bf16.msra.mxu0 %v4109
        %5039 = vmatprep.subr.bf16.mxu0 %v4115
        %5040 = vmatpush1.bf16.msra.mxu0 %v4114
        %5041 = vmatprep.subr.bf16.mxu0 %v4120
        %5042 = vmatpush1.bf16.msra.mxu0 %v4119
        %5043 = vmatprep.subr.bf16.mxu0 %v4125
        %5044 = vmatpush1.bf16.msra.mxu0 %v4124
        %5045 = vmatprep.mubr.bf16.mxu0 %v2670
        %5046 = vmatmul.mubr.bf16.gmra.mrb[0].mxu0 %v2669
        %v5047 = vpop.f32.mrb[0].mxu0
        %v5048 = vadd.f32 %v5007, %v5047
        %v5049 = vpop.f32.mrb[0].mxu0
        %v5050 = vadd.f32 %v5009, %v5049
        %v5051 = vpop.f32.mrb[0].mxu0
        %v5052 = vpop.f32.mrb[0].mxu0
        %5053 = vdwg.mxu0
        %5054 = vmatprep.subr.bf16.mxu0 %v4130
        %5055 = vmatpush1.bf16.msra.mxu0 %v4129
        %5056 = vmatprep.subr.bf16.mxu0 %v4135
        %5057 = vmatpush1.bf16.msra.mxu0 %v4134
        %5058 = vmatprep.subr.bf16.mxu0 %v4140
        %5059 = vmatpush1.bf16.msra.mxu0 %v4139
        %5060 = vmatprep.subr.bf16.mxu0 %v4145
        %5061 = vmatpush1.bf16.msra.mxu0 %v4144
        %5062 = vmatprep.subr.bf16.mxu0 %v4150
        %5063 = vmatpush1.bf16.msra.mxu0 %v4149
        %5064 = vmatprep.subr.bf16.mxu0 %v4155
        %5065 = vmatpush1.bf16.msra.mxu0 %v4154
        %5066 = vmatprep.subr.bf16.mxu0 %v4160
        %5067 = vmatpush1.bf16.msra.mxu0 %v4159
        %5068 = vmatprep.subr.bf16.mxu0 %v4165
        %5069 = vmatpush1.bf16.msra.mxu0 %v4164
        %5070 = vmatprep.subr.bf16.mxu0 %v4170
        %5071 = vmatpush1.bf16.msra.mxu0 %v4169
        %5072 = vmatprep.subr.bf16.mxu0 %v4175
        %5073 = vmatpush1.bf16.msra.mxu0 %v4174
        %5074 = vmatprep.subr.bf16.mxu0 %v4180
        %5075 = vmatpush1.bf16.msra.mxu0 %v4179
        %5076 = vmatprep.subr.bf16.mxu0 %v4185
        %5077 = vmatpush1.bf16.msra.mxu0 %v4184
        %5078 = vmatprep.subr.bf16.mxu0 %v4190
        %5079 = vmatpush1.bf16.msra.mxu0 %v4189
        %5080 = vmatprep.subr.bf16.mxu0 %v4195
        %5081 = vmatpush1.bf16.msra.mxu0 %v4194
        %5082 = vmatprep.subr.bf16.mxu0 %v4200
        %5083 = vmatpush1.bf16.msra.mxu0 %v4199
        %5084 = vmatprep.subr.bf16.mxu0 %v4205
        %5085 = vmatpush1.bf16.msra.mxu0 %v4204
        %5086 = vmatprep.mubr.bf16.mxu0 %v2672
        %5087 = vmatmul.mubr.bf16.gmra.mrb[0].mxu0 %v2671
        %v5088 = vpop.f32.mrb[0].mxu0
        %v5089 = vadd.f32 %v5048, %v5088
        %v5090 = vpop.f32.mrb[0].mxu0
        %v5091 = vadd.f32 %v5050, %v5090
        %v5092 = vpop.f32.mrb[0].mxu0
        %v5093 = vpop.f32.mrb[0].mxu0
        %5094 = vdwg.mxu0
        %5095 = vmatprep.subr.bf16.mxu0 %v4210
        %5096 = vmatpush1.bf16.msra.mxu0 %v4209
        %5097 = vmatprep.subr.bf16.mxu0 %v4215
        %5098 = vmatpush1.bf16.msra.mxu0 %v4214
        %5099 = vmatprep.subr.bf16.mxu0 %v4220
        %5100 = vmatpush1.bf16.msra.mxu0 %v4219
        %5101 = vmatprep.subr.bf16.mxu0 %v4225
        %5102 = vmatpush1.bf16.msra.mxu0 %v4224
        %5103 = vmatprep.subr.bf16.mxu0 %v4230
        %5104 = vmatpush1.bf16.msra.mxu0 %v4229
        %5105 = vmatprep.subr.bf16.mxu0 %v4235
        %5106 = vmatpush1.bf16.msra.mxu0 %v4234
        %5107 = vmatprep.subr.bf16.mxu0 %v4240
        %5108 = vmatpush1.bf16.msra.mxu0 %v4239
        %5109 = vmatprep.subr.bf16.mxu0 %v4245
        %5110 = vmatpush1.bf16.msra.mxu0 %v4244
        %5111 = vmatprep.subr.bf16.mxu0 %v4250
        %5112 = vmatpush1.bf16.msra.mxu0 %v4249
        %5113 = vmatprep.subr.bf16.mxu0 %v4255
        %5114 = vmatpush1.bf16.msra.mxu0 %v4254
        %5115 = vmatprep.subr.bf16.mxu0 %v4260
        %5116 = vmatpush1.bf16.msra.mxu0 %v4259
        %5117 = vmatprep.subr.bf16.mxu0 %v4265
        %5118 = vmatpush1.bf16.msra.mxu0 %v4264
        %5119 = vmatprep.subr.bf16.mxu0 %v4270
        %5120 = vmatpush1.bf16.msra.mxu0 %v4269
        %5121 = vmatprep.subr.bf16.mxu0 %v4275
        %5122 = vmatpush1.bf16.msra.mxu0 %v4274
        %5123 = vmatprep.subr.bf16.mxu0 %v4280
        %5124 = vmatpush1.bf16.msra.mxu0 %v4279
        %5125 = vmatprep.subr.bf16.mxu0 %v4285
        %5126 = vmatpush1.bf16.msra.mxu0 %v4284
        %5127 = vmatprep.mubr.bf16.mxu0 %v2674
        %5128 = vmatmul.mubr.bf16.gmra.mrb[0].mxu0 %v2673
        %v5129 = vpop.f32.mrb[0].mxu0
        %v5130 = vadd.f32 %v5089, %v5129
        %v5131 = vpop.f32.mrb[0].mxu0
        %v5132 = vadd.f32 %v5091, %v5131
        %v5133 = vpop.f32.mrb[0].mxu0
        %v5134 = vpop.f32.mrb[0].mxu0
        %5135 = vdwg.mxu0
        %5136 = vmatprep.subr.bf16.mxu0 %v4290
        %5137 = vmatpush1.bf16.msra.mxu0 %v4289
        %5138 = vmatprep.subr.bf16.mxu0 %v4295
        %5139 = vmatpush1.bf16.msra.mxu0 %v4294
        %5140 = vmatprep.subr.bf16.mxu0 %v4300
        %5141 = vmatpush1.bf16.msra.mxu0 %v4299
        %5142 = vmatprep.subr.bf16.mxu0 %v4305
        %5143 = vmatpush1.bf16.msra.mxu0 %v4304
        %5144 = vmatprep.subr.bf16.mxu0 %v4310
        %5145 = vmatpush1.bf16.msra.mxu0 %v4309
        %5146 = vmatprep.subr.bf16.mxu0 %v4315
        %5147 = vmatpush1.bf16.msra.mxu0 %v4314
        %5148 = vmatprep.subr.bf16.mxu0 %v4320
        %5149 = vmatpush1.bf16.msra.mxu0 %v4319
        %5150 = vmatprep.subr.bf16.mxu0 %v4325
        %5151 = vmatpush1.bf16.msra.mxu0 %v4324
        %5152 = vmatprep.subr.bf16.mxu0 %v4330
        %5153 = vmatpush1.bf16.msra.mxu0 %v4329
        %5154 = vmatprep.subr.bf16.mxu0 %v4335
        %5155 = vmatpush1.bf16.msra.mxu0 %v4334
        %5156 = vmatprep.subr.bf16.mxu0 %v4340
        %5157 = vmatpush1.bf16.msra.mxu0 %v4339
        %5158 = vmatprep.subr.bf16.mxu0 %v4345
        %5159 = vmatpush1.bf16.msra.mxu0 %v4344
        %5160 = vmatprep.subr.bf16.mxu0 %v4350
        %5161 = vmatpush1.bf16.msra.mxu0 %v4349
        %5162 = vmatprep.subr.bf16.mxu0 %v4355
        %5163 = vmatpush1.bf16.msra.mxu0 %v4354
        %5164 = vmatprep.subr.bf16.mxu0 %v4360
        %5165 = vmatpush1.bf16.msra.mxu0 %v4359
        %5166 = vmatprep.subr.bf16.mxu0 %v4365
        %5167 = vmatpush1.bf16.msra.mxu0 %v4364
        %5168 = vmatprep.mubr.bf16.mxu0 %v2676
        %5169 = vmatmul.mubr.bf16.gmra.mrb[0].mxu0 %v2675
        %v5170 = vpop.f32.mrb[0].mxu0
        %v5171 = vadd.f32 %v5130, %v5170
        %v5172 = vpop.f32.mrb[0].mxu0
        %v5173 = vadd.f32 %v5132, %v5172
        %v5174 = vpop.f32.mrb[0].mxu0
        %v5175 = vpop.f32.mrb[0].mxu0
        %5176 = vdwg.mxu0
        %5177 = vmatprep.subr.bf16.mxu0 0
        %5178 = vmatpush1.bf16.msra.mxu0 %v3971
        %5179 = vmatprep.subr.bf16.mxu0 0
        %5180 = vmatpush1.bf16.msra.mxu0 %v3976
        %5181 = vmatprep.subr.bf16.mxu0 0
        %5182 = vmatpush1.bf16.msra.mxu0 %v3981
        %5183 = vmatprep.subr.bf16.mxu0 0
        %5184 = vmatpush1.bf16.msra.mxu0 %v3986
        %5185 = vmatprep.subr.bf16.mxu0 0
        %5186 = vmatpush1.bf16.msra.mxu0 %v3991
        %5187 = vmatprep.subr.bf16.mxu0 0
        %5188 = vmatpush1.bf16.msra.mxu0 %v3996
        %5189 = vmatprep.subr.bf16.mxu0 0
        %5190 = vmatpush1.bf16.msra.mxu0 %v4001
        %5191 = vmatprep.subr.bf16.mxu0 0
        %5192 = vmatpush1.bf16.msra.mxu0 %v4006
        %5193 = vmatprep.subr.bf16.mxu0 0
        %5194 = vmatpush1.bf16.msra.mxu0 %v4011
        %5195 = vmatprep.subr.bf16.mxu0 0
        %5196 = vmatpush1.bf16.msra.mxu0 %v4016
        %5197 = vmatprep.subr.bf16.mxu0 0
        %5198 = vmatpush1.bf16.msra.mxu0 %v4021
        %5199 = vmatprep.subr.bf16.mxu0 0
        %5200 = vmatpush1.bf16.msra.mxu0 %v4026
        %5201 = vmatprep.subr.bf16.mxu0 0
        %5202 = vmatpush1.bf16.msra.mxu0 %v4031
        %5203 = vmatprep.subr.bf16.mxu0 0
        %5204 = vmatpush1.bf16.msra.mxu0 %v4036
        %5205 = vmatprep.subr.bf16.mxu0 0
        %5206 = vmatpush1.bf16.msra.mxu0 %v4041
        %5207 = vmatprep.subr.bf16.mxu0 0
        %5208 = vmatpush1.bf16.msra.mxu0 %v4046
        %5209 = vmatprep.mubr.bf16.mxu0 %v2668
        %5210 = vmatmul.mubr.bf16.gmra.mrb[0].mxu0 %v2667
        %v5211 = vpop.f32.mrb[0].mxu0
        %v5212 = vadd.f32 %v2646, %v5211
        %v5213 = vpop.f32.mrb[0].mxu0
        %v5214 = vpop.f32.mrb[0].mxu0
        %v5215 = vpop.f32.mrb[0].mxu0
        %5216 = vdwg.mxu0
        %5217 = vmatprep.subr.bf16.mxu0 0
        %5218 = vmatpush1.bf16.msra.mxu0 %v4051
        %5219 = vmatprep.subr.bf16.mxu0 0
        %5220 = vmatpush1.bf16.msra.mxu0 %v4056
        %5221 = vmatprep.subr.bf16.mxu0 0
        %5222 = vmatpush1.bf16.msra.mxu0 %v4061
        %5223 = vmatprep.subr.bf16.mxu0 0
        %5224 = vmatpush1.bf16.msra.mxu0 %v4066
        %5225 = vmatprep.subr.bf16.mxu0 0
        %5226 = vmatpush1.bf16.msra.mxu0 %v4071
        %5227 = vmatprep.subr.bf16.mxu0 0
        %5228 = vmatpush1.bf16.msra.mxu0 %v4076
        %5229 = vmatprep.subr.bf16.mxu0 0
        %5230 = vmatpush1.bf16.msra.mxu0 %v4081
        %5231 = vmatprep.subr.bf16.mxu0 0
        %5232 = vmatpush1.bf16.msra.mxu0 %v4086
        %5233 = vmatprep.subr.bf16.mxu0 0
        %5234 = vmatpush1.bf16.msra.mxu0 %v4091
        %5235 = vmatprep.subr.bf16.mxu0 0
        %5236 = vmatpush1.bf16.msra.mxu0 %v4096
        %5237 = vmatprep.subr.bf16.mxu0 0
        %5238 = vmatpush1.bf16.msra.mxu0 %v4101
        %5239 = vmatprep.subr.bf16.mxu0 0
        %5240 = vmatpush1.bf16.msra.mxu0 %v4106
        %5241 = vmatprep.subr.bf16.mxu0 0
        %5242 = vmatpush1.bf16.msra.mxu0 %v4111
        %5243 = vmatprep.subr.bf16.mxu0 0
        %5244 = vmatpush1.bf16.msra.mxu0 %v4116
        %5245 = vmatprep.subr.bf16.mxu0 0
        %5246 = vmatpush1.bf16.msra.mxu0 %v4121
        %5247 = vmatprep.subr.bf16.mxu0 0
        %5248 = vmatpush1.bf16.msra.mxu0 %v4126
        %5249 = vmatprep.mubr.bf16.mxu0 %v2670
        %5250 = vmatmul.mubr.bf16.gmra.mrb[0].mxu0 %v2669
        %v5251 = vpop.f32.mrb[0].mxu0
        %v5252 = vadd.f32 %v5212, %v5251
        %v5253 = vpop.f32.mrb[0].mxu0
        %v5254 = vpop.f32.mrb[0].mxu0
        %v5255 = vpop.f32.mrb[0].mxu0
        %5256 = vdwg.mxu0
        %5257 = vmatprep.subr.bf16.mxu0 0
        %5258 = vmatpush1.bf16.msra.mxu0 %v4131
        %5259 = vmatprep.subr.bf16.mxu0 0
        %5260 = vmatpush1.bf16.msra.mxu0 %v4136
        %5261 = vmatprep.subr.bf16.mxu0 0
        %5262 = vmatpush1.bf16.msra.mxu0 %v4141
        %5263 = vmatprep.subr.bf16.mxu0 0
        %5264 = vmatpush1.bf16.msra.mxu0 %v4146
        %5265 = vmatprep.subr.bf16.mxu0 0
        %5266 = vmatpush1.bf16.msra.mxu0 %v4151
        %5267 = vmatprep.subr.bf16.mxu0 0
        %5268 = vmatpush1.bf16.msra.mxu0 %v4156
        %5269 = vmatprep.subr.bf16.mxu0 0
        %5270 = vmatpush1.bf16.msra.mxu0 %v4161
        %5271 = vmatprep.subr.bf16.mxu0 0
        %5272 = vmatpush1.bf16.msra.mxu0 %v4166
        %5273 = vmatprep.subr.bf16.mxu0 0
        %5274 = vmatpush1.bf16.msra.mxu0 %v4171
        %5275 = vmatprep.subr.bf16.mxu0 0
        %5276 = vmatpush1.bf16.msra.mxu0 %v4176
        %5277 = vmatprep.subr.bf16.mxu0 0
        %5278 = vmatpush1.bf16.msra.mxu0 %v4181
        %5279 = vmatprep.subr.bf16.mxu0 0
        %5280 = vmatpush1.bf16.msra.mxu0 %v4186
        %5281 = vmatprep.subr.bf16.mxu0 0
        %5282 = vmatpush1.bf16.msra.mxu0 %v4191
        %5283 = vmatprep.subr.bf16.mxu0 0
        %5284 = vmatpush1.bf16.msra.mxu0 %v4196
        %5285 = vmatprep.subr.bf16.mxu0 0
        %5286 = vmatpush1.bf16.msra.mxu0 %v4201
        %5287 = vmatprep.subr.bf16.mxu0 0
        %5288 = vmatpush1.bf16.msra.mxu0 %v4206
        %5289 = vmatprep.mubr.bf16.mxu0 %v2672
        %5290 = vmatmul.mubr.bf16.gmra.mrb[0].mxu0 %v2671
        %v5291 = vpop.f32.mrb[0].mxu0
        %v5292 = vadd.f32 %v5252, %v5291
        %v5293 = vpop.f32.mrb[0].mxu0
        %v5294 = vpop.f32.mrb[0].mxu0
        %v5295 = vpop.f32.mrb[0].mxu0
        %5296 = vdwg.mxu0
        %5297 = vmatprep.subr.bf16.mxu0 0
        %5298 = vmatpush1.bf16.msra.mxu0 %v4211
        %5299 = vmatprep.subr.bf16.mxu0 0
        %5300 = vmatpush1.bf16.msra.mxu0 %v4216
        %5301 = vmatprep.subr.bf16.mxu0 0
        %5302 = vmatpush1.bf16.msra.mxu0 %v4221
        %5303 = vmatprep.subr.bf16.mxu0 0
        %5304 = vmatpush1.bf16.msra.mxu0 %v4226
        %5305 = vmatprep.subr.bf16.mxu0 0
        %5306 = vmatpush1.bf16.msra.mxu0 %v4231
        %5307 = vmatprep.subr.bf16.mxu0 0
        %5308 = vmatpush1.bf16.msra.mxu0 %v4236
        %5309 = vmatprep.subr.bf16.mxu0 0
        %5310 = vmatpush1.bf16.msra.mxu0 %v4241
        %5311 = vmatprep.subr.bf16.mxu0 0
        %5312 = vmatpush1.bf16.msra.mxu0 %v4246
        %5313 = vmatprep.subr.bf16.mxu0 0
        %5314 = vmatpush1.bf16.msra.mxu0 %v4251
        %5315 = vmatprep.subr.bf16.mxu0 0
        %5316 = vmatpush1.bf16.msra.mxu0 %v4256
        %5317 = vmatprep.subr.bf16.mxu0 0
        %5318 = vmatpush1.bf16.msra.mxu0 %v4261
        %5319 = vmatprep.subr.bf16.mxu0 0
        %5320 = vmatpush1.bf16.msra.mxu0 %v4266
        %5321 = vmatprep.subr.bf16.mxu0 0
        %5322 = vmatpush1.bf16.msra.mxu0 %v4271
        %5323 = vmatprep.subr.bf16.mxu0 0
        %5324 = vmatpush1.bf16.msra.mxu0 %v4276
        %5325 = vmatprep.subr.bf16.mxu0 0
        %5326 = vmatpush1.bf16.msra.mxu0 %v4281
        %5327 = vmatprep.subr.bf16.mxu0 0
        %5328 = vmatpush1.bf16.msra.mxu0 %v4286
        %5329 = vmatprep.mubr.bf16.mxu0 %v2674
        %5330 = vmatmul.mubr.bf16.gmra.mrb[0].mxu0 %v2673
        %v5331 = vpop.f32.mrb[0].mxu0
        %v5332 = vadd.f32 %v5292, %v5331
        %v5333 = vpop.f32.mrb[0].mxu0
        %v5334 = vpop.f32.mrb[0].mxu0
        %v5335 = vpop.f32.mrb[0].mxu0
        %5336 = vdwg.mxu0
        %5337 = vmatprep.subr.bf16.mxu0 0
        %5338 = vmatpush1.bf16.msra.mxu0 %v4291
        %5339 = vmatprep.subr.bf16.mxu0 0
        %5340 = vmatpush1.bf16.msra.mxu0 %v4296
        %5341 = vmatprep.subr.bf16.mxu0 0
        %5342 = vmatpush1.bf16.msra.mxu0 %v4301
        %5343 = vmatprep.subr.bf16.mxu0 0
        %5344 = vmatpush1.bf16.msra.mxu0 %v4306
        %5345 = vmatprep.subr.bf16.mxu0 0
        %5346 = vmatpush1.bf16.msra.mxu0 %v4311
        %5347 = vmatprep.subr.bf16.mxu0 0
        %5348 = vmatpush1.bf16.msra.mxu0 %v4316
        %5349 = vmatprep.subr.bf16.mxu0 0
        %5350 = vmatpush1.bf16.msra.mxu0 %v4321
        %5351 = vmatprep.subr.bf16.mxu0 0
        %5352 = vmatpush1.bf16.msra.mxu0 %v4326
        %5353 = vmatprep.subr.bf16.mxu0 0
        %5354 = vmatpush1.bf16.msra.mxu0 %v4331
        %5355 = vmatprep.subr.bf16.mxu0 0
        %5356 = vmatpush1.bf16.msra.mxu0 %v4336
        %5357 = vmatprep.subr.bf16.mxu0 0
        %5358 = vmatpush1.bf16.msra.mxu0 %v4341
        %5359 = vmatprep.subr.bf16.mxu0 0
        %5360 = vmatpush1.bf16.msra.mxu0 %v4346
        %5361 = vmatprep.subr.bf16.mxu0 0
        %5362 = vmatpush1.bf16.msra.mxu0 %v4351
        %5363 = vmatprep.subr.bf16.mxu0 0
        %5364 = vmatpush1.bf16.msra.mxu0 %v4356
        %5365 = vmatprep.subr.bf16.mxu0 0
        %5366 = vmatpush1.bf16.msra.mxu0 %v4361
        %5367 = vmatprep.subr.bf16.mxu0 0
        %5368 = vmatpush1.bf16.msra.mxu0 %v4366
        %5369 = vmatprep.mubr.bf16.mxu0 %v2676
        %5370 = vmatmul.mubr.bf16.gmra.mrb[0].mxu0 %v2675
        %v5371 = vpop.f32.mrb[0].mxu0
        %v5372 = vadd.f32 %v5332, %v5371
        %v5373 = vpop.f32.mrb[0].mxu0
        %v5374 = vpop.f32.mrb[0].mxu0
        %v5375 = vpop.f32.mrb[0].mxu0
        %5376 = vdwg.mxu0
        %5377 = vst [vmem:[%s342] sm:$0xff] %v4966
        %5378 = vst [vmem:[%s342 + $0x8] sm:$0xff] %v4968
        %5379 = vst [vmem:[%s342 + $0x10] sm:$0xff] %v5171
        %5380 = vst [vmem:[%s342 + $0x18] sm:$0xff] %v5173
        %5381 = vst [vmem:[%s342 + $0x20] sm:$0xff] %v5372
        %s5382 = smul.u32 %s22, 2
        %s5383 = sadd.s32 %s5382, %s23
        %s5384 = smul.u32 5, %s5383
        %p5385 = scmp.lt.s32.totalorder %s5384, 9
        %s5386 = scalar_select %p5385, %s5384, 9
        %s5387 = smul.addr %s5386, 8
        %s5388 = scalar_lea.vmem %s5, %s5387
        // Predicated region
        $region61: #{time_embedding.1} parent=39 // pred_check
          %p5389 = pneg %p175
        $region62: #{time_embedding.1} parent=39 // pred_check_branch
          %5391 = sbr.rel (%p5389) target = $region64
        $region63: #{time_embedding.1} parent=39 // pred_region
          %s5392 = smul.u32 %s22, 2
          %s5393 = sadd.s32 %s5392, %s23
          %s5394 = smul.u32 5, %s5393
        $region64: #{time_embedding.1} parent=39 // pred_fallthru
          _
      $region40: #{time_embedding.1} parent=5 // pred_fallthru
        _
      %p5395 = scmp.le.s32.totalorder 2, %s13
      // Predicated region
      $region65: #{time_embedding.1} parent=5 // pred_check
        %p5396 = pneg %p5395
      $region66: #{time_embedding.1} parent=5 // pred_check_branch
        %5398 = sbr.rel (%p5396) target = $region68
      $region67: #{time_embedding.1} parent=5 // pred_region
        %s5399 = ssub.s32 %s13, 2
        // Predicated region
        $region69: #{time_embedding.1} parent=67 // pred_check
          %p5400 = pneg %p181
        $region70: #{time_embedding.1} parent=67 // pred_check_branch
          %5402 = sbr.rel (%p5400) target = $region72
        $region71: #{time_embedding.1} parent=67 // pred_region
          %s5403 = smul.u32 %s24, 2
          %s5404 = sadd.s32 %s5403, %s25
          %s5405 = smul.u32 5, %s5404
          %p5406 = scmp.lt.s32.totalorder %s5405, 9
          %s5407 = scalar_select %p5406, %s5405, 9
          %s5408 = smul.addr %s5407, 8
          %s5409 = scalar_lea.vmem %s5, %s5408
        $region72: #{time_embedding.1} parent=67 // pred_fallthru
          _
      $region68: #{time_embedding.1} parent=5 // pred_fallthru
        _
    $region6: #{time_embedding.1} parent=1 // loop_footer
      %s17 = sadd.s32 1, %s13
    $region7: #{time_embedding.1} parent=1 // loop_footer_branch
      %12 = sbr.rel target = $region3
    $region8: #{time_embedding.1} parent=1 // loop_exit
      _
    %5410 = vsyncpa [#allocation4], 1
    %s5411 = scalar_lea.sflag [#allocation4], 1
    %5412 = vsyncpa %s5411, 1
    %5413 = vsyncpa [#allocation6], 1

</llo_original>
